<compile_context>
chip_gen: v7x
topology: tpu7x:2x2x1
jax: 0.10.0
libtpu: 0.0.40
codegen_flags: <defaults>
</compile_context>

<pallas_src>
import math
import functools

import jax
import jax.numpy as jnp
from jax import lax
from jax.experimental import pallas as pl
from jax.experimental.pallas import tpu as pltpu


def _mha_kernel(q_ref, k_ref, v_ref,
                wq_ref, wk_ref, wv_ref, wo_ref,
                bq_ref, bk_ref, bv_ref, bo_ref,
                o_ref,
                k_cache, v_cache, ctx_ref,
                *, num_heads: int, d_k: int, inv_sqrt_dk: float):
    """One (batch, q_tile) step.

    q_ref:   (1, TQ, D)  current q tile (bf16)
    k_ref:   (1, S,  D)  full keys slab for this batch element (bf16)
    v_ref:   (1, S,  D)  full values slab for this batch element (bf16)
    w*_ref:  (D, D)      full projection weights (bf16), resident for all steps
    b*_ref:  (1, D)      biases (fp32), resident
    o_ref:   (1, TQ, D)  output tile (fp32)
    k_cache: (S, D)      persistent VMEM cache of projected keys   (bf16)
    v_cache: (S, D)      persistent VMEM cache of projected values (bf16)
    ctx_ref: (TQ, D)     per-step scratch holding the concatenated head contexts (bf16)
    """
    qi = pl.program_id(1)
    cdt = k_cache.dtype  # compute dtype for MXU operands (bf16)

    # ---- K/V projections: only once per batch element (qi == 0), full MXU width.
    @pl.when(qi == 0)
    def _():
        kp = jnp.dot(k_ref[0], wk_ref[...], preferred_element_type=jnp.float32) + bk_ref[...]
        k_cache[...] = kp.astype(cdt)
        vp = jnp.dot(v_ref[0], wv_ref[...], preferred_element_type=jnp.float32) + bv_ref[...]
        v_cache[...] = vp.astype(cdt)

    # ---- Q projection for this tile: (TQ, D) x (D, D), full MXU width.
    qp = jnp.dot(q_ref[0], wq_ref[...], preferred_element_type=jnp.float32) + bq_ref[...]
    # Fold the 1/sqrt(d_k) score scale into the (TQ, D) fp32 q projection
    # (S/d_k times less VALU work than scaling every (TQ, S) score matrix).
    qp = (qp * inv_sqrt_dk).astype(cdt)

    kh_all = k_cache[...]   # (S, D) bf16
    vh_all = v_cache[...]   # (S, D) bf16

    # ---- Per-head attention (static unroll; static lane slices of width d_k).
    for h in range(num_heads):
        lo = h * d_k
        q_h = qp[:, lo:lo + d_k]          # (TQ, d_k)
        k_h = kh_all[:, lo:lo + d_k]      # (S,  d_k)
        v_h = vh_all[:, lo:lo + d_k]      # (S,  d_k)

        # Scores: contract last dims of both operands (QK^T without a transpose op).
        s = lax.dot_general(q_h, k_h,
                            dimension_numbers=(((1,), (1,)), ((), ())),
                            preferred_element_type=jnp.float32)       # (TQ, S) fp32

        # Numerically stable softmax in fp32; denominator via approx EUP reciprocal.
        m = jnp.max(s, axis=-1, keepdims=True)
        e = jnp.exp(s - m)
        denom = jnp.sum(e, axis=-1, keepdims=True)
        p = e * pl.reciprocal(denom, approx=True)

        ctx_h = jnp.dot(p.astype(cdt), v_h,
                        preferred_element_type=jnp.float32)           # (TQ, d_k)
        ctx_ref[:, lo:lo + d_k] = ctx_h.astype(cdt)

    # ---- Output projection: single full-width (TQ, D) x (D, D) matmul.
    out = jnp.dot(ctx_ref[...], wo_ref[...],
                  preferred_element_type=jnp.float32) + bo_ref[...]   # (TQ, D) fp32
    o_ref[0] = out.astype(o_ref.dtype)


def multi_head_attention(q, k, v, params, *, num_heads: int, tq: int | None = None,
                         compute_dtype=jnp.bfloat16):
    """q, k, v: [B, S, D] float32. Returns [B, S, D] float32."""
    B, S, D = q.shape
    assert D % num_heads == 0
    d_k = D // num_heads

    if tq is None:
        tq = min(S, 256)
    # tq % 16 (not just 8): q/k/v are bf16, which packs (16, 128) per vreg.
    assert S % tq == 0 and (tq == S or tq % 16 == 0)
    n_q = S // tq

    cdt = compute_dtype

    wq = params["wq"].astype(cdt)
    wk = params["wk"].astype(cdt)
    wv = params["wv"].astype(cdt)
    wo = params["wo"].astype(cdt)
    bq = params["bq"].reshape(1, D).astype(jnp.float32)
    bk = params["bk"].reshape(1, D).astype(jnp.float32)
    bv = params["bv"].reshape(1, D).astype(jnp.float32)
    bo = params["bo"].reshape(1, D).astype(jnp.float32)

    qc, kc, vc = q.astype(cdt), k.astype(cdt), v.astype(cdt)

    kernel = functools.partial(_mha_kernel, num_heads=num_heads, d_k=d_k,
                               inv_sqrt_dk=1.0 / math.sqrt(d_k))

    q_spec = pl.BlockSpec((1, tq, D), lambda b, qi: (b, qi, 0))
    # K/V slabs: block index only changes with b (re-DMA'd once per batch element).
    kv_spec = pl.BlockSpec((1, S, D), lambda b, qi: (b, 0, 0))
    # Weights / biases: constant block index -> DMA'd once, resident for all steps.
    w_spec = pl.BlockSpec((D, D), lambda b, qi: (0, 0))
    b_spec = pl.BlockSpec((1, D), lambda b, qi: (0, 0))
    out_spec = pl.BlockSpec((1, tq, D), lambda b, qi: (b, qi, 0))

    # Advisory cost estimate: 4 full projections (K/V counted once) + per-head attention.
    flops = int(8 * B * S * D * D + 4 * B * S * S * D)
    transcendentals = int(B * num_heads * S * S)
    bytes_accessed = int(3 * B * S * D * 2 + B * S * D * 4 + 4 * D * D * 2 + 4 * D * 4)

    return pl.pallas_call(
        kernel,
        out_shape=jax.ShapeDtypeStruct((B, S, D), jnp.float32),
        grid_spec=pltpu.PrefetchScalarGridSpec(
            num_scalar_prefetch=0,
            grid=(B, n_q),
            in_specs=[
                q_spec, kv_spec, kv_spec,          # q, k, v
                w_spec, w_spec, w_spec, w_spec,    # Wq Wk Wv Wo (resident)
                b_spec, b_spec, b_spec, b_spec,    # bq bk bv bo (resident)
            ],
            out_specs=out_spec,
            scratch_shapes=[
                pltpu.VMEM((S, D), cdt),           # projected-K cache (persists across q tiles)
                pltpu.VMEM((S, D), cdt),           # projected-V cache
                pltpu.VMEM((tq, D), cdt),          # concatenated per-head contexts
            ],
        ),
        compiler_params=pltpu.CompilerParams(
            # batch: parallel (megacore / 2 TCs on v7x); q-tile: arbitrary so the
            # K/V-cache write at qi==0 is sequenced before the tiles that read it.
            dimension_semantics=("parallel", "arbitrary"),
            vmem_limit_bytes=64 * 1024 * 1024,
        ),
        cost_estimate=pl.CostEstimate(flops=flops,
                                      transcendentals=transcendentals,
                                      bytes_accessed=bytes_accessed),
    )(qc, kc, vc, wq, wk, wv, wo, bq, bk, bv, bo)


def _init_params(key, d_model):
    """Deterministic init mimicking nn.Linear default (uniform +/- 1/sqrt(fan_in)).
    Weights stored as [D_in, D_out] (transposed vs torch's [out, in])."""
    bound = 1.0 / math.sqrt(d_model)
    keys = jax.random.split(key, 8)

    def u(k, shape):
        return jax.random.uniform(k, shape, jnp.float32, -bound, bound)

    return {
        "wq": u(keys[0], (d_model, d_model)), "bq": u(keys[1], (d_model,)),
        "wk": u(keys[2], (d_model, d_model)), "bk": u(keys[3], (d_model,)),
        "wv": u(keys[4], (d_model, d_model)), "bv": u(keys[5], (d_model,)),
        "wo": u(keys[6], (d_model, d_model)), "bo": u(keys[7], (d_model,)),
    }


def _reference(q, k, v, params, *, num_heads):
    """Pure-JAX fp32 reference reproducing the PyTorch forward exactly."""
    B, S, D = q.shape
    d_k = D // num_heads
    qp = q @ params["wq"] + params["bq"]
    kp = k @ params["wk"] + params["bk"]
    vp = v @ params["wv"] + params["bv"]
    qh = qp.reshape(B, S, num_heads, d_k).transpose(0, 2, 1, 3)
    kh = kp.reshape(B, S, num_heads, d_k).transpose(0, 2, 1, 3)
    vh = vp.reshape(B, S, num_heads, d_k).transpose(0, 2, 1, 3)
    score = jnp.einsum("bhqd,bhkd->bhqk", qh, kh) / math.sqrt(d_k)
    score = jax.nn.softmax(score, axis=-1)
    ctx = jnp.einsum("bhqk,bhkd->bhqd", score, vh)
    ctx = ctx.transpose(0, 2, 1, 3).reshape(B, S, D)
    return ctx @ params["wo"] + params["bo"]


if __name__ == "__main__":
    # Small, lane-friendly shapes: D multiple of 128 -> unmasked output stores.
    # tq=64 < S so the grid has 2 q-tiles per batch element, exercising both the
    # K/V-cache write path (qi==0) and the cached-reuse path (qi==1).
    B, S, D, H = 2, 128, 128, 8   # d_k = 16

    root = jax.random.PRNGKey(0)
    kq, kk, kv, kp = jax.random.split(root, 4)
    q = jax.random.normal(kq, (B, S, D), jnp.float32)
    k = jax.random.normal(kk, (B, S, D), jnp.float32)
    v = jax.random.normal(kv, (B, S, D), jnp.float32)
    params = _init_params(kp, D)

    out = multi_head_attention(q, k, v, params, num_heads=H, tq=64)
    out = jax.block_until_ready(out)

    ref = _reference(q, k, v, params, num_heads=H)
    assert out.shape == (B, S, D)
    # bf16 MXU operands (fp32 accumulation) + approx reciprocal => loose tolerance.
    assert jnp.allclose(out, ref, atol=2e-2, rtol=2e-2), "mismatch vs reference"

    print("KERNEL_OK")
</pallas_src>

<mosaic_0001>
module attributes {stable_mosaic.version = 11 : i64} {
  func.func @_mha_kernel(%arg0: i32, %arg1: i32, %arg2: memref<1x64x128xbf16, #tpu.memory_space<vmem>>, %arg3: memref<1x128x128xbf16, #tpu.memory_space<vmem>>, %arg4: memref<1x128x128xbf16, #tpu.memory_space<vmem>>, %arg5: memref<128x128xbf16, #tpu.memory_space<vmem>>, %arg6: memref<128x128xbf16, #tpu.memory_space<vmem>>, %arg7: memref<128x128xbf16, #tpu.memory_space<vmem>>, %arg8: memref<128x128xbf16, #tpu.memory_space<vmem>>, %arg9: memref<1x128xf32, #tpu.memory_space<vmem>>, %arg10: memref<1x128xf32, #tpu.memory_space<vmem>>, %arg11: memref<1x128xf32, #tpu.memory_space<vmem>>, %arg12: memref<1x128xf32, #tpu.memory_space<vmem>>, %arg13: memref<1x64x128xf32, #tpu.memory_space<vmem>>, %arg14: memref<128x128xbf16, #tpu.memory_space<vmem>>, %arg15: memref<128x128xbf16, #tpu.memory_space<vmem>>, %arg16: memref<64x128xbf16, #tpu.memory_space<vmem>>) attributes {dimension_semantics = [#tpu.dimension_semantics<parallel>, #tpu.dimension_semantics<arbitrary>], iteration_bounds = array<i64: 2, 2>, scalar_prefetch = 0 : i64, scratch_operands = 3 : i64, tpu.core_type = #tpu.core_type<tc>, window_params = [{transform_indices = @transform_0, window_bounds = array<i64: 1, 64, 128>}, {transform_indices = @transform_1, window_bounds = array<i64: 1, 128, 128>}, {transform_indices = @transform_2, window_bounds = array<i64: 1, 128, 128>}, {pipeline_mode = #tpu.pipeline_mode<synchronous>, transform_indices = @transform_3, window_bounds = array<i64: 128, 128>}, {pipeline_mode = #tpu.pipeline_mode<synchronous>, transform_indices = @transform_4, window_bounds = array<i64: 128, 128>}, {pipeline_mode = #tpu.pipeline_mode<synchronous>, transform_indices = @transform_5, window_bounds = array<i64: 128, 128>}, {pipeline_mode = #tpu.pipeline_mode<synchronous>, transform_indices = @transform_6, window_bounds = array<i64: 128, 128>}, {pipeline_mode = #tpu.pipeline_mode<synchronous>, transform_indices = @transform_7, window_bounds = array<i64: 1, 128>}, {pipeline_mode = #tpu.pipeline_mode<synchronous>, transform_indices = @transform_8, window_bounds = array<i64: 1, 128>}, {pipeline_mode = #tpu.pipeline_mode<synchronous>, transform_indices = @transform_9, window_bounds = array<i64: 1, 128>}, {pipeline_mode = #tpu.pipeline_mode<synchronous>, transform_indices = @transform_10, window_bounds = array<i64: 1, 128>}, {transform_indices = @transform_11, window_bounds = array<i64: 1, 64, 128>}]} {
    %c0_i32 = arith.constant 0 : i32
    %0 = arith.cmpi eq, %arg1, %c0_i32 : i32
    %1 = arith.extui %0 : i1 to i32
    %c0_i32_0 = arith.constant 0 : i32
    %2 = arith.cmpi ne, %1, %c0_i32_0 : i32
    scf.if %2 {
      %c0_63 = arith.constant 0 : index
      %c0_64 = arith.constant 0 : index
      %c0_65 = arith.constant 0 : index
      %168 = vector.load %arg3[%c0_63, %c0_64, %c0_65] : memref<1x128x128xbf16, #tpu.memory_space<vmem>>, vector<1x128x128xbf16>
      %169 = vector.shape_cast %168 : vector<1x128x128xbf16> to vector<128x128xbf16>
      %c0_66 = arith.constant 0 : index
      %c0_67 = arith.constant 0 : index
      %170 = vector.load %arg6[%c0_66, %c0_67] : memref<128x128xbf16, #tpu.memory_space<vmem>>, vector<128x128xbf16>
      %cst_68 = arith.constant dense<0.000000e+00> : vector<128x128xf32>
      %171 = tpu.matmul %169, %170, %cst_68 {dimension_numbers = #tpu.dot_dimension_numbers<[1], [0], [0], [1], [0, 0, 1, 1], [], []>} : vector<128x128xbf16>, vector<128x128xbf16>, vector<128x128xf32> -> vector<128x128xf32>
      %c0_69 = arith.constant 0 : index
      %c0_70 = arith.constant 0 : index
      %172 = vector.load %arg10[%c0_69, %c0_70] : memref<1x128xf32, #tpu.memory_space<vmem>>, vector<1x128xf32>
      %173 = vector.broadcast %172 : vector<1x128xf32> to vector<128x128xf32>
      %174 = arith.addf %171, %173 : vector<128x128xf32>
      %175 = arith.truncf %174 : vector<128x128xf32> to vector<128x128xbf16>
      %c0_71 = arith.constant 0 : index
      %c0_72 = arith.constant 0 : index
      %176 = vector.load %arg14[%c0_71, %c0_72] : memref<128x128xbf16, #tpu.memory_space<vmem>>, vector<128x128xbf16>
      tpu.vector_store %arg14[%c0_71, %c0_72], %175 {strides = array<i32>} : memref<128x128xbf16, #tpu.memory_space<vmem>>, vector<128x128xbf16>,
      %c0_73 = arith.constant 0 : index
      %c0_74 = arith.constant 0 : index
      %c0_75 = arith.constant 0 : index
      %177 = vector.load %arg4[%c0_73, %c0_74, %c0_75] : memref<1x128x128xbf16, #tpu.memory_space<vmem>>, vector<1x128x128xbf16>
      %178 = vector.shape_cast %177 : vector<1x128x128xbf16> to vector<128x128xbf16>
      %c0_76 = arith.constant 0 : index
      %c0_77 = arith.constant 0 : index
      %179 = vector.load %arg7[%c0_76, %c0_77] : memref<128x128xbf16, #tpu.memory_space<vmem>>, vector<128x128xbf16>
      %cst_78 = arith.constant dense<0.000000e+00> : vector<128x128xf32>
      %180 = tpu.matmul %178, %179, %cst_78 {dimension_numbers = #tpu.dot_dimension_numbers<[1], [0], [0], [1], [0, 0, 1, 1], [], []>} : vector<128x128xbf16>, vector<128x128xbf16>, vector<128x128xf32> -> vector<128x128xf32>
      %c0_79 = arith.constant 0 : index
      %c0_80 = arith.constant 0 : index
      %181 = vector.load %arg11[%c0_79, %c0_80] : memref<1x128xf32, #tpu.memory_space<vmem>>, vector<1x128xf32>
      %182 = vector.broadcast %181 : vector<1x128xf32> to vector<128x128xf32>
      %183 = arith.addf %180, %182 : vector<128x128xf32>
      %184 = arith.truncf %183 : vector<128x128xf32> to vector<128x128xbf16>
      %c0_81 = arith.constant 0 : index
      %c0_82 = arith.constant 0 : index
      %185 = vector.load %arg15[%c0_81, %c0_82] : memref<128x128xbf16, #tpu.memory_space<vmem>>, vector<128x128xbf16>
      tpu.vector_store %arg15[%c0_81, %c0_82], %184 {strides = array<i32>} : memref<128x128xbf16, #tpu.memory_space<vmem>>, vector<128x128xbf16>,
    } else {
    }
    %c0 = arith.constant 0 : index
    %c0_1 = arith.constant 0 : index
    %c0_2 = arith.constant 0 : index
    %3 = vector.load %arg2[%c0, %c0_1, %c0_2] : memref<1x64x128xbf16, #tpu.memory_space<vmem>>, vector<1x64x128xbf16>
    %4 = vector.shape_cast %3 : vector<1x64x128xbf16> to vector<64x128xbf16>
    %c0_3 = arith.constant 0 : index
    %c0_4 = arith.constant 0 : index
    %5 = vector.load %arg5[%c0_3, %c0_4] : memref<128x128xbf16, #tpu.memory_space<vmem>>, vector<128x128xbf16>
    %cst = arith.constant dense<0.000000e+00> : vector<64x128xf32>
    %6 = tpu.matmul %4, %5, %cst {dimension_numbers = #tpu.dot_dimension_numbers<[1], [0], [0], [1], [0, 0, 1, 1], [], []>} : vector<64x128xbf16>, vector<128x128xbf16>, vector<64x128xf32> -> vector<64x128xf32>
    %c0_5 = arith.constant 0 : index
    %c0_6 = arith.constant 0 : index
    %7 = vector.load %arg9[%c0_5, %c0_6] : memref<1x128xf32, #tpu.memory_space<vmem>>, vector<1x128xf32>
    %8 = vector.broadcast %7 : vector<1x128xf32> to vector<64x128xf32>
    %9 = arith.addf %6, %8 : vector<64x128xf32>
    %cst_7 = arith.constant 2.500000e-01 : f32
    %10 = vector.broadcast %cst_7 : f32 to vector<64x128xf32>
    %11 = arith.mulf %9, %10 : vector<64x128xf32>
    %12 = arith.truncf %11 : vector<64x128xf32> to vector<64x128xbf16>
    %c0_8 = arith.constant 0 : index
    %c0_9 = arith.constant 0 : index
    %13 = vector.load %arg14[%c0_8, %c0_9] : memref<128x128xbf16, #tpu.memory_space<vmem>>, vector<128x128xbf16>
    %c0_10 = arith.constant 0 : index
    %c0_11 = arith.constant 0 : index
    %14 = vector.load %arg15[%c0_10, %c0_11] : memref<128x128xbf16, #tpu.memory_space<vmem>>, vector<128x128xbf16>
    %15 = vector.extract_strided_slice %12 {offsets = [0, 0], sizes = [64, 16], strides = [1, 1]} : vector<64x128xbf16> to vector<64x16xbf16>
    %16 = vector.extract_strided_slice %13 {offsets = [0, 0], sizes = [128, 16], strides = [1, 1]} : vector<128x128xbf16> to vector<128x16xbf16>
    %17 = vector.extract_strided_slice %14 {offsets = [0, 0], sizes = [128, 16], strides = [1, 1]} : vector<128x128xbf16> to vector<128x16xbf16>
    %cst_12 = arith.constant dense<0.000000e+00> : vector<64x128xf32>
    %18 = tpu.matmul %15, %16, %cst_12 {dimension_numbers = #tpu.dot_dimension_numbers<[1], [1], [0], [0], [0, 0, 1, 0], [], []>} : vector<64x16xbf16>, vector<128x16xbf16>, vector<64x128xf32> -> vector<64x128xf32>
    %cst_13 = arith.constant dense<0xFF800000> : vector<64xf32>
    %19 = vector.multi_reduction <maximumf>, %18, %cst_13 [1] : vector<64x128xf32> to vector<64xf32>
    %20 = vector.shape_cast %19 : vector<64xf32> to vector<64x1xf32>
    %21 = vector.broadcast %20 : vector<64x1xf32> to vector<64x128xf32>
    %22 = arith.subf %18, %21 : vector<64x128xf32>
    %23 = math.exp %22 : vector<64x128xf32>
    %cst_14 = arith.constant dense<0.000000e+00> : vector<64xf32>
    %24 = vector.multi_reduction <add>, %23, %cst_14 [1] : vector<64x128xf32> to vector<64xf32>
    %25 = vector.shape_cast %24 : vector<64xf32> to vector<64x1xf32>
    %26 = tpu.reciprocal %25 {approx = true} : vector<64x1xf32> -> vector<64x1xf32>
    %27 = vector.broadcast %26 : vector<64x1xf32> to vector<64x128xf32>
    %28 = arith.mulf %23, %27 : vector<64x128xf32>
    %29 = arith.truncf %28 : vector<64x128xf32> to vector<64x128xbf16>
    %cst_15 = arith.constant dense<0.000000e+00> : vector<64x16xf32>
    %30 = tpu.matmul %29, %17, %cst_15 {dimension_numbers = #tpu.dot_dimension_numbers<[1], [0], [0], [1], [0, 0, 1, 1], [], []>} : vector<64x128xbf16>, vector<128x16xbf16>, vector<64x16xf32> -> vector<64x16xf32>
    %31 = arith.truncf %30 : vector<64x16xf32> to vector<64x16xbf16>
    %c0_16 = arith.constant 0 : index
    %c0_17 = arith.constant 0 : index
    %32 = vector.load %arg16[%c0_16, %c0_17] : memref<64x128xbf16, #tpu.memory_space<vmem>>, vector<64x16xbf16>
    tpu.vector_store %arg16[%c0_16, %c0_17], %31 {strides = array<i32>} : memref<64x128xbf16, #tpu.memory_space<vmem>>, vector<64x16xbf16>,
    %33 = vector.extract_strided_slice %12 {offsets = [0, 16], sizes = [64, 16], strides = [1, 1]} : vector<64x128xbf16> to vector<64x16xbf16>
    %34 = vector.extract_strided_slice %13 {offsets = [0, 16], sizes = [128, 16], strides = [1, 1]} : vector<128x128xbf16> to vector<128x16xbf16>
    %35 = vector.extract_strided_slice %14 {offsets = [0, 16], sizes = [128, 16], strides = [1, 1]} : vector<128x128xbf16> to vector<128x16xbf16>
    %cst_18 = arith.constant dense<0.000000e+00> : vector<64x128xf32>
    %36 = tpu.matmul %33, %34, %cst_18 {dimension_numbers = #tpu.dot_dimension_numbers<[1], [1], [0], [0], [0, 0, 1, 0], [], []>} : vector<64x16xbf16>, vector<128x16xbf16>, vector<64x128xf32> -> vector<64x128xf32>
    %cst_19 = arith.constant dense<0xFF800000> : vector<64xf32>
    %37 = vector.multi_reduction <maximumf>, %36, %cst_19 [1] : vector<64x128xf32> to vector<64xf32>
    %38 = vector.shape_cast %37 : vector<64xf32> to vector<64x1xf32>
    %39 = vector.broadcast %38 : vector<64x1xf32> to vector<64x128xf32>
    %40 = arith.subf %36, %39 : vector<64x128xf32>
    %41 = math.exp %40 : vector<64x128xf32>
    %cst_20 = arith.constant dense<0.000000e+00> : vector<64xf32>
    %42 = vector.multi_reduction <add>, %41, %cst_20 [1] : vector<64x128xf32> to vector<64xf32>
    %43 = vector.shape_cast %42 : vector<64xf32> to vector<64x1xf32>
    %44 = tpu.reciprocal %43 {approx = true} : vector<64x1xf32> -> vector<64x1xf32>
    %45 = vector.broadcast %44 : vector<64x1xf32> to vector<64x128xf32>
    %46 = arith.mulf %41, %45 : vector<64x128xf32>
    %47 = arith.truncf %46 : vector<64x128xf32> to vector<64x128xbf16>
    %cst_21 = arith.constant dense<0.000000e+00> : vector<64x16xf32>
    %48 = tpu.matmul %47, %35, %cst_21 {dimension_numbers = #tpu.dot_dimension_numbers<[1], [0], [0], [1], [0, 0, 1, 1], [], []>} : vector<64x128xbf16>, vector<128x16xbf16>, vector<64x16xf32> -> vector<64x16xf32>
    %49 = arith.truncf %48 : vector<64x16xf32> to vector<64x16xbf16>
    %c0_22 = arith.constant 0 : index
    %c16 = arith.constant 16 : index
    %50 = vector.load %arg16[%c0_22, %c16] : memref<64x128xbf16, #tpu.memory_space<vmem>>, vector<64x16xbf16>
    tpu.vector_store %arg16[%c0_22, %c16], %49 {strides = array<i32>} : memref<64x128xbf16, #tpu.memory_space<vmem>>, vector<64x16xbf16>,
    %51 = vector.extract_strided_slice %12 {offsets = [0, 32], sizes = [64, 16], strides = [1, 1]} : vector<64x128xbf16> to vector<64x16xbf16>
    %52 = vector.extract_strided_slice %13 {offsets = [0, 32], sizes = [128, 16], strides = [1, 1]} : vector<128x128xbf16> to vector<128x16xbf16>
    %53 = vector.extract_strided_slice %14 {offsets = [0, 32], sizes = [128, 16], strides = [1, 1]} : vector<128x128xbf16> to vector<128x16xbf16>
    %cst_23 = arith.constant dense<0.000000e+00> : vector<64x128xf32>
    %54 = tpu.matmul %51, %52, %cst_23 {dimension_numbers = #tpu.dot_dimension_numbers<[1], [1], [0], [0], [0, 0, 1, 0], [], []>} : vector<64x16xbf16>, vector<128x16xbf16>, vector<64x128xf32> -> vector<64x128xf32>
    %cst_24 = arith.constant dense<0xFF800000> : vector<64xf32>
    %55 = vector.multi_reduction <maximumf>, %54, %cst_24 [1] : vector<64x128xf32> to vector<64xf32>
    %56 = vector.shape_cast %55 : vector<64xf32> to vector<64x1xf32>
    %57 = vector.broadcast %56 : vector<64x1xf32> to vector<64x128xf32>
    %58 = arith.subf %54, %57 : vector<64x128xf32>
    %59 = math.exp %58 : vector<64x128xf32>
    %cst_25 = arith.constant dense<0.000000e+00> : vector<64xf32>
    %60 = vector.multi_reduction <add>, %59, %cst_25 [1] : vector<64x128xf32> to vector<64xf32>
    %61 = vector.shape_cast %60 : vector<64xf32> to vector<64x1xf32>
    %62 = tpu.reciprocal %61 {approx = true} : vector<64x1xf32> -> vector<64x1xf32>
    %63 = vector.broadcast %62 : vector<64x1xf32> to vector<64x128xf32>
    %64 = arith.mulf %59, %63 : vector<64x128xf32>
    %65 = arith.truncf %64 : vector<64x128xf32> to vector<64x128xbf16>
    %cst_26 = arith.constant dense<0.000000e+00> : vector<64x16xf32>
    %66 = tpu.matmul %65, %53, %cst_26 {dimension_numbers = #tpu.dot_dimension_numbers<[1], [0], [0], [1], [0, 0, 1, 1], [], []>} : vector<64x128xbf16>, vector<128x16xbf16>, vector<64x16xf32> -> vector<64x16xf32>
    %67 = arith.truncf %66 : vector<64x16xf32> to vector<64x16xbf16>
    %c0_27 = arith.constant 0 : index
    %c32 = arith.constant 32 : index
    %68 = vector.load %arg16[%c0_27, %c32] : memref<64x128xbf16, #tpu.memory_space<vmem>>, vector<64x16xbf16>
    tpu.vector_store %arg16[%c0_27, %c32], %67 {strides = array<i32>} : memref<64x128xbf16, #tpu.memory_space<vmem>>, vector<64x16xbf16>,
    %69 = vector.extract_strided_slice %12 {offsets = [0, 48], sizes = [64, 16], strides = [1, 1]} : vector<64x128xbf16> to vector<64x16xbf16>
    %70 = vector.extract_strided_slice %13 {offsets = [0, 48], sizes = [128, 16], strides = [1, 1]} : vector<128x128xbf16> to vector<128x16xbf16>
    %71 = vector.extract_strided_slice %14 {offsets = [0, 48], sizes = [128, 16], strides = [1, 1]} : vector<128x128xbf16> to vector<128x16xbf16>
    %cst_28 = arith.constant dense<0.000000e+00> : vector<64x128xf32>
    %72 = tpu.matmul %69, %70, %cst_28 {dimension_numbers = #tpu.dot_dimension_numbers<[1], [1], [0], [0], [0, 0, 1, 0], [], []>} : vector<64x16xbf16>, vector<128x16xbf16>, vector<64x128xf32> -> vector<64x128xf32>
    %cst_29 = arith.constant dense<0xFF800000> : vector<64xf32>
    %73 = vector.multi_reduction <maximumf>, %72, %cst_29 [1] : vector<64x128xf32> to vector<64xf32>
    %74 = vector.shape_cast %73 : vector<64xf32> to vector<64x1xf32>
    %75 = vector.broadcast %74 : vector<64x1xf32> to vector<64x128xf32>
    %76 = arith.subf %72, %75 : vector<64x128xf32>
    %77 = math.exp %76 : vector<64x128xf32>
    %cst_30 = arith.constant dense<0.000000e+00> : vector<64xf32>
    %78 = vector.multi_reduction <add>, %77, %cst_30 [1] : vector<64x128xf32> to vector<64xf32>
    %79 = vector.shape_cast %78 : vector<64xf32> to vector<64x1xf32>
    %80 = tpu.reciprocal %79 {approx = true} : vector<64x1xf32> -> vector<64x1xf32>
    %81 = vector.broadcast %80 : vector<64x1xf32> to vector<64x128xf32>
    %82 = arith.mulf %77, %81 : vector<64x128xf32>
    %83 = arith.truncf %82 : vector<64x128xf32> to vector<64x128xbf16>
    %cst_31 = arith.constant dense<0.000000e+00> : vector<64x16xf32>
    %84 = tpu.matmul %83, %71, %cst_31 {dimension_numbers = #tpu.dot_dimension_numbers<[1], [0], [0], [1], [0, 0, 1, 1], [], []>} : vector<64x128xbf16>, vector<128x16xbf16>, vector<64x16xf32> -> vector<64x16xf32>
    %85 = arith.truncf %84 : vector<64x16xf32> to vector<64x16xbf16>
    %c0_32 = arith.constant 0 : index
    %c48 = arith.constant 48 : index
    %86 = vector.load %arg16[%c0_32, %c48] : memref<64x128xbf16, #tpu.memory_space<vmem>>, vector<64x16xbf16>
    tpu.vector_store %arg16[%c0_32, %c48], %85 {strides = array<i32>} : memref<64x128xbf16, #tpu.memory_space<vmem>>, vector<64x16xbf16>,
    %87 = vector.extract_strided_slice %12 {offsets = [0, 64], sizes = [64, 16], strides = [1, 1]} : vector<64x128xbf16> to vector<64x16xbf16>
    %88 = vector.extract_strided_slice %13 {offsets = [0, 64], sizes = [128, 16], strides = [1, 1]} : vector<128x128xbf16> to vector<128x16xbf16>
    %89 = vector.extract_strided_slice %14 {offsets = [0, 64], sizes = [128, 16], strides = [1, 1]} : vector<128x128xbf16> to vector<128x16xbf16>
    %cst_33 = arith.constant dense<0.000000e+00> : vector<64x128xf32>
    %90 = tpu.matmul %87, %88, %cst_33 {dimension_numbers = #tpu.dot_dimension_numbers<[1], [1], [0], [0], [0, 0, 1, 0], [], []>} : vector<64x16xbf16>, vector<128x16xbf16>, vector<64x128xf32> -> vector<64x128xf32>
    %cst_34 = arith.constant dense<0xFF800000> : vector<64xf32>
    %91 = vector.multi_reduction <maximumf>, %90, %cst_34 [1] : vector<64x128xf32> to vector<64xf32>
    %92 = vector.shape_cast %91 : vector<64xf32> to vector<64x1xf32>
    %93 = vector.broadcast %92 : vector<64x1xf32> to vector<64x128xf32>
    %94 = arith.subf %90, %93 : vector<64x128xf32>
    %95 = math.exp %94 : vector<64x128xf32>
    %cst_35 = arith.constant dense<0.000000e+00> : vector<64xf32>
    %96 = vector.multi_reduction <add>, %95, %cst_35 [1] : vector<64x128xf32> to vector<64xf32>
    %97 = vector.shape_cast %96 : vector<64xf32> to vector<64x1xf32>
    %98 = tpu.reciprocal %97 {approx = true} : vector<64x1xf32> -> vector<64x1xf32>
    %99 = vector.broadcast %98 : vector<64x1xf32> to vector<64x128xf32>
    %100 = arith.mulf %95, %99 : vector<64x128xf32>
    %101 = arith.truncf %100 : vector<64x128xf32> to vector<64x128xbf16>
    %cst_36 = arith.constant dense<0.000000e+00> : vector<64x16xf32>
    %102 = tpu.matmul %101, %89, %cst_36 {dimension_numbers = #tpu.dot_dimension_numbers<[1], [0], [0], [1], [0, 0, 1, 1], [], []>} : vector<64x128xbf16>, vector<128x16xbf16>, vector<64x16xf32> -> vector<64x16xf32>
    %103 = arith.truncf %102 : vector<64x16xf32> to vector<64x16xbf16>
    %c0_37 = arith.constant 0 : index
    %c64 = arith.constant 64 : index
    %104 = vector.load %arg16[%c0_37, %c64] : memref<64x128xbf16, #tpu.memory_space<vmem>>, vector<64x16xbf16>
    tpu.vector_store %arg16[%c0_37, %c64], %103 {strides = array<i32>} : memref<64x128xbf16, #tpu.memory_space<vmem>>, vector<64x16xbf16>,
    %105 = vector.extract_strided_slice %12 {offsets = [0, 80], sizes = [64, 16], strides = [1, 1]} : vector<64x128xbf16> to vector<64x16xbf16>
    %106 = vector.extract_strided_slice %13 {offsets = [0, 80], sizes = [128, 16], strides = [1, 1]} : vector<128x128xbf16> to vector<128x16xbf16>
    %107 = vector.extract_strided_slice %14 {offsets = [0, 80], sizes = [128, 16], strides = [1, 1]} : vector<128x128xbf16> to vector<128x16xbf16>
    %cst_38 = arith.constant dense<0.000000e+00> : vector<64x128xf32>
    %108 = tpu.matmul %105, %106, %cst_38 {dimension_numbers = #tpu.dot_dimension_numbers<[1], [1], [0], [0], [0, 0, 1, 0], [], []>} : vector<64x16xbf16>, vector<128x16xbf16>, vector<64x128xf32> -> vector<64x128xf32>
    %cst_39 = arith.constant dense<0xFF800000> : vector<64xf32>
    %109 = vector.multi_reduction <maximumf>, %108, %cst_39 [1] : vector<64x128xf32> to vector<64xf32>
    %110 = vector.shape_cast %109 : vector<64xf32> to vector<64x1xf32>
    %111 = vector.broadcast %110 : vector<64x1xf32> to vector<64x128xf32>
    %112 = arith.subf %108, %111 : vector<64x128xf32>
    %113 = math.exp %112 : vector<64x128xf32>
    %cst_40 = arith.constant dense<0.000000e+00> : vector<64xf32>
    %114 = vector.multi_reduction <add>, %113, %cst_40 [1] : vector<64x128xf32> to vector<64xf32>
    %115 = vector.shape_cast %114 : vector<64xf32> to vector<64x1xf32>
    %116 = tpu.reciprocal %115 {approx = true} : vector<64x1xf32> -> vector<64x1xf32>
    %117 = vector.broadcast %116 : vector<64x1xf32> to vector<64x128xf32>
    %118 = arith.mulf %113, %117 : vector<64x128xf32>
    %119 = arith.truncf %118 : vector<64x128xf32> to vector<64x128xbf16>
    %cst_41 = arith.constant dense<0.000000e+00> : vector<64x16xf32>
    %120 = tpu.matmul %119, %107, %cst_41 {dimension_numbers = #tpu.dot_dimension_numbers<[1], [0], [0], [1], [0, 0, 1, 1], [], []>} : vector<64x128xbf16>, vector<128x16xbf16>, vector<64x16xf32> -> vector<64x16xf32>
    %121 = arith.truncf %120 : vector<64x16xf32> to vector<64x16xbf16>
    %c0_42 = arith.constant 0 : index
    %c80 = arith.constant 80 : index
    %122 = vector.load %arg16[%c0_42, %c80] : memref<64x128xbf16, #tpu.memory_space<vmem>>, vector<64x16xbf16>
    tpu.vector_store %arg16[%c0_42, %c80], %121 {strides = array<i32>} : memref<64x128xbf16, #tpu.memory_space<vmem>>, vector<64x16xbf16>,
    %123 = vector.extract_strided_slice %12 {offsets = [0, 96], sizes = [64, 16], strides = [1, 1]} : vector<64x128xbf16> to vector<64x16xbf16>
    %124 = vector.extract_strided_slice %13 {offsets = [0, 96], sizes = [128, 16], strides = [1, 1]} : vector<128x128xbf16> to vector<128x16xbf16>
    %125 = vector.extract_strided_slice %14 {offsets = [0, 96], sizes = [128, 16], strides = [1, 1]} : vector<128x128xbf16> to vector<128x16xbf16>
    %cst_43 = arith.constant dense<0.000000e+00> : vector<64x128xf32>
    %126 = tpu.matmul %123, %124, %cst_43 {dimension_numbers = #tpu.dot_dimension_numbers<[1], [1], [0], [0], [0, 0, 1, 0], [], []>} : vector<64x16xbf16>, vector<128x16xbf16>, vector<64x128xf32> -> vector<64x128xf32>
    %cst_44 = arith.constant dense<0xFF800000> : vector<64xf32>
    %127 = vector.multi_reduction <maximumf>, %126, %cst_44 [1] : vector<64x128xf32> to vector<64xf32>
    %128 = vector.shape_cast %127 : vector<64xf32> to vector<64x1xf32>
    %129 = vector.broadcast %128 : vector<64x1xf32> to vector<64x128xf32>
    %130 = arith.subf %126, %129 : vector<64x128xf32>
    %131 = math.exp %130 : vector<64x128xf32>
    %cst_45 = arith.constant dense<0.000000e+00> : vector<64xf32>
    %132 = vector.multi_reduction <add>, %131, %cst_45 [1] : vector<64x128xf32> to vector<64xf32>
    %133 = vector.shape_cast %132 : vector<64xf32> to vector<64x1xf32>
    %134 = tpu.reciprocal %133 {approx = true} : vector<64x1xf32> -> vector<64x1xf32>
    %135 = vector.broadcast %134 : vector<64x1xf32> to vector<64x128xf32>
    %136 = arith.mulf %131, %135 : vector<64x128xf32>
    %137 = arith.truncf %136 : vector<64x128xf32> to vector<64x128xbf16>
    %cst_46 = arith.constant dense<0.000000e+00> : vector<64x16xf32>
    %138 = tpu.matmul %137, %125, %cst_46 {dimension_numbers = #tpu.dot_dimension_numbers<[1], [0], [0], [1], [0, 0, 1, 1], [], []>} : vector<64x128xbf16>, vector<128x16xbf16>, vector<64x16xf32> -> vector<64x16xf32>
    %139 = arith.truncf %138 : vector<64x16xf32> to vector<64x16xbf16>
    %c0_47 = arith.constant 0 : index
    %c96 = arith.constant 96 : index
    %140 = vector.load %arg16[%c0_47, %c96] : memref<64x128xbf16, #tpu.memory_space<vmem>>, vector<64x16xbf16>
    tpu.vector_store %arg16[%c0_47, %c96], %139 {strides = array<i32>} : memref<64x128xbf16, #tpu.memory_space<vmem>>, vector<64x16xbf16>,
    %141 = vector.extract_strided_slice %12 {offsets = [0, 112], sizes = [64, 16], strides = [1, 1]} : vector<64x128xbf16> to vector<64x16xbf16>
    %142 = vector.extract_strided_slice %13 {offsets = [0, 112], sizes = [128, 16], strides = [1, 1]} : vector<128x128xbf16> to vector<128x16xbf16>
    %143 = vector.extract_strided_slice %14 {offsets = [0, 112], sizes = [128, 16], strides = [1, 1]} : vector<128x128xbf16> to vector<128x16xbf16>
    %cst_48 = arith.constant dense<0.000000e+00> : vector<64x128xf32>
    %144 = tpu.matmul %141, %142, %cst_48 {dimension_numbers = #tpu.dot_dimension_numbers<[1], [1], [0], [0], [0, 0, 1, 0], [], []>} : vector<64x16xbf16>, vector<128x16xbf16>, vector<64x128xf32> -> vector<64x128xf32>
    %cst_49 = arith.constant dense<0xFF800000> : vector<64xf32>
    %145 = vector.multi_reduction <maximumf>, %144, %cst_49 [1] : vector<64x128xf32> to vector<64xf32>
    %146 = vector.shape_cast %145 : vector<64xf32> to vector<64x1xf32>
    %147 = vector.broadcast %146 : vector<64x1xf32> to vector<64x128xf32>
    %148 = arith.subf %144, %147 : vector<64x128xf32>
    %149 = math.exp %148 : vector<64x128xf32>
    %cst_50 = arith.constant dense<0.000000e+00> : vector<64xf32>
    %150 = vector.multi_reduction <add>, %149, %cst_50 [1] : vector<64x128xf32> to vector<64xf32>
    %151 = vector.shape_cast %150 : vector<64xf32> to vector<64x1xf32>
    %152 = tpu.reciprocal %151 {approx = true} : vector<64x1xf32> -> vector<64x1xf32>
    %153 = vector.broadcast %152 : vector<64x1xf32> to vector<64x128xf32>
    %154 = arith.mulf %149, %153 : vector<64x128xf32>
    %155 = arith.truncf %154 : vector<64x128xf32> to vector<64x128xbf16>
    %cst_51 = arith.constant dense<0.000000e+00> : vector<64x16xf32>
    %156 = tpu.matmul %155, %143, %cst_51 {dimension_numbers = #tpu.dot_dimension_numbers<[1], [0], [0], [1], [0, 0, 1, 1], [], []>} : vector<64x128xbf16>, vector<128x16xbf16>, vector<64x16xf32> -> vector<64x16xf32>
    %157 = arith.truncf %156 : vector<64x16xf32> to vector<64x16xbf16>
    %c0_52 = arith.constant 0 : index
    %c112 = arith.constant 112 : index
    %158 = vector.load %arg16[%c0_52, %c112] : memref<64x128xbf16, #tpu.memory_space<vmem>>, vector<64x16xbf16>
    tpu.vector_store %arg16[%c0_52, %c112], %157 {strides = array<i32>} : memref<64x128xbf16, #tpu.memory_space<vmem>>, vector<64x16xbf16>,
    %c0_53 = arith.constant 0 : index
    %c0_54 = arith.constant 0 : index
    %159 = vector.load %arg16[%c0_53, %c0_54] : memref<64x128xbf16, #tpu.memory_space<vmem>>, vector<64x128xbf16>
    %c0_55 = arith.constant 0 : index
    %c0_56 = arith.constant 0 : index
    %160 = vector.load %arg8[%c0_55, %c0_56] : memref<128x128xbf16, #tpu.memory_space<vmem>>, vector<128x128xbf16>
    %cst_57 = arith.constant dense<0.000000e+00> : vector<64x128xf32>
    %161 = tpu.matmul %159, %160, %cst_57 {dimension_numbers = #tpu.dot_dimension_numbers<[1], [0], [0], [1], [0, 0, 1, 1], [], []>} : vector<64x128xbf16>, vector<128x128xbf16>, vector<64x128xf32> -> vector<64x128xf32>
    %c0_58 = arith.constant 0 : index
    %c0_59 = arith.constant 0 : index
    %162 = vector.load %arg12[%c0_58, %c0_59] : memref<1x128xf32, #tpu.memory_space<vmem>>, vector<1x128xf32>
    %163 = vector.broadcast %162 : vector<1x128xf32> to vector<64x128xf32>
    %164 = arith.addf %161, %163 : vector<64x128xf32>
    %c0_60 = arith.constant 0 : index
    %c0_61 = arith.constant 0 : index
    %c0_62 = arith.constant 0 : index
    %165 = vector.load %arg13[%c0_60, %c0_61, %c0_62] : memref<1x64x128xf32, #tpu.memory_space<vmem>>, vector<1x64x128xf32>
    %166 = vector.shape_cast %165 : vector<1x64x128xf32> to vector<64x128xf32>
    %167 = vector.shape_cast %164 : vector<64x128xf32> to vector<1x64x128xf32>
    tpu.vector_store %arg13[%c0_60, %c0_61, %c0_62], %167 {strides = array<i32>} : memref<1x64x128xf32, #tpu.memory_space<vmem>>, vector<1x64x128xf32>,
    return
  }
  func.func @transform_0(%arg0: i32, %arg1: i32) -> (i32, i32, i32) {
    %c0_i32 = arith.constant 0 : i32
    %c0_i32_0 = arith.constant 0 : i32
    return %arg0, %arg1, %c0_i32 : i32, i32, i32
  }
  func.func @transform_1(%arg0: i32, %arg1: i32) -> (i32, i32, i32) {
    %c0_i32 = arith.constant 0 : i32
    %c0_i32_0 = arith.constant 0 : i32
    %c0_i32_1 = arith.constant 0 : i32
    return %arg0, %c0_i32, %c0_i32_0 : i32, i32, i32
  }
  func.func @transform_2(%arg0: i32, %arg1: i32) -> (i32, i32, i32) {
    %c0_i32 = arith.constant 0 : i32
    %c0_i32_0 = arith.constant 0 : i32
    %c0_i32_1 = arith.constant 0 : i32
    return %arg0, %c0_i32, %c0_i32_0 : i32, i32, i32
  }
  func.func @transform_3(%arg0: i32, %arg1: i32) -> (i32, i32) {
    %c0_i32 = arith.constant 0 : i32
    %c0_i32_0 = arith.constant 0 : i32
    %c0_i32_1 = arith.constant 0 : i32
    return %c0_i32, %c0_i32_0 : i32, i32
  }
  func.func @transform_4(%arg0: i32, %arg1: i32) -> (i32, i32) {
    %c0_i32 = arith.constant 0 : i32
    %c0_i32_0 = arith.constant 0 : i32
    %c0_i32_1 = arith.constant 0 : i32
    return %c0_i32, %c0_i32_0 : i32, i32
  }
  func.func @transform_5(%arg0: i32, %arg1: i32) -> (i32, i32) {
    %c0_i32 = arith.constant 0 : i32
    %c0_i32_0 = arith.constant 0 : i32
    %c0_i32_1 = arith.constant 0 : i32
    return %c0_i32, %c0_i32_0 : i32, i32
  }
  func.func @transform_6(%arg0: i32, %arg1: i32) -> (i32, i32) {
    %c0_i32 = arith.constant 0 : i32
    %c0_i32_0 = arith.constant 0 : i32
    %c0_i32_1 = arith.constant 0 : i32
    return %c0_i32, %c0_i32_0 : i32, i32
  }
  func.func @transform_7(%arg0: i32, %arg1: i32) -> (i32, i32) {
    %c0_i32 = arith.constant 0 : i32
    %c0_i32_0 = arith.constant 0 : i32
    %c0_i32_1 = arith.constant 0 : i32
    return %c0_i32, %c0_i32_0 : i32, i32
  }
  func.func @transform_8(%arg0: i32, %arg1: i32) -> (i32, i32) {
    %c0_i32 = arith.constant 0 : i32
    %c0_i32_0 = arith.constant 0 : i32
    %c0_i32_1 = arith.constant 0 : i32
    return %c0_i32, %c0_i32_0 : i32, i32
  }
  func.func @transform_9(%arg0: i32, %arg1: i32) -> (i32, i32) {
    %c0_i32 = arith.constant 0 : i32
    %c0_i32_0 = arith.constant 0 : i32
    %c0_i32_1 = arith.constant 0 : i32
    return %c0_i32, %c0_i32_0 : i32, i32
  }
  func.func @transform_10(%arg0: i32, %arg1: i32) -> (i32, i32) {
    %c0_i32 = arith.constant 0 : i32
    %c0_i32_0 = arith.constant 0 : i32
    %c0_i32_1 = arith.constant 0 : i32
    return %c0_i32, %c0_i32_0 : i32, i32
  }
  func.func @transform_11(%arg0: i32, %arg1: i32) -> (i32, i32, i32) {
    %c0_i32 = arith.constant 0 : i32
    %c0_i32_0 = arith.constant 0 : i32
    return %arg0, %arg1, %c0_i32 : i32, i32, i32
  }
}

</mosaic_0001>

<llo_original>
// kernel: tpu_custom_call.1
$region0: #{tpu_custom_call.1}
  #allocation0 [shape = 'u32[]', space=smem, size = 0x4, offset = 0x4, fixed_abs, tag = 'smem constant byte address 0x4 - core index']
  #allocation1 [shape = 'u32[144,128]{1,0:T(1,128)}', space=vmem, size = 0x12000, scoped, tag = 'internal scratch']
  #allocation2 [shape = 'bf16[128,128]{1,0:T(16,128)(2,1)}', space=vmem, size = 0x8000, scoped, tag = 'scratch operand']
  #allocation3 [shape = 'bf16[128,128]{1,0:T(16,128)(2,1)}', space=vmem, size = 0x8000, scoped, tag = 'scratch operand']
  #allocation4 [shape = 'bf16[64,128]{1,0:T(16,128)(2,1)}', space=vmem, size = 0x4000, scoped, tag = 'scratch operand']
  %s0 = inlined_call_operand.hbm [shape: bf16[2,128,128], index: 0, kind: input, shape index: {}]
  %s1 = inlined_call_operand.hbm [shape: bf16[2,128,128], index: 1, kind: input, shape index: {}]
  %s2 = inlined_call_operand.hbm [shape: bf16[2,128,128], index: 2, kind: input, shape index: {}]
  %s3 = inlined_call_operand.hbm [shape: bf16[128,128], index: 3, kind: input, shape index: {}]
  %s4 = inlined_call_operand.hbm [shape: bf16[128,128], index: 4, kind: input, shape index: {}]
  %s5 = inlined_call_operand.hbm [shape: bf16[128,128], index: 5, kind: input, shape index: {}]
  %s6 = inlined_call_operand.hbm [shape: bf16[128,128], index: 6, kind: input, shape index: {}]
  %s7 = inlined_call_operand.hbm [shape: f32[1,128], index: 7, kind: input, shape index: {}]
  %s8 = inlined_call_operand.hbm [shape: f32[1,128], index: 8, kind: input, shape index: {}]
  %s9 = inlined_call_operand.hbm [shape: f32[1,128], index: 9, kind: input, shape index: {}]
  %s10 = inlined_call_operand.hbm [shape: f32[1,128], index: 10, kind: input, shape index: {}]
  %s11 = inlined_call_operand.hbm [shape: f32[2,128,128], index: 11, kind: output, shape index: {}]
  %s12 = sld [smem:[#allocation0]]
  $region125: #{tpu_custom_call.1} parent=0
    _
  %s14 = ssub.s32 1, %s12
  %s15 = scalar_select 0, %s14, %s12
  $region1: #{tpu_custom_call.1} parent=0
    #allocation5 [shape = 'u8[32768]{0}', space=vmem, size = 0x8000, scoped, tag = 'input window, operand 0']
    #allocation6 [shape = 's32[2]{0}', space=sflag, size = 0x8, scoped, tag = 'scoped memory for tpu_custom_call.1']
    #allocation7 [shape = 's32[2]{0}', space=sflag, size = 0x8, scoped, tag = 'scoped memory for tpu_custom_call.1']
    #allocation8 [shape = 'u8[65536]{0}', space=vmem, size = 0x10000, scoped, tag = 'input window, operand 1']
    #allocation9 [shape = 's32[2]{0}', space=sflag, size = 0x8, scoped, tag = 'scoped memory for tpu_custom_call.1']
    #allocation10 [shape = 'u8[65536]{0}', space=vmem, size = 0x10000, scoped, tag = 'input window, operand 2']
    #allocation11 [shape = 'u8[32768]{0}', space=vmem, size = 0x8000, scoped, tag = 'input window, operand 3, single buffered']
    #allocation12 [shape = 's32[1]{0}', space=sflag, size = 0x4, scoped, tag = 'scoped memory for tpu_custom_call.1']
    #allocation13 [shape = 'u8[32768]{0}', space=vmem, size = 0x8000, scoped, tag = 'input window, operand 4, single buffered']
    #allocation14 [shape = 'u8[32768]{0}', space=vmem, size = 0x8000, scoped, tag = 'input window, operand 5, single buffered']
    #allocation15 [shape = 's32[1]{0}', space=sflag, size = 0x4, scoped, tag = 'scoped memory for tpu_custom_call.1']
    #allocation16 [shape = 'u8[32768]{0}', space=vmem, size = 0x8000, scoped, tag = 'input window, operand 6, single buffered']
    #allocation17 [shape = 'u8[512]{0}', space=vmem, size = 0x400, scoped, tag = 'input window, operand 7, single buffered']
    #allocation18 [shape = 's32[1]{0}', space=sflag, size = 0x4, scoped, tag = 'scoped memory for tpu_custom_call.1']
    #allocation19 [shape = 'u8[512]{0}', space=vmem, size = 0x400, scoped, tag = 'input window, operand 8, single buffered']
    #allocation20 [shape = 'u8[512]{0}', space=vmem, size = 0x400, scoped, tag = 'input window, operand 9, single buffered']
    #allocation21 [shape = 's32[1]{0}', space=sflag, size = 0x4, scoped, tag = 'scoped memory for tpu_custom_call.1']
    #allocation22 [shape = 'u8[512]{0}', space=vmem, size = 0x400, scoped, tag = 'input window, operand 10, single buffered']
    #allocation23 [shape = 'u8[65536]{0}', space=vmem, size = 0x10000, scoped, tag = 'output window, operand 0']
    %16 = vsyncpa [#allocation6], 0
    %s17 = scalar_lea.sflag [#allocation6], 1
    %18 = vsyncpa %s17, 0
    %19 = vsyncpa [#allocation9], 0
    %s20 = scalar_lea.sflag [#allocation9], 1
    %21 = vsyncpa %s20, 0
    %22 = vsyncpa [#allocation12], 0
    %23 = vsyncpa [#allocation15], 0
    %24 = vsyncpa [#allocation18], 0
    %25 = vsyncpa [#allocation21], 0
    %26 = vsyncpa [#allocation7], 0
    %s27 = scalar_lea.sflag [#allocation7], 1
    %28 = vsyncpa %s27, 0
    loop: start=0, step=1, limit=6
    $region2: #{tpu_custom_call.1} parent=1 // loop_pre_header
      _
    $region3: #{tpu_custom_call.1} parent=1 // loop_header
      %s30 = sphi 0, %s34
      %p31 = scmp.ge.s32.totalorder %s30, 6
      %s37 = sphi 0, %s49
      %s38 = sphi 0, %s45
      %s39 = sphi 0, %s37
      %s40 = sphi 0, %s38
      %s41 = sphi 0, %s39
      %s42 = sphi 0, %s40
      %s54 = sphi 0, %s56
      %s57 = sphi 0, %s54
      %s58 = sphi 0, %s57
      %s74 = sphi 0, %s58
      %s80 = sphi 0, %s82
      %s83 = sphi 0, %s80
      %s84 = sphi 0, %s83
      %s100 = sphi 0, %s84
      %s106 = sphi 0, %s108
      %s109 = sphi 0, %s106
      %s110 = sphi 0, %s109
      %s126 = sphi 0, %s110
      %s130 = sphi 0, %s130
      %s132 = sphi 0, %s130
      %s133 = sphi 0, %s132
      %s147 = sphi 0, %s133
      %s151 = sphi 0, %s151
      %s153 = sphi 0, %s151
      %s154 = sphi 0, %s153
      %s168 = sphi 0, %s154
      %s172 = sphi 0, %s172
      %s174 = sphi 0, %s172
      %s175 = sphi 0, %s174
      %s189 = sphi 0, %s175
      %s193 = sphi 0, %s193
      %s195 = sphi 0, %s193
      %s196 = sphi 0, %s195
      %s210 = sphi 0, %s196
      %s214 = sphi 0, %s214
      %s216 = sphi 0, %s214
      %s217 = sphi 0, %s216
      %s231 = sphi 0, %s217
      %s235 = sphi 0, %s235
      %s237 = sphi 0, %s235
      %s238 = sphi 0, %s237
      %s252 = sphi 0, %s238
      %s256 = sphi 0, %s256
      %s258 = sphi 0, %s256
      %s259 = sphi 0, %s258
      %s273 = sphi 0, %s259
      %s277 = sphi 0, %s277
      %s279 = sphi 0, %s277
      %s280 = sphi 0, %s279
      %s294 = sphi 0, %s280
      %s302 = sphi 0, %s304
      %s305 = sphi 0, %s302
      %s306 = sphi 0, %s305
      %s322 = sphi 0, %s306
    $region4: #{tpu_custom_call.1} parent=1 // loop_header_branch
      %33 = sbr.rel (%p31) target = $region8
    $region5: #{tpu_custom_call.1} parent=1 // loop_body
      %s35 = ssub.s32 %s30, 1
      %s36 = ssub.s32 %s30, 2
      %s43 = sadd.s32 1, %s38
      %p44 = scmp.ge.s32.totalorder %s43, 2
      %s45 = scalar_select %p44, 0, %s43
      %s46 = sadd.s32 1, %s37
      %s47 = scalar_select %p44, %s46, %s37
      %p48 = scmp.ge.s32.totalorder %s47, 2
      %s49 = scalar_select %p48, 0, %s47
      %s50 = ssub.s32 %s37, %s49
      %s51 = ssub.s32 %s38, %s45
      %s52 = sor.u32 %s50, %s51
      %p53 = scmp.eq.s32.totalorder %s52, 0
      %s55 = sadd.s32 %s54, 1
      %s56 = scalar_select %p53, %s54, %s55
      %p59 = pneg %p53
      %p60 = scmp.eq.s32.totalorder %s30, 3
      %p61 = por %p59, %p60
      %p62 = scmp.ne.s32.totalorder %s54, %s57
      %p63 = scmp.eq.s32.totalorder %s30, 0
      %p64 = por %p62, %p63
      %p65 = scmp.ne.s32.totalorder %s54, %s57
      %p66 = scmp.eq.s32.totalorder %s35, 3
      %p67 = por %p65, %p66
      %p68 = scmp.ne.s32.totalorder %s57, %s58
      %p69 = scmp.eq.s32.totalorder %s35, 0
      %p70 = por %p68, %p69
      %p71 = scmp.ne.s32.totalorder %s57, %s58
      %p72 = scmp.eq.s32.totalorder %s36, 3
      %p73 = por %p71, %p72
      %p75 = scmp.ne.s32.totalorder %s58, %s74
      %p76 = scmp.eq.s32.totalorder %s36, 0
      %p77 = por %p75, %p76
      %s78 = ssub.s32 %s37, %s49
      %p79 = scmp.eq.s32.totalorder %s78, 0
      %s81 = sadd.s32 %s80, 1
      %s82 = scalar_select %p79, %s80, %s81
      %p85 = pneg %p79
      %p86 = scmp.eq.s32.totalorder %s30, 3
      %p87 = por %p85, %p86
      %p88 = scmp.ne.s32.totalorder %s80, %s83
      %p89 = scmp.eq.s32.totalorder %s30, 0
      %p90 = por %p88, %p89
      %p91 = scmp.ne.s32.totalorder %s80, %s83
      %p92 = scmp.eq.s32.totalorder %s35, 3
      %p93 = por %p91, %p92
      %p94 = scmp.ne.s32.totalorder %s83, %s84
      %p95 = scmp.eq.s32.totalorder %s35, 0
      %p96 = por %p94, %p95
      %p97 = scmp.ne.s32.totalorder %s83, %s84
      %p98 = scmp.eq.s32.totalorder %s36, 3
      %p99 = por %p97, %p98
      %p101 = scmp.ne.s32.totalorder %s84, %s100
      %p102 = scmp.eq.s32.totalorder %s36, 0
      %p103 = por %p101, %p102
      %s104 = ssub.s32 %s37, %s49
      %p105 = scmp.eq.s32.totalorder %s104, 0
      %s107 = sadd.s32 %s106, 1
      %s108 = scalar_select %p105, %s106, %s107
      %p111 = pneg %p105
      %p112 = scmp.eq.s32.totalorder %s30, 3
      %p113 = por %p111, %p112
      %p114 = scmp.ne.s32.totalorder %s106, %s109
      %p115 = scmp.eq.s32.totalorder %s30, 0
      %p116 = por %p114, %p115
      %p117 = scmp.ne.s32.totalorder %s106, %s109
      %p118 = scmp.eq.s32.totalorder %s35, 3
      %p119 = por %p117, %p118
      %p120 = scmp.ne.s32.totalorder %s109, %s110
      %p121 = scmp.eq.s32.totalorder %s35, 0
      %p122 = por %p120, %p121
      %p123 = scmp.ne.s32.totalorder %s109, %s110
      %p124 = scmp.eq.s32.totalorder %s36, 3
      %p125 = por %p123, %p124
      %p127 = scmp.ne.s32.totalorder %s110, %s126
      %p128 = scmp.eq.s32.totalorder %s36, 0
      %p129 = por %p127, %p128
      %s131 = sadd.s32 %s130, 1
      %p134 = scmp.eq.s32.totalorder %s30, 3
      %p135 = scmp.ne.s32.totalorder %s130, %s132
      %p136 = scmp.eq.s32.totalorder %s30, 0
      %p137 = por %p135, %p136
      %p138 = scmp.ne.s32.totalorder %s130, %s132
      %p139 = scmp.eq.s32.totalorder %s35, 3
      %p140 = por %p138, %p139
      %p141 = scmp.ne.s32.totalorder %s132, %s133
      %p142 = scmp.eq.s32.totalorder %s35, 0
      %p143 = por %p141, %p142
      %p144 = scmp.ne.s32.totalorder %s132, %s133
      %p145 = scmp.eq.s32.totalorder %s36, 3
      %p146 = por %p144, %p145
      %p148 = scmp.ne.s32.totalorder %s133, %s147
      %p149 = scmp.eq.s32.totalorder %s36, 0
      %p150 = por %p148, %p149
      %s152 = sadd.s32 %s151, 1
      %p155 = scmp.eq.s32.totalorder %s30, 3
      %p156 = scmp.ne.s32.totalorder %s151, %s153
      %p157 = scmp.eq.s32.totalorder %s30, 0
      %p158 = por %p156, %p157
      %p159 = scmp.ne.s32.totalorder %s151, %s153
      %p160 = scmp.eq.s32.totalorder %s35, 3
      %p161 = por %p159, %p160
      %p162 = scmp.ne.s32.totalorder %s153, %s154
      %p163 = scmp.eq.s32.totalorder %s35, 0
      %p164 = por %p162, %p163
      %p165 = scmp.ne.s32.totalorder %s153, %s154
      %p166 = scmp.eq.s32.totalorder %s36, 3
      %p167 = por %p165, %p166
      %p169 = scmp.ne.s32.totalorder %s154, %s168
      %p170 = scmp.eq.s32.totalorder %s36, 0
      %p171 = por %p169, %p170
      %s173 = sadd.s32 %s172, 1
      %p176 = scmp.eq.s32.totalorder %s30, 3
      %p177 = scmp.ne.s32.totalorder %s172, %s174
      %p178 = scmp.eq.s32.totalorder %s30, 0
      %p179 = por %p177, %p178
      %p180 = scmp.ne.s32.totalorder %s172, %s174
      %p181 = scmp.eq.s32.totalorder %s35, 3
      %p182 = por %p180, %p181
      %p183 = scmp.ne.s32.totalorder %s174, %s175
      %p184 = scmp.eq.s32.totalorder %s35, 0
      %p185 = por %p183, %p184
      %p186 = scmp.ne.s32.totalorder %s174, %s175
      %p187 = scmp.eq.s32.totalorder %s36, 3
      %p188 = por %p186, %p187
      %p190 = scmp.ne.s32.totalorder %s175, %s189
      %p191 = scmp.eq.s32.totalorder %s36, 0
      %p192 = por %p190, %p191
      %s194 = sadd.s32 %s193, 1
      %p197 = scmp.eq.s32.totalorder %s30, 3
      %p198 = scmp.ne.s32.totalorder %s193, %s195
      %p199 = scmp.eq.s32.totalorder %s30, 0
      %p200 = por %p198, %p199
      %p201 = scmp.ne.s32.totalorder %s193, %s195
      %p202 = scmp.eq.s32.totalorder %s35, 3
      %p203 = por %p201, %p202
      %p204 = scmp.ne.s32.totalorder %s195, %s196
      %p205 = scmp.eq.s32.totalorder %s35, 0
      %p206 = por %p204, %p205
      %p207 = scmp.ne.s32.totalorder %s195, %s196
      %p208 = scmp.eq.s32.totalorder %s36, 3
      %p209 = por %p207, %p208
      %p211 = scmp.ne.s32.totalorder %s196, %s210
      %p212 = scmp.eq.s32.totalorder %s36, 0
      %p213 = por %p211, %p212
      %s215 = sadd.s32 %s214, 1
      %p218 = scmp.eq.s32.totalorder %s30, 3
      %p219 = scmp.ne.s32.totalorder %s214, %s216
      %p220 = scmp.eq.s32.totalorder %s30, 0
      %p221 = por %p219, %p220
      %p222 = scmp.ne.s32.totalorder %s214, %s216
      %p223 = scmp.eq.s32.totalorder %s35, 3
      %p224 = por %p222, %p223
      %p225 = scmp.ne.s32.totalorder %s216, %s217
      %p226 = scmp.eq.s32.totalorder %s35, 0
      %p227 = por %p225, %p226
      %p228 = scmp.ne.s32.totalorder %s216, %s217
      %p229 = scmp.eq.s32.totalorder %s36, 3
      %p230 = por %p228, %p229
      %p232 = scmp.ne.s32.totalorder %s217, %s231
      %p233 = scmp.eq.s32.totalorder %s36, 0
      %p234 = por %p232, %p233
      %s236 = sadd.s32 %s235, 1
      %p239 = scmp.eq.s32.totalorder %s30, 3
      %p240 = scmp.ne.s32.totalorder %s235, %s237
      %p241 = scmp.eq.s32.totalorder %s30, 0
      %p242 = por %p240, %p241
      %p243 = scmp.ne.s32.totalorder %s235, %s237
      %p244 = scmp.eq.s32.totalorder %s35, 3
      %p245 = por %p243, %p244
      %p246 = scmp.ne.s32.totalorder %s237, %s238
      %p247 = scmp.eq.s32.totalorder %s35, 0
      %p248 = por %p246, %p247
      %p249 = scmp.ne.s32.totalorder %s237, %s238
      %p250 = scmp.eq.s32.totalorder %s36, 3
      %p251 = por %p249, %p250
      %p253 = scmp.ne.s32.totalorder %s238, %s252
      %p254 = scmp.eq.s32.totalorder %s36, 0
      %p255 = por %p253, %p254
      %s257 = sadd.s32 %s256, 1
      %p260 = scmp.eq.s32.totalorder %s30, 3
      %p261 = scmp.ne.s32.totalorder %s256, %s258
      %p262 = scmp.eq.s32.totalorder %s30, 0
      %p263 = por %p261, %p262
      %p264 = scmp.ne.s32.totalorder %s256, %s258
      %p265 = scmp.eq.s32.totalorder %s35, 3
      %p266 = por %p264, %p265
      %p267 = scmp.ne.s32.totalorder %s258, %s259
      %p268 = scmp.eq.s32.totalorder %s35, 0
      %p269 = por %p267, %p268
      %p270 = scmp.ne.s32.totalorder %s258, %s259
      %p271 = scmp.eq.s32.totalorder %s36, 3
      %p272 = por %p270, %p271
      %p274 = scmp.ne.s32.totalorder %s259, %s273
      %p275 = scmp.eq.s32.totalorder %s36, 0
      %p276 = por %p274, %p275
      %s278 = sadd.s32 %s277, 1
      %p281 = scmp.eq.s32.totalorder %s30, 3
      %p282 = scmp.ne.s32.totalorder %s277, %s279
      %p283 = scmp.eq.s32.totalorder %s30, 0
      %p284 = por %p282, %p283
      %p285 = scmp.ne.s32.totalorder %s277, %s279
      %p286 = scmp.eq.s32.totalorder %s35, 3
      %p287 = por %p285, %p286
      %p288 = scmp.ne.s32.totalorder %s279, %s280
      %p289 = scmp.eq.s32.totalorder %s35, 0
      %p290 = por %p288, %p289
      %p291 = scmp.ne.s32.totalorder %s279, %s280
      %p292 = scmp.eq.s32.totalorder %s36, 3
      %p293 = por %p291, %p292
      %p295 = scmp.ne.s32.totalorder %s280, %s294
      %p296 = scmp.eq.s32.totalorder %s36, 0
      %p297 = por %p295, %p296
      %s298 = ssub.s32 %s37, %s49
      %s299 = ssub.s32 %s38, %s45
      %s300 = sor.u32 %s298, %s299
      %p301 = scmp.eq.s32.totalorder %s300, 0
      %s303 = sadd.s32 %s302, 1
      %s304 = scalar_select %p301, %s302, %s303
      %p307 = pneg %p301
      %p308 = scmp.eq.s32.totalorder %s30, 3
      %p309 = por %p307, %p308
      %p310 = scmp.ne.s32.totalorder %s302, %s305
      %p311 = scmp.eq.s32.totalorder %s30, 0
      %p312 = por %p310, %p311
      %p313 = scmp.ne.s32.totalorder %s302, %s305
      %p314 = scmp.eq.s32.totalorder %s35, 3
      %p315 = por %p313, %p314
      %p316 = scmp.ne.s32.totalorder %s305, %s306
      %p317 = scmp.eq.s32.totalorder %s35, 0
      %p318 = por %p316, %p317
      %p319 = scmp.ne.s32.totalorder %s305, %s306
      %p320 = scmp.eq.s32.totalorder %s36, 3
      %p321 = por %p319, %p320
      %p323 = scmp.ne.s32.totalorder %s306, %s322
      %p324 = scmp.eq.s32.totalorder %s36, 0
      %p325 = por %p323, %p324
      %p326 = scmp.le.s32.totalorder 1, %s30
      %p327 = scmp.lt.s32.totalorder %s30, 5
      %p328 = pnand %p326, %p327
      %p329 = pneg %p328
      // Predicated region
      $region9: #{tpu_custom_call.1} parent=5 // pred_check
        _
      $region10: #{tpu_custom_call.1} parent=5 // pred_check_branch
        %331 = sbr.rel (%p328) target = $region12
      $region11: #{tpu_custom_call.1} parent=5 // pred_region
        %s332 = ssub.s32 %s30, 1
        // Predicated region
        $region13: #{tpu_custom_call.1} parent=11 // pred_check
          %p333 = pneg %p143
        $region14: #{tpu_custom_call.1} parent=11 // pred_check_branch
          %335 = sbr.rel (%p333) target = $region16
        $region15: #{tpu_custom_call.1} parent=11 // pred_region
          %s337 = ssub.s32 1024, 1024
          %338 = vsyncadd [#allocation12], %s337
          %s339 = sshll.u32 [#allocation11], 4
          %s340 = int_to_ptr.vmem [resolvable:$true] %s339
          %345 = dma.hbm_to_vmem [thread:$0]  %s3, 1024, %s340, [#allocation12], 64, 64, 4
        $region16: #{tpu_custom_call.1} parent=11 // pred_fallthru
          _
        // Predicated region
        $region17: #{tpu_custom_call.1} parent=11 // pred_check
          %p346 = pneg %p164
        $region18: #{tpu_custom_call.1} parent=11 // pred_check_branch
          %348 = sbr.rel (%p346) target = $region20
        $region19: #{tpu_custom_call.1} parent=11 // pred_region
          %s350 = ssub.s32 1024, 1024
          %351 = vsyncadd [#allocation12], %s350
          %s352 = sshll.u32 [#allocation13], 4
          %s353 = int_to_ptr.vmem [resolvable:$true] %s352
          %358 = dma.hbm_to_vmem [thread:$0]  %s4, 1024, %s353, [#allocation12], 64, 64, 4
        $region20: #{tpu_custom_call.1} parent=11 // pred_fallthru
          _
        // Predicated region
        $region21: #{tpu_custom_call.1} parent=11 // pred_check
          %p359 = pneg %p185
        $region22: #{tpu_custom_call.1} parent=11 // pred_check_branch
          %361 = sbr.rel (%p359) target = $region24
        $region23: #{tpu_custom_call.1} parent=11 // pred_region
          %s363 = ssub.s32 1024, 1024
          %364 = vsyncadd [#allocation15], %s363
          %s365 = sshll.u32 [#allocation14], 4
          %s366 = int_to_ptr.vmem [resolvable:$true] %s365
          %371 = dma.hbm_to_vmem [thread:$0]  %s5, 1024, %s366, [#allocation15], 64, 64, 4
        $region24: #{tpu_custom_call.1} parent=11 // pred_fallthru
          _
        // Predicated region
        $region25: #{tpu_custom_call.1} parent=11 // pred_check
          %p372 = pneg %p206
        $region26: #{tpu_custom_call.1} parent=11 // pred_check_branch
          %374 = sbr.rel (%p372) target = $region28
        $region27: #{tpu_custom_call.1} parent=11 // pred_region
          %s376 = ssub.s32 1024, 1024
          %377 = vsyncadd [#allocation15], %s376
          %s378 = sshll.u32 [#allocation16], 4
          %s379 = int_to_ptr.vmem [resolvable:$true] %s378
          %384 = dma.hbm_to_vmem [thread:$0]  %s6, 1024, %s379, [#allocation15], 64, 64, 4
        $region28: #{tpu_custom_call.1} parent=11 // pred_fallthru
          _
        // Predicated region
        $region29: #{tpu_custom_call.1} parent=11 // pred_check
          %p385 = pneg %p227
        $region30: #{tpu_custom_call.1} parent=11 // pred_check_branch
          %387 = sbr.rel (%p385) target = $region32
        $region31: #{tpu_custom_call.1} parent=11 // pred_region
          %s389 = ssub.s32 16, 16
          %390 = vsyncadd [#allocation18], %s389
          %s392 = sshll.u32 [#allocation17], 4
          %s393 = int_to_ptr.vmem [resolvable:$true] %s392
          %395 = dma.hbm_to_vmem [thread:$0]  %s7, 16, %s393, [#allocation18]
        $region32: #{tpu_custom_call.1} parent=11 // pred_fallthru
          _
        // Predicated region
        $region33: #{tpu_custom_call.1} parent=11 // pred_check
          %p396 = pneg %p248
        $region34: #{tpu_custom_call.1} parent=11 // pred_check_branch
          %398 = sbr.rel (%p396) target = $region36
        $region35: #{tpu_custom_call.1} parent=11 // pred_region
          %s400 = ssub.s32 16, 16
          %401 = vsyncadd [#allocation18], %s400
          %s403 = sshll.u32 [#allocation19], 4
          %s404 = int_to_ptr.vmem [resolvable:$true] %s403
          %406 = dma.hbm_to_vmem [thread:$0]  %s8, 16, %s404, [#allocation18]
        $region36: #{tpu_custom_call.1} parent=11 // pred_fallthru
          _
        // Predicated region
        $region37: #{tpu_custom_call.1} parent=11 // pred_check
          %p407 = pneg %p269
        $region38: #{tpu_custom_call.1} parent=11 // pred_check_branch
          %409 = sbr.rel (%p407) target = $region40
        $region39: #{tpu_custom_call.1} parent=11 // pred_region
          %s411 = ssub.s32 16, 16
          %412 = vsyncadd [#allocation21], %s411
          %s414 = sshll.u32 [#allocation20], 4
          %s415 = int_to_ptr.vmem [resolvable:$true] %s414
          %417 = dma.hbm_to_vmem [thread:$0]  %s9, 16, %s415, [#allocation21]
        $region40: #{tpu_custom_call.1} parent=11 // pred_fallthru
          _
        // Predicated region
        $region41: #{tpu_custom_call.1} parent=11 // pred_check
          %p418 = pneg %p290
        $region42: #{tpu_custom_call.1} parent=11 // pred_check_branch
          %420 = sbr.rel (%p418) target = $region44
        $region43: #{tpu_custom_call.1} parent=11 // pred_region
          %s422 = ssub.s32 16, 16
          %423 = vsyncadd [#allocation21], %s422
          %s425 = sshll.u32 [#allocation22], 4
          %s426 = int_to_ptr.vmem [resolvable:$true] %s425
          %428 = dma.hbm_to_vmem [thread:$0]  %s10, 16, %s426, [#allocation21]
        $region44: #{tpu_custom_call.1} parent=11 // pred_fallthru
          _
      $region12: #{tpu_custom_call.1} parent=5 // pred_fallthru
        _
      %p429 = scmp.lt.s32.totalorder %s30, 4
      // Predicated region
      $region45: #{tpu_custom_call.1} parent=5 // pred_check
        %p430 = pneg %p429
      $region46: #{tpu_custom_call.1} parent=5 // pred_check_branch
        %432 = sbr.rel (%p430) target = $region48
      $region47: #{tpu_custom_call.1} parent=5 // pred_region
        // Predicated region
        $region49: #{tpu_custom_call.1} parent=47 // pred_check
          %p433 = pneg %p64
        $region50: #{tpu_custom_call.1} parent=47 // pred_check_branch
          %435 = sbr.rel (%p433) target = $region52
        $region51: #{tpu_custom_call.1} parent=47 // pred_region
          %s436 = sand.u32 %s54, 1
          %s437 = scalar_lea.sflag [#allocation6], %s436
          %s438 = sand.u32 %s54, 1
          %s439 = smul.addr %s438, 32
          %s440 = scalar_lea.vmem [#allocation5], %s439
          %s441 = smul.u32 8, %s38
          %s443 = ssub.s32 512, 512
          %444 = vsyncadd %s437, %s443
          %s445 = smul.addr %s37, 16
          %s446 = sadd.s32 %s441, %s445
          %s447 = smul.addr %s446, 64
          %s448 = scalar_lea.hbm %s0, %s447
          %s449 = sshll.u32 %s440, 4
          %s450 = int_to_ptr.vmem [resolvable:$true] %s449
          %455 = dma.hbm_to_vmem [thread:$0]  %s448, 512, %s450, %s437, 64, 64, 4
        $region52: #{tpu_custom_call.1} parent=47 // pred_fallthru
          _
        // Predicated region
        $region53: #{tpu_custom_call.1} parent=47 // pred_check
          %p456 = pneg %p90
        $region54: #{tpu_custom_call.1} parent=47 // pred_check_branch
          %458 = sbr.rel (%p456) target = $region56
        $region55: #{tpu_custom_call.1} parent=47 // pred_region
          %s459 = sand.u32 %s30, 1
          %s460 = scalar_lea.sflag [#allocation9], %s459
          %s461 = sand.u32 %s80, 1
          %s462 = smul.addr %s461, 64
          %s463 = scalar_lea.vmem [#allocation8], %s462
          %s465 = ssub.s32 1024, 1024
          %466 = vsyncadd %s460, %s465
          %s467 = smul.addr %s37, 16
          %s468 = smul.addr %s467, 64
          %s469 = scalar_lea.hbm %s1, %s468
          %s470 = sshll.u32 %s463, 4
          %s471 = int_to_ptr.vmem [resolvable:$true] %s470
          %476 = dma.hbm_to_vmem [thread:$0]  %s469, 1024, %s471, %s460, 64, 64, 4
        $region56: #{tpu_custom_call.1} parent=47 // pred_fallthru
          _
        // Predicated region
        $region57: #{tpu_custom_call.1} parent=47 // pred_check
          %p477 = pneg %p116
        $region58: #{tpu_custom_call.1} parent=47 // pred_check_branch
          %479 = sbr.rel (%p477) target = $region60
        $region59: #{tpu_custom_call.1} parent=47 // pred_region
          %s480 = sand.u32 %s30, 1
          %s481 = scalar_lea.sflag [#allocation9], %s480
          %s482 = sand.u32 %s106, 1
          %s483 = smul.addr %s482, 64
          %s484 = scalar_lea.vmem [#allocation10], %s483
          %s486 = ssub.s32 1024, 1024
          %487 = vsyncadd %s481, %s486
          %s488 = smul.addr %s37, 16
          %s489 = smul.addr %s488, 64
          %s490 = scalar_lea.hbm %s2, %s489
          %s491 = sshll.u32 %s484, 4
          %s492 = int_to_ptr.vmem [resolvable:$true] %s491
          %497 = dma.hbm_to_vmem [thread:$0]  %s490, 1024, %s492, %s481, 64, 64, 4
        $region60: #{tpu_custom_call.1} parent=47 // pred_fallthru
          _
      $region48: #{tpu_custom_call.1} parent=5 // pred_fallthru
        _
      %p498 = scmp.le.s32.totalorder 1, %s30
      %p499 = scmp.lt.s32.totalorder %s30, 5
      %p500 = pnand %p498, %p499
      %p501 = pneg %p500
      // Predicated region
      $region61: #{tpu_custom_call.1} parent=5 // pred_check
        _
      $region62: #{tpu_custom_call.1} parent=5 // pred_check_branch
        %503 = sbr.rel (%p500) target = $region64
      $region63: #{tpu_custom_call.1} parent=5 // pred_region
        %s504 = ssub.s32 %s30, 1
        %s505 = sand.u32 %s57, 1
        %s506 = scalar_lea.sflag [#allocation6], %s505
        %s507 = sand.u32 %s57, 1
        %s508 = smul.addr %s507, 32
        %s509 = scalar_lea.vmem [#allocation5], %s508
        // Predicated region
        $region65: #{tpu_custom_call.1} parent=63 // pred_check
          %p510 = pneg %p70
        $region66: #{tpu_custom_call.1} parent=63 // pred_check_branch
          %512 = sbr.rel (%p510) target = $region68
        $region67: #{tpu_custom_call.1} parent=63 // pred_region
          %513 = dma.done %s506, 512
        $region68: #{tpu_custom_call.1} parent=63 // pred_fallthru
          _
        %s514 = sand.u32 %s35, 1
        %s515 = scalar_lea.sflag [#allocation9], %s514
        %s516 = sand.u32 %s83, 1
        %s517 = smul.addr %s516, 64
        %s518 = scalar_lea.vmem [#allocation8], %s517
        // Predicated region
        $region69: #{tpu_custom_call.1} parent=63 // pred_check
          %p519 = pneg %p96
        $region70: #{tpu_custom_call.1} parent=63 // pred_check_branch
          %521 = sbr.rel (%p519) target = $region72
        $region71: #{tpu_custom_call.1} parent=63 // pred_region
          %522 = dma.done %s515, 1024
        $region72: #{tpu_custom_call.1} parent=63 // pred_fallthru
          _
        %s523 = sand.u32 %s35, 1
        %s524 = scalar_lea.sflag [#allocation9], %s523
        %s525 = sand.u32 %s109, 1
        %s526 = smul.addr %s525, 64
        %s527 = scalar_lea.vmem [#allocation10], %s526
        // Predicated region
        $region73: #{tpu_custom_call.1} parent=63 // pred_check
          %p528 = pneg %p122
        $region74: #{tpu_custom_call.1} parent=63 // pred_check_branch
          %530 = sbr.rel (%p528) target = $region76
        $region75: #{tpu_custom_call.1} parent=63 // pred_region
          %531 = dma.done %s524, 1024
        $region76: #{tpu_custom_call.1} parent=63 // pred_fallthru
          _
        // Predicated region
        $region77: #{tpu_custom_call.1} parent=63 // pred_check
          %p532 = pneg %p143
        $region78: #{tpu_custom_call.1} parent=63 // pred_check_branch
          %534 = sbr.rel (%p532) target = $region80
        $region79: #{tpu_custom_call.1} parent=63 // pred_region
          %535 = dma.done [#allocation12], 1024
        $region80: #{tpu_custom_call.1} parent=63 // pred_fallthru
          _
        // Predicated region
        $region81: #{tpu_custom_call.1} parent=63 // pred_check
          %p536 = pneg %p164
        $region82: #{tpu_custom_call.1} parent=63 // pred_check_branch
          %538 = sbr.rel (%p536) target = $region84
        $region83: #{tpu_custom_call.1} parent=63 // pred_region
          %539 = dma.done [#allocation12], 1024
        $region84: #{tpu_custom_call.1} parent=63 // pred_fallthru
          _
        // Predicated region
        $region85: #{tpu_custom_call.1} parent=63 // pred_check
          %p540 = pneg %p185
        $region86: #{tpu_custom_call.1} parent=63 // pred_check_branch
          %542 = sbr.rel (%p540) target = $region88
        $region87: #{tpu_custom_call.1} parent=63 // pred_region
          %543 = dma.done [#allocation15], 1024
        $region88: #{tpu_custom_call.1} parent=63 // pred_fallthru
          _
        // Predicated region
        $region89: #{tpu_custom_call.1} parent=63 // pred_check
          %p544 = pneg %p206
        $region90: #{tpu_custom_call.1} parent=63 // pred_check_branch
          %546 = sbr.rel (%p544) target = $region92
        $region91: #{tpu_custom_call.1} parent=63 // pred_region
          %547 = dma.done [#allocation15], 1024
        $region92: #{tpu_custom_call.1} parent=63 // pred_fallthru
          _
        // Predicated region
        $region93: #{tpu_custom_call.1} parent=63 // pred_check
          %p548 = pneg %p227
        $region94: #{tpu_custom_call.1} parent=63 // pred_check_branch
          %550 = sbr.rel (%p548) target = $region96
        $region95: #{tpu_custom_call.1} parent=63 // pred_region
          %551 = dma.done [#allocation18], 16
        $region96: #{tpu_custom_call.1} parent=63 // pred_fallthru
          _
        // Predicated region
        $region97: #{tpu_custom_call.1} parent=63 // pred_check
          %p552 = pneg %p248
        $region98: #{tpu_custom_call.1} parent=63 // pred_check_branch
          %554 = sbr.rel (%p552) target = $region100
        $region99: #{tpu_custom_call.1} parent=63 // pred_region
          %555 = dma.done [#allocation18], 16
        $region100: #{tpu_custom_call.1} parent=63 // pred_fallthru
          _
        // Predicated region
        $region101: #{tpu_custom_call.1} parent=63 // pred_check
          %p556 = pneg %p269
        $region102: #{tpu_custom_call.1} parent=63 // pred_check_branch
          %558 = sbr.rel (%p556) target = $region104
        $region103: #{tpu_custom_call.1} parent=63 // pred_region
          %559 = dma.done [#allocation21], 16
        $region104: #{tpu_custom_call.1} parent=63 // pred_fallthru
          _
        // Predicated region
        $region105: #{tpu_custom_call.1} parent=63 // pred_check
          %p560 = pneg %p290
        $region106: #{tpu_custom_call.1} parent=63 // pred_check_branch
          %562 = sbr.rel (%p560) target = $region108
        $region107: #{tpu_custom_call.1} parent=63 // pred_region
          %563 = dma.done [#allocation21], 16
        $region108: #{tpu_custom_call.1} parent=63 // pred_fallthru
          _
        %s564 = sand.u32 %s57, 1
        %s565 = scalar_lea.sflag [#allocation6], %s564
        %s566 = sand.u32 %s57, 1
        %s567 = smul.addr %s566, 32
        %s568 = scalar_lea.vmem [#allocation5], %s567
        %p569 = pneg %p70
        %p570 = pneg %p67
        %s571 = sand.u32 %s35, 1
        %s572 = scalar_lea.sflag [#allocation9], %s571
        %s573 = sand.u32 %s83, 1
        %s574 = smul.addr %s573, 64
        %s575 = scalar_lea.vmem [#allocation8], %s574
        %p576 = pneg %p96
        %p577 = pneg %p93
        %s578 = sand.u32 %s35, 1
        %s579 = scalar_lea.sflag [#allocation9], %s578
        %s580 = sand.u32 %s109, 1
        %s581 = smul.addr %s580, 64
        %s582 = scalar_lea.vmem [#allocation10], %s581
        %p583 = pneg %p122
        %p584 = pneg %p119
        %p585 = pneg %p143
        %p586 = pneg %p140
        %p587 = pneg %p164
        %p588 = pneg %p161
        %p589 = pneg %p185
        %p590 = pneg %p182
        %p591 = pneg %p206
        %p592 = pneg %p203
        %p593 = pneg %p227
        %p594 = pneg %p224
        %p595 = pneg %p248
        %p596 = pneg %p245
        %p597 = pneg %p269
        %p598 = pneg %p266
        %p599 = pneg %p290
        %p600 = pneg %p287
        %p601 = pneg %p318
        %p602 = pneg %p315
        %s603 = sand.u32 %s305, 1
        %s604 = scalar_lea.sflag [#allocation7], %s603
        %s605 = sand.u32 %s305, 1
        %s606 = smul.addr %s605, 64
        %s607 = scalar_lea.vmem [#allocation23], %s606
        %s608 = smul.u32 8, %s40
        %s609 = smul.u32 8, %s40
        %p611 = scmp.eq.s32.totalorder %s40, 0
        // Predicated region
        $region109: #{tpu_custom_call.1} parent=63 // pred_check
          %p612 = pneg %p611
        $region110: #{tpu_custom_call.1} parent=63 // pred_check_branch
          %614 = sbr.rel (%p612) target = $region112
        $region111: #{tpu_custom_call.1} parent=63 // pred_region
          %v615 = vld [vmem:[%s518] sm:$0xf]
          %v616 = vld [vmem:[%s518 + $0x4] sm:$0xf]
          %v617 = vld [vmem:[%s518 + $0x8] sm:$0xf]
          %v618 = vld [vmem:[%s518 + $0xc] sm:$0xf]
          %v619 = vld [vmem:[%s518 + $0x10] sm:$0xf]
          %v620 = vld [vmem:[%s518 + $0x14] sm:$0xf]
          %v621 = vld [vmem:[%s518 + $0x18] sm:$0xf]
          %v622 = vld [vmem:[%s518 + $0x1c] sm:$0xf]
          %v623 = vld [vmem:[%s518 + $0x20] sm:$0xf]
          %v624 = vld [vmem:[%s518 + $0x24] sm:$0xf]
          %v625 = vld [vmem:[%s518 + $0x28] sm:$0xf]
          %v626 = vld [vmem:[%s518 + $0x2c] sm:$0xf]
          %v627 = vld [vmem:[%s518 + $0x30] sm:$0xf]
          %v628 = vld [vmem:[%s518 + $0x34] sm:$0xf]
          %v629 = vld [vmem:[%s518 + $0x38] sm:$0xf]
          %v630 = vld [vmem:[%s518 + $0x3c] sm:$0xf]
          %v631 = vld [vmem:[#allocation13] sm:$0xf]
          %v632 = vld [vmem:[#allocation13 + $0x4] sm:$0xf]
          %v633 = vld [vmem:[#allocation13 + $0x8] sm:$0xf]
          %v634 = vld [vmem:[#allocation13 + $0xc] sm:$0xf]
          %v635 = vld [vmem:[#allocation13 + $0x10] sm:$0xf]
          %v636 = vld [vmem:[#allocation13 + $0x14] sm:$0xf]
          %v637 = vld [vmem:[#allocation13 + $0x18] sm:$0xf]
          %v638 = vld [vmem:[#allocation13 + $0x1c] sm:$0xf]
          %v639 = vld [vmem:[#allocation13 + $0x20] sm:$0xf]
          %v640 = vld [vmem:[#allocation13 + $0x24] sm:$0xf]
          %v641 = vld [vmem:[#allocation13 + $0x28] sm:$0xf]
          %v642 = vld [vmem:[#allocation13 + $0x2c] sm:$0xf]
          %v643 = vld [vmem:[#allocation13 + $0x30] sm:$0xf]
          %v644 = vld [vmem:[#allocation13 + $0x34] sm:$0xf]
          %v645 = vld [vmem:[#allocation13 + $0x38] sm:$0xf]
          %v646 = vld [vmem:[#allocation13 + $0x3c] sm:$0xf]
          %v647 = vld [vmem:[#allocation19] sm:$0x1]
          %v649 = vlaneseq
          %v650 = vshrl.u32 %v649, 7
          %v651 = vsub.s32 0, %v650
          %v652 = vrot.slane %v647, %v651
          %v670 = vunpack.c.l.b16 %v615
          %v671 = vunpack.c.l.b16 %v616
          %v672 = vunpack.c.l.b16 %v617
          %v673 = vunpack.c.l.b16 %v618
          %v674 = vunpack.c.l.b16 %v619
          %v675 = vunpack.c.l.b16 %v620
          %v676 = vunpack.c.l.b16 %v621
          %v677 = vunpack.c.l.b16 %v622
          %v678 = vunpack.c.l.b16 %v623
          %v679 = vunpack.c.l.b16 %v624
          %v680 = vunpack.c.l.b16 %v625
          %v681 = vunpack.c.l.b16 %v626
          %v682 = vunpack.c.l.b16 %v627
          %v683 = vunpack.c.l.b16 %v628
          %v684 = vunpack.c.l.b16 %v629
          %v685 = vunpack.c.l.b16 %v630
          %v686 = vpack.c.b16 %v671, %v670
          %v687 = vpack.c.b16 %v673, %v672
          %v688 = vpack.c.b16 %v675, %v674
          %v689 = vpack.c.b16 %v677, %v676
          %v690 = vpack.c.b16 %v679, %v678
          %v691 = vpack.c.b16 %v681, %v680
          %v692 = vpack.c.b16 %v683, %v682
          %v693 = vpack.c.b16 %v685, %v684
          %v718 = vunpack.c.l.b16 %v631
          %v719 = vunpack.c.l.b16 %v632
          %v720 = vunpack.c.l.b16 %v633
          %v721 = vunpack.c.l.b16 %v634
          %v722 = vunpack.c.l.b16 %v635
          %v723 = vunpack.c.l.b16 %v636
          %v724 = vunpack.c.l.b16 %v637
          %v725 = vunpack.c.l.b16 %v638
          %v726 = vunpack.c.l.b16 %v639
          %v727 = vunpack.c.l.b16 %v640
          %v728 = vunpack.c.l.b16 %v641
          %v729 = vunpack.c.l.b16 %v642
          %v730 = vunpack.c.l.b16 %v643
          %v731 = vunpack.c.l.b16 %v644
          %v732 = vunpack.c.l.b16 %v645
          %v733 = vunpack.c.l.b16 %v646
          %v734 = vpack.c.b16 %v719, %v718
          %v735 = vpack.c.b16 %v721, %v720
          %v736 = vpack.c.b16 %v723, %v722
          %v737 = vpack.c.b16 %v725, %v724
          %v738 = vpack.c.b16 %v727, %v726
          %v739 = vpack.c.b16 %v729, %v728
          %v740 = vpack.c.b16 %v731, %v730
          %v741 = vpack.c.b16 %v733, %v732
          %750 = vmatprep.subr.bf16.mxu0 0
          %751 = vmatpush1.bf16.msra.mxu0 %v734
          %752 = vmatprep.subr.bf16.mxu0 0
          %753 = vmatpush1.bf16.msra.mxu0 %v735
          %754 = vmatprep.subr.bf16.mxu0 0
          %755 = vmatpush1.bf16.msra.mxu0 %v736
          %756 = vmatprep.subr.bf16.mxu0 0
          %757 = vmatpush1.bf16.msra.mxu0 %v737
          %758 = vmatprep.subr.bf16.mxu0 0
          %759 = vmatpush1.bf16.msra.mxu0 %v738
          %760 = vmatprep.subr.bf16.mxu0 0
          %761 = vmatpush1.bf16.msra.mxu0 %v739
          %762 = vmatprep.subr.bf16.mxu0 0
          %763 = vmatpush1.bf16.msra.mxu0 %v740
          %764 = vmatprep.subr.bf16.mxu0 0
          %765 = vmatpush1.bf16.msra.mxu0 %v741
          %766 = vmatprep.subr.bf16.mxu0 0
          %767 = vmatpush1.bf16.msra.mxu0 0
          %768 = vmatprep.subr.bf16.mxu0 0
          %769 = vmatpush1.bf16.msra.mxu0 0
          %770 = vmatprep.subr.bf16.mxu0 0
          %771 = vmatpush1.bf16.msra.mxu0 0
          %772 = vmatprep.subr.bf16.mxu0 0
          %773 = vmatpush1.bf16.msra.mxu0 0
          %774 = vmatprep.subr.bf16.mxu0 0
          %775 = vmatpush1.bf16.msra.mxu0 0
          %776 = vmatprep.subr.bf16.mxu0 0
          %777 = vmatpush1.bf16.msra.mxu0 0
          %778 = vmatprep.subr.bf16.mxu0 0
          %779 = vmatpush1.bf16.msra.mxu0 0
          %780 = vmatprep.subr.bf16.mxu0 0
          %781 = vmatpush1.bf16.msra.mxu0 0
          %782 = vmatprep.mubr.bf16.mxu0 0
          %783 = vmatmul.mubr.bf16.gmra.mrb[0].mxu0 %v686
          %v784 = vpop.f32.mrb[0].mxu0
          %v785 = vadd.f32 %v652, %v784
          %v786 = vpop.f32.mrb[0].mxu0
          %v787 = vpop.f32.mrb[0].mxu0
          %v788 = vadd.f32 %v652, %v787
          %v789 = vpop.f32.mrb[0].mxu0
          %790 = vmatprep.mubr.bf16.mxu0 0
          %791 = vmatmul.mubr.bf16.gmra.mrb[0].mxu0 %v687
          %v792 = vpop.f32.mrb[0].mxu0
          %v793 = vadd.f32 %v652, %v792
          %v794 = vpop.f32.mrb[0].mxu0
          %v795 = vpop.f32.mrb[0].mxu0
          %v796 = vadd.f32 %v652, %v795
          %v797 = vpop.f32.mrb[0].mxu0
          %798 = vmatprep.mubr.bf16.mxu0 0
          %799 = vmatmul.mubr.bf16.gmra.mrb[0].mxu0 %v688
          %v800 = vpop.f32.mrb[0].mxu0
          %v801 = vadd.f32 %v652, %v800
          %v802 = vpop.f32.mrb[0].mxu0
          %v803 = vpop.f32.mrb[0].mxu0
          %v804 = vadd.f32 %v652, %v803
          %v805 = vpop.f32.mrb[0].mxu0
          %806 = vmatprep.mubr.bf16.mxu0 0
          %807 = vmatmul.mubr.bf16.gmra.mrb[0].mxu0 %v689
          %v808 = vpop.f32.mrb[0].mxu0
          %v809 = vadd.f32 %v652, %v808
          %v810 = vpop.f32.mrb[0].mxu0
          %v811 = vpop.f32.mrb[0].mxu0
          %v812 = vadd.f32 %v652, %v811
          %v813 = vpop.f32.mrb[0].mxu0
          %814 = vmatprep.mubr.bf16.mxu0 0
          %815 = vmatmul.mubr.bf16.gmra.mrb[0].mxu0 %v690
          %v816 = vpop.f32.mrb[0].mxu0
          %v817 = vadd.f32 %v652, %v816
          %v818 = vpop.f32.mrb[0].mxu0
          %v819 = vpop.f32.mrb[0].mxu0
          %v820 = vadd.f32 %v652, %v819
          %v821 = vpop.f32.mrb[0].mxu0
          %822 = vmatprep.mubr.bf16.mxu0 0
          %823 = vmatmul.mubr.bf16.gmra.mrb[0].mxu0 %v691
          %v824 = vpop.f32.mrb[0].mxu0
          %v825 = vadd.f32 %v652, %v824
          %v826 = vpop.f32.mrb[0].mxu0
          %v827 = vpop.f32.mrb[0].mxu0
          %v828 = vadd.f32 %v652, %v827
          %v829 = vpop.f32.mrb[0].mxu0
          %830 = vmatprep.mubr.bf16.mxu0 0
          %831 = vmatmul.mubr.bf16.gmra.mrb[0].mxu0 %v692
          %v832 = vpop.f32.mrb[0].mxu0
          %v833 = vadd.f32 %v652, %v832
          %v834 = vpop.f32.mrb[0].mxu0
          %v835 = vpop.f32.mrb[0].mxu0
          %v836 = vadd.f32 %v652, %v835
          %v837 = vpop.f32.mrb[0].mxu0
          %838 = vmatprep.mubr.bf16.mxu0 0
          %839 = vmatmul.mubr.bf16.gmra.mrb[0].mxu0 %v693
          %v840 = vpop.f32.mrb[0].mxu0
          %v841 = vadd.f32 %v652, %v840
          %v842 = vpop.f32.mrb[0].mxu0
          %v843 = vpop.f32.mrb[0].mxu0
          %v844 = vadd.f32 %v652, %v843
          %v845 = vpop.f32.mrb[0].mxu0
          %846 = vdwg.mxu0
          %v847 = vpack.c.bf16 %v788, %v785
          %v848 = vpack.c.bf16 %v796, %v793
          %v849 = vpack.c.bf16 %v804, %v801
          %v850 = vpack.c.bf16 %v812, %v809
          %v851 = vpack.c.bf16 %v820, %v817
          %v852 = vpack.c.bf16 %v828, %v825
          %v853 = vpack.c.bf16 %v836, %v833
          %v854 = vpack.c.bf16 %v844, %v841
          %855 = vst [vmem:[#allocation2] sm:$0xff] %v847
          %856 = vst [vmem:[#allocation2 + $0x8] sm:$0xff] %v848
          %857 = vst [vmem:[#allocation2 + $0x10] sm:$0xff] %v849
          %858 = vst [vmem:[#allocation2 + $0x18] sm:$0xff] %v850
          %859 = vst [vmem:[#allocation2 + $0x20] sm:$0xff] %v851
          %860 = vst [vmem:[#allocation2 + $0x28] sm:$0xff] %v852
          %861 = vst [vmem:[#allocation2 + $0x30] sm:$0xff] %v853
          %862 = vst [vmem:[#allocation2 + $0x38] sm:$0xff] %v854
          %v863 = vld [vmem:[%s527] sm:$0xf]
          %v864 = vld [vmem:[%s527 + $0x4] sm:$0xf]
          %v865 = vld [vmem:[%s527 + $0x8] sm:$0xf]
          %v866 = vld [vmem:[%s527 + $0xc] sm:$0xf]
          %v867 = vld [vmem:[%s527 + $0x10] sm:$0xf]
          %v868 = vld [vmem:[%s527 + $0x14] sm:$0xf]
          %v869 = vld [vmem:[%s527 + $0x18] sm:$0xf]
          %v870 = vld [vmem:[%s527 + $0x1c] sm:$0xf]
          %v871 = vld [vmem:[%s527 + $0x20] sm:$0xf]
          %v872 = vld [vmem:[%s527 + $0x24] sm:$0xf]
          %v873 = vld [vmem:[%s527 + $0x28] sm:$0xf]
          %v874 = vld [vmem:[%s527 + $0x2c] sm:$0xf]
          %v875 = vld [vmem:[%s527 + $0x30] sm:$0xf]
          %v876 = vld [vmem:[%s527 + $0x34] sm:$0xf]
          %v877 = vld [vmem:[%s527 + $0x38] sm:$0xf]
          %v878 = vld [vmem:[%s527 + $0x3c] sm:$0xf]
          %v879 = vld [vmem:[#allocation14] sm:$0xf]
          %v880 = vld [vmem:[#allocation14 + $0x4] sm:$0xf]
          %v881 = vld [vmem:[#allocation14 + $0x8] sm:$0xf]
          %v882 = vld [vmem:[#allocation14 + $0xc] sm:$0xf]
          %v883 = vld [vmem:[#allocation14 + $0x10] sm:$0xf]
          %v884 = vld [vmem:[#allocation14 + $0x14] sm:$0xf]
          %v885 = vld [vmem:[#allocation14 + $0x18] sm:$0xf]
          %v886 = vld [vmem:[#allocation14 + $0x1c] sm:$0xf]
          %v887 = vld [vmem:[#allocation14 + $0x20] sm:$0xf]
          %v888 = vld [vmem:[#allocation14 + $0x24] sm:$0xf]
          %v889 = vld [vmem:[#allocation14 + $0x28] sm:$0xf]
          %v890 = vld [vmem:[#allocation14 + $0x2c] sm:$0xf]
          %v891 = vld [vmem:[#allocation14 + $0x30] sm:$0xf]
          %v892 = vld [vmem:[#allocation14 + $0x34] sm:$0xf]
          %v893 = vld [vmem:[#allocation14 + $0x38] sm:$0xf]
          %v894 = vld [vmem:[#allocation14 + $0x3c] sm:$0xf]
          %v895 = vld [vmem:[#allocation20] sm:$0x1]
          %v897 = vlaneseq
          %v898 = vshrl.u32 %v897, 7
          %v899 = vsub.s32 0, %v898
          %v900 = vrot.slane %v895, %v899
          %v918 = vunpack.c.l.b16 %v863
          %v919 = vunpack.c.l.b16 %v864
          %v920 = vunpack.c.l.b16 %v865
          %v921 = vunpack.c.l.b16 %v866
          %v922 = vunpack.c.l.b16 %v867
          %v923 = vunpack.c.l.b16 %v868
          %v924 = vunpack.c.l.b16 %v869
          %v925 = vunpack.c.l.b16 %v870
          %v926 = vunpack.c.l.b16 %v871
          %v927 = vunpack.c.l.b16 %v872
          %v928 = vunpack.c.l.b16 %v873
          %v929 = vunpack.c.l.b16 %v874
          %v930 = vunpack.c.l.b16 %v875
          %v931 = vunpack.c.l.b16 %v876
          %v932 = vunpack.c.l.b16 %v877
          %v933 = vunpack.c.l.b16 %v878
          %v934 = vpack.c.b16 %v919, %v918
          %v935 = vpack.c.b16 %v921, %v920
          %v936 = vpack.c.b16 %v923, %v922
          %v937 = vpack.c.b16 %v925, %v924
          %v938 = vpack.c.b16 %v927, %v926
          %v939 = vpack.c.b16 %v929, %v928
          %v940 = vpack.c.b16 %v931, %v930
          %v941 = vpack.c.b16 %v933, %v932
          %v966 = vunpack.c.l.b16 %v879
          %v967 = vunpack.c.l.b16 %v880
          %v968 = vunpack.c.l.b16 %v881
          %v969 = vunpack.c.l.b16 %v882
          %v970 = vunpack.c.l.b16 %v883
          %v971 = vunpack.c.l.b16 %v884
          %v972 = vunpack.c.l.b16 %v885
          %v973 = vunpack.c.l.b16 %v886
          %v974 = vunpack.c.l.b16 %v887
          %v975 = vunpack.c.l.b16 %v888
          %v976 = vunpack.c.l.b16 %v889
          %v977 = vunpack.c.l.b16 %v890
          %v978 = vunpack.c.l.b16 %v891
          %v979 = vunpack.c.l.b16 %v892
          %v980 = vunpack.c.l.b16 %v893
          %v981 = vunpack.c.l.b16 %v894
          %v982 = vpack.c.b16 %v967, %v966
          %v983 = vpack.c.b16 %v969, %v968
          %v984 = vpack.c.b16 %v971, %v970
          %v985 = vpack.c.b16 %v973, %v972
          %v986 = vpack.c.b16 %v975, %v974
          %v987 = vpack.c.b16 %v977, %v976
          %v988 = vpack.c.b16 %v979, %v978
          %v989 = vpack.c.b16 %v981, %v980
          %998 = vmatprep.subr.bf16.mxu0 0
          %999 = vmatpush1.bf16.msra.mxu0 %v982
          %1000 = vmatprep.subr.bf16.mxu0 0
          %1001 = vmatpush1.bf16.msra.mxu0 %v983
          %1002 = vmatprep.subr.bf16.mxu0 0
          %1003 = vmatpush1.bf16.msra.mxu0 %v984
          %1004 = vmatprep.subr.bf16.mxu0 0
          %1005 = vmatpush1.bf16.msra.mxu0 %v985
          %1006 = vmatprep.subr.bf16.mxu0 0
          %1007 = vmatpush1.bf16.msra.mxu0 %v986
          %1008 = vmatprep.subr.bf16.mxu0 0
          %1009 = vmatpush1.bf16.msra.mxu0 %v987
          %1010 = vmatprep.subr.bf16.mxu0 0
          %1011 = vmatpush1.bf16.msra.mxu0 %v988
          %1012 = vmatprep.subr.bf16.mxu0 0
          %1013 = vmatpush1.bf16.msra.mxu0 %v989
          %1014 = vmatprep.subr.bf16.mxu0 0
          %1015 = vmatpush1.bf16.msra.mxu0 0
          %1016 = vmatprep.subr.bf16.mxu0 0
          %1017 = vmatpush1.bf16.msra.mxu0 0
          %1018 = vmatprep.subr.bf16.mxu0 0
          %1019 = vmatpush1.bf16.msra.mxu0 0
          %1020 = vmatprep.subr.bf16.mxu0 0
          %1021 = vmatpush1.bf16.msra.mxu0 0
          %1022 = vmatprep.subr.bf16.mxu0 0
          %1023 = vmatpush1.bf16.msra.mxu0 0
          %1024 = vmatprep.subr.bf16.mxu0 0
          %1025 = vmatpush1.bf16.msra.mxu0 0
          %1026 = vmatprep.subr.bf16.mxu0 0
          %1027 = vmatpush1.bf16.msra.mxu0 0
          %1028 = vmatprep.subr.bf16.mxu0 0
          %1029 = vmatpush1.bf16.msra.mxu0 0
          %1030 = vmatprep.mubr.bf16.mxu0 0
          %1031 = vmatmul.mubr.bf16.gmra.mrb[0].mxu0 %v934
          %v1032 = vpop.f32.mrb[0].mxu0
          %v1033 = vadd.f32 %v900, %v1032
          %v1034 = vpop.f32.mrb[0].mxu0
          %v1035 = vpop.f32.mrb[0].mxu0
          %v1036 = vadd.f32 %v900, %v1035
          %v1037 = vpop.f32.mrb[0].mxu0
          %1038 = vmatprep.mubr.bf16.mxu0 0
          %1039 = vmatmul.mubr.bf16.gmra.mrb[0].mxu0 %v935
          %v1040 = vpop.f32.mrb[0].mxu0
          %v1041 = vadd.f32 %v900, %v1040
          %v1042 = vpop.f32.mrb[0].mxu0
          %v1043 = vpop.f32.mrb[0].mxu0
          %v1044 = vadd.f32 %v900, %v1043
          %v1045 = vpop.f32.mrb[0].mxu0
          %1046 = vmatprep.mubr.bf16.mxu0 0
          %1047 = vmatmul.mubr.bf16.gmra.mrb[0].mxu0 %v936
          %v1048 = vpop.f32.mrb[0].mxu0
          %v1049 = vadd.f32 %v900, %v1048
          %v1050 = vpop.f32.mrb[0].mxu0
          %v1051 = vpop.f32.mrb[0].mxu0
          %v1052 = vadd.f32 %v900, %v1051
          %v1053 = vpop.f32.mrb[0].mxu0
          %1054 = vmatprep.mubr.bf16.mxu0 0
          %1055 = vmatmul.mubr.bf16.gmra.mrb[0].mxu0 %v937
          %v1056 = vpop.f32.mrb[0].mxu0
          %v1057 = vadd.f32 %v900, %v1056
          %v1058 = vpop.f32.mrb[0].mxu0
          %v1059 = vpop.f32.mrb[0].mxu0
          %v1060 = vadd.f32 %v900, %v1059
          %v1061 = vpop.f32.mrb[0].mxu0
          %1062 = vmatprep.mubr.bf16.mxu0 0
          %1063 = vmatmul.mubr.bf16.gmra.mrb[0].mxu0 %v938
          %v1064 = vpop.f32.mrb[0].mxu0
          %v1065 = vadd.f32 %v900, %v1064
          %v1066 = vpop.f32.mrb[0].mxu0
          %v1067 = vpop.f32.mrb[0].mxu0
          %v1068 = vadd.f32 %v900, %v1067
          %v1069 = vpop.f32.mrb[0].mxu0
          %1070 = vmatprep.mubr.bf16.mxu0 0
          %1071 = vmatmul.mubr.bf16.gmra.mrb[0].mxu0 %v939
          %v1072 = vpop.f32.mrb[0].mxu0
          %v1073 = vadd.f32 %v900, %v1072
          %v1074 = vpop.f32.mrb[0].mxu0
          %v1075 = vpop.f32.mrb[0].mxu0
          %v1076 = vadd.f32 %v900, %v1075
          %v1077 = vpop.f32.mrb[0].mxu0
          %1078 = vmatprep.mubr.bf16.mxu0 0
          %1079 = vmatmul.mubr.bf16.gmra.mrb[0].mxu0 %v940
          %v1080 = vpop.f32.mrb[0].mxu0
          %v1081 = vadd.f32 %v900, %v1080
          %v1082 = vpop.f32.mrb[0].mxu0
          %v1083 = vpop.f32.mrb[0].mxu0
          %v1084 = vadd.f32 %v900, %v1083
          %v1085 = vpop.f32.mrb[0].mxu0
          %1086 = vmatprep.mubr.bf16.mxu0 0
          %1087 = vmatmul.mubr.bf16.gmra.mrb[0].mxu0 %v941
          %v1088 = vpop.f32.mrb[0].mxu0
          %v1089 = vadd.f32 %v900, %v1088
          %v1090 = vpop.f32.mrb[0].mxu0
          %v1091 = vpop.f32.mrb[0].mxu0
          %v1092 = vadd.f32 %v900, %v1091
          %v1093 = vpop.f32.mrb[0].mxu0
          %1094 = vdwg.mxu0
          %v1095 = vpack.c.bf16 %v1036, %v1033
          %v1096 = vpack.c.bf16 %v1044, %v1041
          %v1097 = vpack.c.bf16 %v1052, %v1049
          %v1098 = vpack.c.bf16 %v1060, %v1057
          %v1099 = vpack.c.bf16 %v1068, %v1065
          %v1100 = vpack.c.bf16 %v1076, %v1073
          %v1101 = vpack.c.bf16 %v1084, %v1081
          %v1102 = vpack.c.bf16 %v1092, %v1089
          %1103 = vst [vmem:[#allocation3] sm:$0xff] %v1095
          %1104 = vst [vmem:[#allocation3 + $0x8] sm:$0xff] %v1096
          %1105 = vst [vmem:[#allocation3 + $0x10] sm:$0xff] %v1097
          %1106 = vst [vmem:[#allocation3 + $0x18] sm:$0xff] %v1098
          %1107 = vst [vmem:[#allocation3 + $0x20] sm:$0xff] %v1099
          %1108 = vst [vmem:[#allocation3 + $0x28] sm:$0xff] %v1100
          %1109 = vst [vmem:[#allocation3 + $0x30] sm:$0xff] %v1101
          %1110 = vst [vmem:[#allocation3 + $0x38] sm:$0xff] %v1102
        $region112: #{tpu_custom_call.1} parent=63 // pred_fallthru
          _
        %v1111 = vld [vmem:[%s509] sm:$0xf]
        %v1112 = vld [vmem:[%s509 + $0x4] sm:$0xf]
        %v1113 = vld [vmem:[%s509 + $0x8] sm:$0xf]
        %v1114 = vld [vmem:[%s509 + $0xc] sm:$0xf]
        %v1115 = vld [vmem:[%s509 + $0x10] sm:$0xf]
        %v1116 = vld [vmem:[%s509 + $0x14] sm:$0xf]
        %v1117 = vld [vmem:[%s509 + $0x18] sm:$0xf]
        %v1118 = vld [vmem:[%s509 + $0x1c] sm:$0xf]
        %v1119 = vld [vmem:[#allocation11] sm:$0xf]
        %v1120 = vld [vmem:[#allocation11 + $0x4] sm:$0xf]
        %v1121 = vld [vmem:[#allocation11 + $0x8] sm:$0xf]
        %v1122 = vld [vmem:[#allocation11 + $0xc] sm:$0xf]
        %v1123 = vld [vmem:[#allocation11 + $0x10] sm:$0xf]
        %v1124 = vld [vmem:[#allocation11 + $0x14] sm:$0xf]
        %v1125 = vld [vmem:[#allocation11 + $0x18] sm:$0xf]
        %v1126 = vld [vmem:[#allocation11 + $0x1c] sm:$0xf]
        %v1127 = vld [vmem:[#allocation11 + $0x20] sm:$0xf]
        %v1128 = vld [vmem:[#allocation11 + $0x24] sm:$0xf]
        %v1129 = vld [vmem:[#allocation11 + $0x28] sm:$0xf]
        %v1130 = vld [vmem:[#allocation11 + $0x2c] sm:$0xf]
        %v1131 = vld [vmem:[#allocation11 + $0x30] sm:$0xf]
        %v1132 = vld [vmem:[#allocation11 + $0x34] sm:$0xf]
        %v1133 = vld [vmem:[#allocation11 + $0x38] sm:$0xf]
        %v1134 = vld [vmem:[#allocation11 + $0x3c] sm:$0xf]
        %v1135 = vld [vmem:[#allocation17] sm:$0x1]
        %v1137 = vlaneseq
        %v1138 = vshrl.u32 %v1137, 7
        %v1139 = vsub.s32 0, %v1138
        %v1140 = vrot.slane %v1135, %v1139
        %v1150 = vunpack.c.l.b16 %v1111
        %v1151 = vunpack.c.l.b16 %v1112
        %v1152 = vunpack.c.l.b16 %v1113
        %v1153 = vunpack.c.l.b16 %v1114
        %v1154 = vunpack.c.l.b16 %v1115
        %v1155 = vunpack.c.l.b16 %v1116
        %v1156 = vunpack.c.l.b16 %v1117
        %v1157 = vunpack.c.l.b16 %v1118
        %v1158 = vpack.c.b16 %v1151, %v1150
        %v1159 = vpack.c.b16 %v1153, %v1152
        %v1160 = vpack.c.b16 %v1155, %v1154
        %v1161 = vpack.c.b16 %v1157, %v1156
        %v1182 = vunpack.c.l.b16 %v1119
        %v1183 = vunpack.c.l.b16 %v1120
        %v1184 = vunpack.c.l.b16 %v1121
        %v1185 = vunpack.c.l.b16 %v1122
        %v1186 = vunpack.c.l.b16 %v1123
        %v1187 = vunpack.c.l.b16 %v1124
        %v1188 = vunpack.c.l.b16 %v1125
        %v1189 = vunpack.c.l.b16 %v1126
        %v1190 = vunpack.c.l.b16 %v1127
        %v1191 = vunpack.c.l.b16 %v1128
        %v1192 = vunpack.c.l.b16 %v1129
        %v1193 = vunpack.c.l.b16 %v1130
        %v1194 = vunpack.c.l.b16 %v1131
        %v1195 = vunpack.c.l.b16 %v1132
        %v1196 = vunpack.c.l.b16 %v1133
        %v1197 = vunpack.c.l.b16 %v1134
        %v1198 = vpack.c.b16 %v1183, %v1182
        %v1199 = vpack.c.b16 %v1185, %v1184
        %v1200 = vpack.c.b16 %v1187, %v1186
        %v1201 = vpack.c.b16 %v1189, %v1188
        %v1202 = vpack.c.b16 %v1191, %v1190
        %v1203 = vpack.c.b16 %v1193, %v1192
        %v1204 = vpack.c.b16 %v1195, %v1194
        %v1205 = vpack.c.b16 %v1197, %v1196
        %1214 = vmatprep.subr.bf16.mxu0 0
        %1215 = vmatpush1.bf16.msra.mxu0 %v1198
        %1216 = vmatprep.subr.bf16.mxu0 0
        %1217 = vmatpush1.bf16.msra.mxu0 %v1199
        %1218 = vmatprep.subr.bf16.mxu0 0
        %1219 = vmatpush1.bf16.msra.mxu0 %v1200
        %1220 = vmatprep.subr.bf16.mxu0 0
        %1221 = vmatpush1.bf16.msra.mxu0 %v1201
        %1222 = vmatprep.subr.bf16.mxu0 0
        %1223 = vmatpush1.bf16.msra.mxu0 %v1202
        %1224 = vmatprep.subr.bf16.mxu0 0
        %1225 = vmatpush1.bf16.msra.mxu0 %v1203
        %1226 = vmatprep.subr.bf16.mxu0 0
        %1227 = vmatpush1.bf16.msra.mxu0 %v1204
        %1228 = vmatprep.subr.bf16.mxu0 0
        %1229 = vmatpush1.bf16.msra.mxu0 %v1205
        %1230 = vmatprep.subr.bf16.mxu0 0
        %1231 = vmatpush1.bf16.msra.mxu0 0
        %1232 = vmatprep.subr.bf16.mxu0 0
        %1233 = vmatpush1.bf16.msra.mxu0 0
        %1234 = vmatprep.subr.bf16.mxu0 0
        %1235 = vmatpush1.bf16.msra.mxu0 0
        %1236 = vmatprep.subr.bf16.mxu0 0
        %1237 = vmatpush1.bf16.msra.mxu0 0
        %1238 = vmatprep.subr.bf16.mxu0 0
        %1239 = vmatpush1.bf16.msra.mxu0 0
        %1240 = vmatprep.subr.bf16.mxu0 0
        %1241 = vmatpush1.bf16.msra.mxu0 0
        %1242 = vmatprep.subr.bf16.mxu0 0
        %1243 = vmatpush1.bf16.msra.mxu0 0
        %1244 = vmatprep.subr.bf16.mxu0 0
        %1245 = vmatpush1.bf16.msra.mxu0 0
        %1246 = vmatprep.mubr.bf16.mxu0 0
        %1247 = vmatmul.mubr.bf16.gmra.mrb[0].mxu0 %v1158
        %v1248 = vpop.f32.mrb[0].mxu0
        %v1249 = vadd.f32 %v1140, %v1248
        %v1250 = vpop.f32.mrb[0].mxu0
        %v1251 = vpop.f32.mrb[0].mxu0
        %v1252 = vadd.f32 %v1140, %v1251
        %v1253 = vpop.f32.mrb[0].mxu0
        %1254 = vmatprep.mubr.bf16.mxu0 0
        %1255 = vmatmul.mubr.bf16.gmra.mrb[0].mxu0 %v1159
        %v1256 = vpop.f32.mrb[0].mxu0
        %v1257 = vadd.f32 %v1140, %v1256
        %v1258 = vpop.f32.mrb[0].mxu0
        %v1259 = vpop.f32.mrb[0].mxu0
        %v1260 = vadd.f32 %v1140, %v1259
        %v1261 = vpop.f32.mrb[0].mxu0
        %1262 = vmatprep.mubr.bf16.mxu0 0
        %1263 = vmatmul.mubr.bf16.gmra.mrb[0].mxu0 %v1160
        %v1264 = vpop.f32.mrb[0].mxu0
        %v1265 = vadd.f32 %v1140, %v1264
        %v1266 = vpop.f32.mrb[0].mxu0
        %v1267 = vpop.f32.mrb[0].mxu0
        %v1268 = vadd.f32 %v1140, %v1267
        %v1269 = vpop.f32.mrb[0].mxu0
        %1270 = vmatprep.mubr.bf16.mxu0 0
        %1271 = vmatmul.mubr.bf16.gmra.mrb[0].mxu0 %v1161
        %v1272 = vpop.f32.mrb[0].mxu0
        %v1273 = vadd.f32 %v1140, %v1272
        %v1274 = vpop.f32.mrb[0].mxu0
        %v1275 = vpop.f32.mrb[0].mxu0
        %v1276 = vadd.f32 %v1140, %v1275
        %v1277 = vpop.f32.mrb[0].mxu0
        %1278 = vdwg.mxu0
        %v1279 = vmul.f32 %v1249, 0.25
        %v1280 = vmul.f32 %v1252, 0.25
        %v1281 = vmul.f32 %v1257, 0.25
        %v1282 = vmul.f32 %v1260, 0.25
        %v1283 = vmul.f32 %v1265, 0.25
        %v1284 = vmul.f32 %v1268, 0.25
        %v1285 = vmul.f32 %v1273, 0.25
        %v1286 = vmul.f32 %v1276, 0.25
        %v1287 = vpack.c.bf16 %v1280, %v1279
        %v1288 = vpack.c.bf16 %v1282, %v1281
        %v1289 = vpack.c.bf16 %v1284, %v1283
        %v1290 = vpack.c.bf16 %v1286, %v1285
        %v1291 = vld [vmem:[#allocation2] sm:$0xff]
        %v1292 = vld [vmem:[#allocation2 + $0x8] sm:$0xff]
        %v1293 = vld [vmem:[#allocation2 + $0x10] sm:$0xff]
        %v1294 = vld [vmem:[#allocation2 + $0x18] sm:$0xff]
        %v1295 = vld [vmem:[#allocation2 + $0x20] sm:$0xff]
        %v1296 = vld [vmem:[#allocation2 + $0x28] sm:$0xff]
        %v1297 = vld [vmem:[#allocation2 + $0x30] sm:$0xff]
        %v1298 = vld [vmem:[#allocation2 + $0x38] sm:$0xff]
        %v1299 = vld [vmem:[#allocation3] sm:$0xff]
        %v1300 = vld [vmem:[#allocation3 + $0x8] sm:$0xff]
        %v1301 = vld [vmem:[#allocation3 + $0x10] sm:$0xff]
        %v1302 = vld [vmem:[#allocation3 + $0x18] sm:$0xff]
        %v1303 = vld [vmem:[#allocation3 + $0x20] sm:$0xff]
        %v1304 = vld [vmem:[#allocation3 + $0x28] sm:$0xff]
        %v1305 = vld [vmem:[#allocation3 + $0x30] sm:$0xff]
        %v1306 = vld [vmem:[#allocation3 + $0x38] sm:$0xff]
        %vm1307 = vcmask 130048
        %v1309 = vsel %vm1307, %v1287, 0
        %v1312 = vsel %vm1307, %v1288, 0
        %v1315 = vsel %vm1307, %v1289, 0
        %v1318 = vsel %vm1307, %v1290, 0
        %v1321 = vsel %vm1307, %v1291, 0
        %v1324 = vsel %vm1307, %v1292, 0
        %v1327 = vsel %vm1307, %v1293, 0
        %v1330 = vsel %vm1307, %v1294, 0
        %v1333 = vsel %vm1307, %v1295, 0
        %v1336 = vsel %vm1307, %v1296, 0
        %v1339 = vsel %vm1307, %v1297, 0
        %v1342 = vsel %vm1307, %v1298, 0
        %1344 = vmatprep.subr.bf16.mxu0 0
        %1345 = vmatpush1.bf16.xpose.msra.mxu0 %v1321
        %1346 = vmatprep.subr.bf16.mxu0 0
        %1347 = vmatpush1.bf16.xpose.msra.mxu0 %v1324
        %1348 = vmatprep.subr.bf16.mxu0 0
        %1349 = vmatpush1.bf16.xpose.msra.mxu0 %v1327
        %1350 = vmatprep.subr.bf16.mxu0 0
        %1351 = vmatpush1.bf16.xpose.msra.mxu0 %v1330
        %1352 = vmatprep.subr.bf16.mxu0 0
        %1353 = vmatpush1.bf16.xpose.msra.mxu0 %v1333
        %1354 = vmatprep.subr.bf16.mxu0 0
        %1355 = vmatpush1.bf16.xpose.msra.mxu0 %v1336
        %1356 = vmatprep.subr.bf16.mxu0 0
        %1357 = vmatpush1.bf16.xpose.msra.mxu0 %v1339
        %1358 = vmatprep.subr.bf16.mxu0 0
        %1359 = vmatpush1.bf16.xpose.msra.mxu0 %v1342
        %1360 = vmatprep.subr.bf16.mxu0 0
        %1361 = vmatpush1.bf16.xpose.msra.mxu0 0
        %1362 = vmatprep.subr.bf16.mxu0 0
        %1363 = vmatpush1.bf16.xpose.msra.mxu0 0
        %1364 = vmatprep.subr.bf16.mxu0 0
        %1365 = vmatpush1.bf16.xpose.msra.mxu0 0
        %1366 = vmatprep.subr.bf16.mxu0 0
        %1367 = vmatpush1.bf16.xpose.msra.mxu0 0
        %1368 = vmatprep.subr.bf16.mxu0 0
        %1369 = vmatpush1.bf16.xpose.msra.mxu0 0
        %1370 = vmatprep.subr.bf16.mxu0 0
        %1371 = vmatpush1.bf16.xpose.msra.mxu0 0
        %1372 = vmatprep.subr.bf16.mxu0 0
        %1373 = vmatpush1.bf16.xpose.msra.mxu0 0
        %1374 = vmatprep.subr.bf16.mxu0 0
        %1375 = vmatpush1.bf16.xpose.msra.mxu0 0
        %1376 = vmatprep.mubr.bf16.mxu0 0
        %1377 = vmatmul.mubr.bf16.gmra.mrb[0].mxu0 %v1309
        %v1378 = vpop.f32.mrb[0].mxu0
        %v1379 = vadd.f32 0.0, %v1378
        %v1380 = vpop.f32.mrb[0].mxu0
        %v1381 = vpop.f32.mrb[0].mxu0
        %v1382 = vadd.f32 0.0, %v1381
        %v1383 = vpop.f32.mrb[0].mxu0
        %1384 = vmatprep.mubr.bf16.mxu0 0
        %1385 = vmatmul.mubr.bf16.gmra.mrb[0].mxu0 %v1312
        %v1386 = vpop.f32.mrb[0].mxu0
        %v1387 = vadd.f32 0.0, %v1386
        %v1388 = vpop.f32.mrb[0].mxu0
        %v1389 = vpop.f32.mrb[0].mxu0
        %v1390 = vadd.f32 0.0, %v1389
        %v1391 = vpop.f32.mrb[0].mxu0
        %1392 = vmatprep.mubr.bf16.mxu0 0
        %1393 = vmatmul.mubr.bf16.gmra.mrb[0].mxu0 %v1315
        %v1394 = vpop.f32.mrb[0].mxu0
        %v1395 = vadd.f32 0.0, %v1394
        %v1396 = vpop.f32.mrb[0].mxu0
        %v1397 = vpop.f32.mrb[0].mxu0
        %v1398 = vadd.f32 0.0, %v1397
        %v1399 = vpop.f32.mrb[0].mxu0
        %1400 = vmatprep.mubr.bf16.mxu0 0
        %1401 = vmatmul.mubr.bf16.gmra.mrb[0].mxu0 %v1318
        %v1402 = vpop.f32.mrb[0].mxu0
        %v1403 = vadd.f32 0.0, %v1402
        %v1404 = vpop.f32.mrb[0].mxu0
        %v1405 = vpop.f32.mrb[0].mxu0
        %v1406 = vadd.f32 0.0, %v1405
        %v1407 = vpop.f32.mrb[0].mxu0
        %1408 = vdwg.mxu0
        %1409 = vmax.xlane.f32.xlu0 %v1379
        %v1410 = vpop.xlane.xlu0 %1409
        %1411 = vmax.xlane.f32.xlu0 %v1382
        %v1412 = vpop.xlane.xlu0 %1411
        %1413 = vmax.xlane.f32.xlu0 %v1387
        %v1414 = vpop.xlane.xlu0 %1413
        %1415 = vmax.xlane.f32.xlu0 %v1390
        %v1416 = vpop.xlane.xlu0 %1415
        %1417 = vmax.xlane.f32.xlu0 %v1395
        %v1418 = vpop.xlane.xlu0 %1417
        %1419 = vmax.xlane.f32.xlu0 %v1398
        %v1420 = vpop.xlane.xlu0 %1419
        %1421 = vmax.xlane.f32.xlu0 %v1403
        %v1422 = vpop.xlane.xlu0 %1421
        %1423 = vmax.xlane.f32.xlu0 %v1406
        %v1424 = vpop.xlane.xlu0 %1423
        %v1425 = vsub.f32 %v1379, %v1410
        %v1426 = vsub.f32 %v1382, %v1412
        %v1427 = vsub.f32 %v1387, %v1414
        %v1428 = vsub.f32 %v1390, %v1416
        %v1429 = vsub.f32 %v1395, %v1418
        %v1430 = vsub.f32 %v1398, %v1420
        %v1431 = vsub.f32 %v1403, %v1422
        %v1432 = vsub.f32 %v1406, %v1424
        %v1433 = vmul.f32 %v1425, 1.442695
        %v1434 = vpow.pop %v1433
        %v1435 = vmul.f32 %v1426, 1.442695
        %v1436 = vpow.pop %v1435
        %v1437 = vmul.f32 %v1427, 1.442695
        %v1438 = vpow.pop %v1437
        %v1439 = vmul.f32 %v1428, 1.442695
        %v1440 = vpow.pop %v1439
        %v1441 = vmul.f32 %v1429, 1.442695
        %v1442 = vpow.pop %v1441
        %v1443 = vmul.f32 %v1430, 1.442695
        %v1444 = vpow.pop %v1443
        %v1445 = vmul.f32 %v1431, 1.442695
        %v1446 = vpow.pop %v1445
        %v1447 = vmul.f32 %v1432, 1.442695
        %v1448 = vpow.pop %v1447
        %1449 = vadd.xlane.f32.xlu0 %v1434
        %v1450 = vpop.xlane.xlu0 %1449
        %1451 = vadd.xlane.f32.xlu0 %v1436
        %v1452 = vpop.xlane.xlu0 %1451
        %1453 = vadd.xlane.f32.xlu0 %v1438
        %v1454 = vpop.xlane.xlu0 %1453
        %1455 = vadd.xlane.f32.xlu0 %v1440
        %v1456 = vpop.xlane.xlu0 %1455
        %1457 = vadd.xlane.f32.xlu0 %v1442
        %v1458 = vpop.xlane.xlu0 %1457
        %1459 = vadd.xlane.f32.xlu0 %v1444
        %v1460 = vpop.xlane.xlu0 %1459
        %1461 = vadd.xlane.f32.xlu0 %v1446
        %v1462 = vpop.xlane.xlu0 %1461
        %1463 = vadd.xlane.f32.xlu0 %v1448
        %v1464 = vpop.xlane.xlu0 %1463
        %v1465 = vrcp.pop %v1450
        %v1466 = vrcp.pop %v1452
        %v1467 = vrcp.pop %v1454
        %v1468 = vrcp.pop %v1456
        %v1469 = vrcp.pop %v1458
        %v1470 = vrcp.pop %v1460
        %v1471 = vrcp.pop %v1462
        %v1472 = vrcp.pop %v1464
        %v1473 = vmul.f32 %v1434, %v1465
        %v1474 = vmul.f32 %v1436, %v1466
        %v1475 = vmul.f32 %v1438, %v1467
        %v1476 = vmul.f32 %v1440, %v1468
        %v1477 = vmul.f32 %v1442, %v1469
        %v1478 = vmul.f32 %v1444, %v1470
        %v1479 = vmul.f32 %v1446, %v1471
        %v1480 = vmul.f32 %v1448, %v1472
        %v1481 = vpack.c.bf16 %v1474, %v1473
        %v1482 = vpack.c.bf16 %v1476, %v1475
        %v1483 = vpack.c.bf16 %v1478, %v1477
        %v1484 = vpack.c.bf16 %v1480, %v1479
        %1485 = vmatprep.subr.bf16.mxu0 0
        %1486 = vmatpush1.bf16.msra.mxu0 %v1299
        %1487 = vmatprep.subr.bf16.mxu0 0
        %1488 = vmatpush1.bf16.msra.mxu0 %v1300
        %1489 = vmatprep.subr.bf16.mxu0 0
        %1490 = vmatpush1.bf16.msra.mxu0 %v1301
        %1491 = vmatprep.subr.bf16.mxu0 0
        %1492 = vmatpush1.bf16.msra.mxu0 %v1302
        %1493 = vmatprep.subr.bf16.mxu0 0
        %1494 = vmatpush1.bf16.msra.mxu0 %v1303
        %1495 = vmatprep.subr.bf16.mxu0 0
        %1496 = vmatpush1.bf16.msra.mxu0 %v1304
        %1497 = vmatprep.subr.bf16.mxu0 0
        %1498 = vmatpush1.bf16.msra.mxu0 %v1305
        %1499 = vmatprep.subr.bf16.mxu0 0
        %1500 = vmatpush1.bf16.msra.mxu0 %v1306
        %1501 = vmatprep.subr.bf16.mxu0 0
        %1502 = vmatpush1.bf16.msra.mxu0 0
        %1503 = vmatprep.subr.bf16.mxu0 0
        %1504 = vmatpush1.bf16.msra.mxu0 0
        %1505 = vmatprep.subr.bf16.mxu0 0
        %1506 = vmatpush1.bf16.msra.mxu0 0
        %1507 = vmatprep.subr.bf16.mxu0 0
        %1508 = vmatpush1.bf16.msra.mxu0 0
        %1509 = vmatprep.subr.bf16.mxu0 0
        %1510 = vmatpush1.bf16.msra.mxu0 0
        %1511 = vmatprep.subr.bf16.mxu0 0
        %1512 = vmatpush1.bf16.msra.mxu0 0
        %1513 = vmatprep.subr.bf16.mxu0 0
        %1514 = vmatpush1.bf16.msra.mxu0 0
        %1515 = vmatprep.subr.bf16.mxu0 0
        %1516 = vmatpush1.bf16.msra.mxu0 0
        %1517 = vmatprep.mubr.bf16.mxu0 0
        %1518 = vmatmul.mubr.bf16.gmra.mrb[0].mxu0 %v1481
        %v1519 = vpop.f32.mrb[0].mxu0
        %v1520 = vadd.f32 0.0, %v1519
        %v1521 = vpop.f32.mrb[0].mxu0
        %v1522 = vpop.f32.mrb[0].mxu0
        %v1523 = vadd.f32 0.0, %v1522
        %v1524 = vpop.f32.mrb[0].mxu0
        %1525 = vmatprep.mubr.bf16.mxu0 0
        %1526 = vmatmul.mubr.bf16.gmra.mrb[0].mxu0 %v1482
        %v1527 = vpop.f32.mrb[0].mxu0
        %v1528 = vadd.f32 0.0, %v1527
        %v1529 = vpop.f32.mrb[0].mxu0
        %v1530 = vpop.f32.mrb[0].mxu0
        %v1531 = vadd.f32 0.0, %v1530
        %v1532 = vpop.f32.mrb[0].mxu0
        %1533 = vmatprep.mubr.bf16.mxu0 0
        %1534 = vmatmul.mubr.bf16.gmra.mrb[0].mxu0 %v1483
        %v1535 = vpop.f32.mrb[0].mxu0
        %v1536 = vadd.f32 0.0, %v1535
        %v1537 = vpop.f32.mrb[0].mxu0
        %v1538 = vpop.f32.mrb[0].mxu0
        %v1539 = vadd.f32 0.0, %v1538
        %v1540 = vpop.f32.mrb[0].mxu0
        %1541 = vmatprep.mubr.bf16.mxu0 0
        %1542 = vmatmul.mubr.bf16.gmra.mrb[0].mxu0 %v1484
        %v1543 = vpop.f32.mrb[0].mxu0
        %v1544 = vadd.f32 0.0, %v1543
        %v1545 = vpop.f32.mrb[0].mxu0
        %v1546 = vpop.f32.mrb[0].mxu0
        %v1547 = vadd.f32 0.0, %v1546
        %v1548 = vpop.f32.mrb[0].mxu0
        %1549 = vdwg.mxu0
        %v1550 = vpack.c.bf16 %v1523, %v1520
        %v1551 = vpack.c.bf16 %v1531, %v1528
        %v1552 = vpack.c.bf16 %v1539, %v1536
        %v1553 = vpack.c.bf16 %v1547, %v1544
        %1554 = vst.msk [vmem:[#allocation4] sm:$0xff] %vm1307, %v1550
        %1555 = vst.msk [vmem:[#allocation4 + $0x8] sm:$0xff] %vm1307, %v1551
        %1556 = vst.msk [vmem:[#allocation4 + $0x10] sm:$0xff] %vm1307, %v1552
        %1557 = vst.msk [vmem:[#allocation4 + $0x18] sm:$0xff] %vm1307, %v1553
        %1562 = vrot.lane.b32.xlu0 %v1287, 112
        %v1563 = vpop.permute.xlu0 %1562
        %1564 = vrot.lane.b32.xlu0 %v1288, 112
        %v1565 = vpop.permute.xlu0 %1564
        %1566 = vrot.lane.b32.xlu0 %v1289, 112
        %v1567 = vpop.permute.xlu0 %1566
        %1568 = vrot.lane.b32.xlu0 %v1290, 112
        %v1569 = vpop.permute.xlu0 %1568
        %1578 = vrot.lane.b32.xlu0 %v1291, 112
        %v1579 = vpop.permute.xlu0 %1578
        %1580 = vrot.lane.b32.xlu0 %v1292, 112
        %v1581 = vpop.permute.xlu0 %1580
        %1582 = vrot.lane.b32.xlu0 %v1293, 112
        %v1583 = vpop.permute.xlu0 %1582
        %1584 = vrot.lane.b32.xlu0 %v1294, 112
        %v1585 = vpop.permute.xlu0 %1584
        %1586 = vrot.lane.b32.xlu0 %v1295, 112
        %v1587 = vpop.permute.xlu0 %1586
        %1588 = vrot.lane.b32.xlu0 %v1296, 112
        %v1589 = vpop.permute.xlu0 %1588
        %1590 = vrot.lane.b32.xlu0 %v1297, 112
        %v1591 = vpop.permute.xlu0 %1590
        %1592 = vrot.lane.b32.xlu0 %v1298, 112
        %v1593 = vpop.permute.xlu0 %1592
        %v1595 = vsel %vm1307, %v1563, 0
        %v1598 = vsel %vm1307, %v1565, 0
        %v1601 = vsel %vm1307, %v1567, 0
        %v1604 = vsel %vm1307, %v1569, 0
        %v1607 = vsel %vm1307, %v1579, 0
        %v1610 = vsel %vm1307, %v1581, 0
        %v1613 = vsel %vm1307, %v1583, 0
        %v1616 = vsel %vm1307, %v1585, 0
        %v1619 = vsel %vm1307, %v1587, 0
        %v1622 = vsel %vm1307, %v1589, 0
        %v1625 = vsel %vm1307, %v1591, 0
        %v1628 = vsel %vm1307, %v1593, 0
        %1630 = vmatprep.subr.bf16.mxu0 0
        %1631 = vmatpush1.bf16.xpose.msra.mxu0 %v1607
        %1632 = vmatprep.subr.bf16.mxu0 0
        %1633 = vmatpush1.bf16.xpose.msra.mxu0 %v1610
        %1634 = vmatprep.subr.bf16.mxu0 0
        %1635 = vmatpush1.bf16.xpose.msra.mxu0 %v1613
        %1636 = vmatprep.subr.bf16.mxu0 0
        %1637 = vmatpush1.bf16.xpose.msra.mxu0 %v1616
        %1638 = vmatprep.subr.bf16.mxu0 0
        %1639 = vmatpush1.bf16.xpose.msra.mxu0 %v1619
        %1640 = vmatprep.subr.bf16.mxu0 0
        %1641 = vmatpush1.bf16.xpose.msra.mxu0 %v1622
        %1642 = vmatprep.subr.bf16.mxu0 0
        %1643 = vmatpush1.bf16.xpose.msra.mxu0 %v1625
        %1644 = vmatprep.subr.bf16.mxu0 0
        %1645 = vmatpush1.bf16.xpose.msra.mxu0 %v1628
        %1646 = vmatprep.subr.bf16.mxu0 0
        %1647 = vmatpush1.bf16.xpose.msra.mxu0 0
        %1648 = vmatprep.subr.bf16.mxu0 0
        %1649 = vmatpush1.bf16.xpose.msra.mxu0 0
        %1650 = vmatprep.subr.bf16.mxu0 0
        %1651 = vmatpush1.bf16.xpose.msra.mxu0 0
        %1652 = vmatprep.subr.bf16.mxu0 0
        %1653 = vmatpush1.bf16.xpose.msra.mxu0 0
        %1654 = vmatprep.subr.bf16.mxu0 0
        %1655 = vmatpush1.bf16.xpose.msra.mxu0 0
        %1656 = vmatprep.subr.bf16.mxu0 0
        %1657 = vmatpush1.bf16.xpose.msra.mxu0 0
        %1658 = vmatprep.subr.bf16.mxu0 0
        %1659 = vmatpush1.bf16.xpose.msra.mxu0 0
        %1660 = vmatprep.subr.bf16.mxu0 0
        %1661 = vmatpush1.bf16.xpose.msra.mxu0 0
        %1662 = vmatprep.mubr.bf16.mxu0 0
        %1663 = vmatmul.mubr.bf16.gmra.mrb[0].mxu0 %v1595
        %v1664 = vpop.f32.mrb[0].mxu0
        %v1665 = vadd.f32 0.0, %v1664
        %v1666 = vpop.f32.mrb[0].mxu0
        %v1667 = vpop.f32.mrb[0].mxu0
        %v1668 = vadd.f32 0.0, %v1667
        %v1669 = vpop.f32.mrb[0].mxu0
        %1670 = vmatprep.mubr.bf16.mxu0 0
        %1671 = vmatmul.mubr.bf16.gmra.mrb[0].mxu0 %v1598
        %v1672 = vpop.f32.mrb[0].mxu0
        %v1673 = vadd.f32 0.0, %v1672
        %v1674 = vpop.f32.mrb[0].mxu0
        %v1675 = vpop.f32.mrb[0].mxu0
        %v1676 = vadd.f32 0.0, %v1675
        %v1677 = vpop.f32.mrb[0].mxu0
        %1678 = vmatprep.mubr.bf16.mxu0 0
        %1679 = vmatmul.mubr.bf16.gmra.mrb[0].mxu0 %v1601
        %v1680 = vpop.f32.mrb[0].mxu0
        %v1681 = vadd.f32 0.0, %v1680
        %v1682 = vpop.f32.mrb[0].mxu0
        %v1683 = vpop.f32.mrb[0].mxu0
        %v1684 = vadd.f32 0.0, %v1683
        %v1685 = vpop.f32.mrb[0].mxu0
        %1686 = vmatprep.mubr.bf16.mxu0 0
        %1687 = vmatmul.mubr.bf16.gmra.mrb[0].mxu0 %v1604
        %v1688 = vpop.f32.mrb[0].mxu0
        %v1689 = vadd.f32 0.0, %v1688
        %v1690 = vpop.f32.mrb[0].mxu0
        %v1691 = vpop.f32.mrb[0].mxu0
        %v1692 = vadd.f32 0.0, %v1691
        %v1693 = vpop.f32.mrb[0].mxu0
        %1694 = vdwg.mxu0
        %1695 = vmax.xlane.f32.xlu0 %v1665
        %v1696 = vpop.xlane.xlu0 %1695
        %1697 = vmax.xlane.f32.xlu0 %v1668
        %v1698 = vpop.xlane.xlu0 %1697
        %1699 = vmax.xlane.f32.xlu0 %v1673
        %v1700 = vpop.xlane.xlu0 %1699
        %1701 = vmax.xlane.f32.xlu0 %v1676
        %v1702 = vpop.xlane.xlu0 %1701
        %1703 = vmax.xlane.f32.xlu0 %v1681
        %v1704 = vpop.xlane.xlu0 %1703
        %1705 = vmax.xlane.f32.xlu0 %v1684
        %v1706 = vpop.xlane.xlu0 %1705
        %1707 = vmax.xlane.f32.xlu0 %v1689
        %v1708 = vpop.xlane.xlu0 %1707
        %1709 = vmax.xlane.f32.xlu0 %v1692
        %v1710 = vpop.xlane.xlu0 %1709
        %v1711 = vsub.f32 %v1665, %v1696
        %v1712 = vsub.f32 %v1668, %v1698
        %v1713 = vsub.f32 %v1673, %v1700
        %v1714 = vsub.f32 %v1676, %v1702
        %v1715 = vsub.f32 %v1681, %v1704
        %v1716 = vsub.f32 %v1684, %v1706
        %v1717 = vsub.f32 %v1689, %v1708
        %v1718 = vsub.f32 %v1692, %v1710
        %v1719 = vmul.f32 %v1711, 1.442695
        %v1720 = vpow.pop %v1719
        %v1721 = vmul.f32 %v1712, 1.442695
        %v1722 = vpow.pop %v1721
        %v1723 = vmul.f32 %v1713, 1.442695
        %v1724 = vpow.pop %v1723
        %v1725 = vmul.f32 %v1714, 1.442695
        %v1726 = vpow.pop %v1725
        %v1727 = vmul.f32 %v1715, 1.442695
        %v1728 = vpow.pop %v1727
        %v1729 = vmul.f32 %v1716, 1.442695
        %v1730 = vpow.pop %v1729
        %v1731 = vmul.f32 %v1717, 1.442695
        %v1732 = vpow.pop %v1731
        %v1733 = vmul.f32 %v1718, 1.442695
        %v1734 = vpow.pop %v1733
        %1735 = vadd.xlane.f32.xlu0 %v1720
        %v1736 = vpop.xlane.xlu0 %1735
        %1737 = vadd.xlane.f32.xlu0 %v1722
        %v1738 = vpop.xlane.xlu0 %1737
        %1739 = vadd.xlane.f32.xlu0 %v1724
        %v1740 = vpop.xlane.xlu0 %1739
        %1741 = vadd.xlane.f32.xlu0 %v1726
        %v1742 = vpop.xlane.xlu0 %1741
        %1743 = vadd.xlane.f32.xlu0 %v1728
        %v1744 = vpop.xlane.xlu0 %1743
        %1745 = vadd.xlane.f32.xlu0 %v1730
        %v1746 = vpop.xlane.xlu0 %1745
        %1747 = vadd.xlane.f32.xlu0 %v1732
        %v1748 = vpop.xlane.xlu0 %1747
        %1749 = vadd.xlane.f32.xlu0 %v1734
        %v1750 = vpop.xlane.xlu0 %1749
        %v1751 = vrcp.pop %v1736
        %v1752 = vrcp.pop %v1738
        %v1753 = vrcp.pop %v1740
        %v1754 = vrcp.pop %v1742
        %v1755 = vrcp.pop %v1744
        %v1756 = vrcp.pop %v1746
        %v1757 = vrcp.pop %v1748
        %v1758 = vrcp.pop %v1750
        %v1759 = vmul.f32 %v1720, %v1751
        %v1760 = vmul.f32 %v1722, %v1752
        %v1761 = vmul.f32 %v1724, %v1753
        %v1762 = vmul.f32 %v1726, %v1754
        %v1763 = vmul.f32 %v1728, %v1755
        %v1764 = vmul.f32 %v1730, %v1756
        %v1765 = vmul.f32 %v1732, %v1757
        %v1766 = vmul.f32 %v1734, %v1758
        %v1767 = vpack.c.bf16 %v1760, %v1759
        %v1768 = vpack.c.bf16 %v1762, %v1761
        %v1769 = vpack.c.bf16 %v1764, %v1763
        %v1770 = vpack.c.bf16 %v1766, %v1765
        %1779 = vrot.lane.b32.xlu0 %v1299, 112
        %v1780 = vpop.permute.xlu0 %1779
        %1781 = vrot.lane.b32.xlu0 %v1300, 112
        %v1782 = vpop.permute.xlu0 %1781
        %1783 = vrot.lane.b32.xlu0 %v1301, 112
        %v1784 = vpop.permute.xlu0 %1783
        %1785 = vrot.lane.b32.xlu0 %v1302, 112
        %v1786 = vpop.permute.xlu0 %1785
        %1787 = vrot.lane.b32.xlu0 %v1303, 112
        %v1788 = vpop.permute.xlu0 %1787
        %1789 = vrot.lane.b32.xlu0 %v1304, 112
        %v1790 = vpop.permute.xlu0 %1789
        %1791 = vrot.lane.b32.xlu0 %v1305, 112
        %v1792 = vpop.permute.xlu0 %1791
        %1793 = vrot.lane.b32.xlu0 %v1306, 112
        %v1794 = vpop.permute.xlu0 %1793
        %1803 = vmatprep.subr.bf16.mxu0 0
        %1804 = vmatpush1.bf16.msra.mxu0 %v1780
        %1805 = vmatprep.subr.bf16.mxu0 0
        %1806 = vmatpush1.bf16.msra.mxu0 %v1782
        %1807 = vmatprep.subr.bf16.mxu0 0
        %1808 = vmatpush1.bf16.msra.mxu0 %v1784
        %1809 = vmatprep.subr.bf16.mxu0 0
        %1810 = vmatpush1.bf16.msra.mxu0 %v1786
        %1811 = vmatprep.subr.bf16.mxu0 0
        %1812 = vmatpush1.bf16.msra.mxu0 %v1788
        %1813 = vmatprep.subr.bf16.mxu0 0
        %1814 = vmatpush1.bf16.msra.mxu0 %v1790
        %1815 = vmatprep.subr.bf16.mxu0 0
        %1816 = vmatpush1.bf16.msra.mxu0 %v1792
        %1817 = vmatprep.subr.bf16.mxu0 0
        %1818 = vmatpush1.bf16.msra.mxu0 %v1794
        %1819 = vmatprep.subr.bf16.mxu0 0
        %1820 = vmatpush1.bf16.msra.mxu0 0
        %1821 = vmatprep.subr.bf16.mxu0 0
        %1822 = vmatpush1.bf16.msra.mxu0 0
        %1823 = vmatprep.subr.bf16.mxu0 0
        %1824 = vmatpush1.bf16.msra.mxu0 0
        %1825 = vmatprep.subr.bf16.mxu0 0
        %1826 = vmatpush1.bf16.msra.mxu0 0
        %1827 = vmatprep.subr.bf16.mxu0 0
        %1828 = vmatpush1.bf16.msra.mxu0 0
        %1829 = vmatprep.subr.bf16.mxu0 0
        %1830 = vmatpush1.bf16.msra.mxu0 0
        %1831 = vmatprep.subr.bf16.mxu0 0
        %1832 = vmatpush1.bf16.msra.mxu0 0
        %1833 = vmatprep.subr.bf16.mxu0 0
        %1834 = vmatpush1.bf16.msra.mxu0 0
        %1835 = vmatprep.mubr.bf16.mxu0 0
        %1836 = vmatmul.mubr.bf16.gmra.mrb[0].mxu0 %v1767
        %v1837 = vpop.f32.mrb[0].mxu0
        %v1838 = vadd.f32 0.0, %v1837
        %v1839 = vpop.f32.mrb[0].mxu0
        %v1840 = vpop.f32.mrb[0].mxu0
        %v1841 = vadd.f32 0.0, %v1840
        %v1842 = vpop.f32.mrb[0].mxu0
        %1843 = vmatprep.mubr.bf16.mxu0 0
        %1844 = vmatmul.mubr.bf16.gmra.mrb[0].mxu0 %v1768
        %v1845 = vpop.f32.mrb[0].mxu0
        %v1846 = vadd.f32 0.0, %v1845
        %v1847 = vpop.f32.mrb[0].mxu0
        %v1848 = vpop.f32.mrb[0].mxu0
        %v1849 = vadd.f32 0.0, %v1848
        %v1850 = vpop.f32.mrb[0].mxu0
        %1851 = vmatprep.mubr.bf16.mxu0 0
        %1852 = vmatmul.mubr.bf16.gmra.mrb[0].mxu0 %v1769
        %v1853 = vpop.f32.mrb[0].mxu0
        %v1854 = vadd.f32 0.0, %v1853
        %v1855 = vpop.f32.mrb[0].mxu0
        %v1856 = vpop.f32.mrb[0].mxu0
        %v1857 = vadd.f32 0.0, %v1856
        %v1858 = vpop.f32.mrb[0].mxu0
        %1859 = vmatprep.mubr.bf16.mxu0 0
        %1860 = vmatmul.mubr.bf16.gmra.mrb[0].mxu0 %v1770
        %v1861 = vpop.f32.mrb[0].mxu0
        %v1862 = vadd.f32 0.0, %v1861
        %v1863 = vpop.f32.mrb[0].mxu0
        %v1864 = vpop.f32.mrb[0].mxu0
        %v1865 = vadd.f32 0.0, %v1864
        %v1866 = vpop.f32.mrb[0].mxu0
        %1867 = vdwg.mxu0
        %v1868 = vpack.c.bf16 %v1841, %v1838
        %v1869 = vpack.c.bf16 %v1849, %v1846
        %v1870 = vpack.c.bf16 %v1857, %v1854
        %v1871 = vpack.c.bf16 %v1865, %v1862
        %1876 = vrot.lane.b32.xlu0 %v1868, 16
        %v1877 = vpop.permute.xlu0 %1876
        %1878 = vrot.lane.b32.xlu0 %v1869, 16
        %v1879 = vpop.permute.xlu0 %1878
        %1880 = vrot.lane.b32.xlu0 %v1870, 16
        %v1881 = vpop.permute.xlu0 %1880
        %1882 = vrot.lane.b32.xlu0 %v1871, 16
        %v1883 = vpop.permute.xlu0 %1882
        %vm1888 = vcmask 261248
        %1889 = vst.msk [vmem:[#allocation4] sm:$0xff] %vm1888, %v1877
        %1890 = vst.msk [vmem:[#allocation4 + $0x8] sm:$0xff] %vm1888, %v1879
        %1891 = vst.msk [vmem:[#allocation4 + $0x10] sm:$0xff] %vm1888, %v1881
        %1892 = vst.msk [vmem:[#allocation4 + $0x18] sm:$0xff] %vm1888, %v1883
        %1893 = vrot.lane.b32.xlu0 %v1287, 96
        %v1894 = vpop.permute.xlu0 %1893
        %1895 = vrot.lane.b32.xlu0 %v1288, 96
        %v1896 = vpop.permute.xlu0 %1895
        %1897 = vrot.lane.b32.xlu0 %v1289, 96
        %v1898 = vpop.permute.xlu0 %1897
        %1899 = vrot.lane.b32.xlu0 %v1290, 96
        %v1900 = vpop.permute.xlu0 %1899
        %1901 = vrot.lane.b32.xlu0 %v1291, 96
        %v1902 = vpop.permute.xlu0 %1901
        %1903 = vrot.lane.b32.xlu0 %v1292, 96
        %v1904 = vpop.permute.xlu0 %1903
        %1905 = vrot.lane.b32.xlu0 %v1293, 96
        %v1906 = vpop.permute.xlu0 %1905
        %1907 = vrot.lane.b32.xlu0 %v1294, 96
        %v1908 = vpop.permute.xlu0 %1907
        %1909 = vrot.lane.b32.xlu0 %v1295, 96
        %v1910 = vpop.permute.xlu0 %1909
        %1911 = vrot.lane.b32.xlu0 %v1296, 96
        %v1912 = vpop.permute.xlu0 %1911
        %1913 = vrot.lane.b32.xlu0 %v1297, 96
        %v1914 = vpop.permute.xlu0 %1913
        %1915 = vrot.lane.b32.xlu0 %v1298, 96
        %v1916 = vpop.permute.xlu0 %1915
        %v1918 = vsel %vm1307, %v1894, 0
        %v1921 = vsel %vm1307, %v1896, 0
        %v1924 = vsel %vm1307, %v1898, 0
        %v1927 = vsel %vm1307, %v1900, 0
        %v1930 = vsel %vm1307, %v1902, 0
        %v1933 = vsel %vm1307, %v1904, 0
        %v1936 = vsel %vm1307, %v1906, 0
        %v1939 = vsel %vm1307, %v1908, 0
        %v1942 = vsel %vm1307, %v1910, 0
        %v1945 = vsel %vm1307, %v1912, 0
        %v1948 = vsel %vm1307, %v1914, 0
        %v1951 = vsel %vm1307, %v1916, 0
        %1953 = vmatprep.subr.bf16.mxu0 0
        %1954 = vmatpush1.bf16.xpose.msra.mxu0 %v1930
        %1955 = vmatprep.subr.bf16.mxu0 0
        %1956 = vmatpush1.bf16.xpose.msra.mxu0 %v1933
        %1957 = vmatprep.subr.bf16.mxu0 0
        %1958 = vmatpush1.bf16.xpose.msra.mxu0 %v1936
        %1959 = vmatprep.subr.bf16.mxu0 0
        %1960 = vmatpush1.bf16.xpose.msra.mxu0 %v1939
        %1961 = vmatprep.subr.bf16.mxu0 0
        %1962 = vmatpush1.bf16.xpose.msra.mxu0 %v1942
        %1963 = vmatprep.subr.bf16.mxu0 0
        %1964 = vmatpush1.bf16.xpose.msra.mxu0 %v1945
        %1965 = vmatprep.subr.bf16.mxu0 0
        %1966 = vmatpush1.bf16.xpose.msra.mxu0 %v1948
        %1967 = vmatprep.subr.bf16.mxu0 0
        %1968 = vmatpush1.bf16.xpose.msra.mxu0 %v1951
        %1969 = vmatprep.subr.bf16.mxu0 0
        %1970 = vmatpush1.bf16.xpose.msra.mxu0 0
        %1971 = vmatprep.subr.bf16.mxu0 0
        %1972 = vmatpush1.bf16.xpose.msra.mxu0 0
        %1973 = vmatprep.subr.bf16.mxu0 0
        %1974 = vmatpush1.bf16.xpose.msra.mxu0 0
        %1975 = vmatprep.subr.bf16.mxu0 0
        %1976 = vmatpush1.bf16.xpose.msra.mxu0 0
        %1977 = vmatprep.subr.bf16.mxu0 0
        %1978 = vmatpush1.bf16.xpose.msra.mxu0 0
        %1979 = vmatprep.subr.bf16.mxu0 0
        %1980 = vmatpush1.bf16.xpose.msra.mxu0 0
        %1981 = vmatprep.subr.bf16.mxu0 0
        %1982 = vmatpush1.bf16.xpose.msra.mxu0 0
        %1983 = vmatprep.subr.bf16.mxu0 0
        %1984 = vmatpush1.bf16.xpose.msra.mxu0 0
        %1985 = vmatprep.mubr.bf16.mxu0 0
        %1986 = vmatmul.mubr.bf16.gmra.mrb[0].mxu0 %v1918
        %v1987 = vpop.f32.mrb[0].mxu0
        %v1988 = vadd.f32 0.0, %v1987
        %v1989 = vpop.f32.mrb[0].mxu0
        %v1990 = vpop.f32.mrb[0].mxu0
        %v1991 = vadd.f32 0.0, %v1990
        %v1992 = vpop.f32.mrb[0].mxu0
        %1993 = vmatprep.mubr.bf16.mxu0 0
        %1994 = vmatmul.mubr.bf16.gmra.mrb[0].mxu0 %v1921
        %v1995 = vpop.f32.mrb[0].mxu0
        %v1996 = vadd.f32 0.0, %v1995
        %v1997 = vpop.f32.mrb[0].mxu0
        %v1998 = vpop.f32.mrb[0].mxu0
        %v1999 = vadd.f32 0.0, %v1998
        %v2000 = vpop.f32.mrb[0].mxu0
        %2001 = vmatprep.mubr.bf16.mxu0 0
        %2002 = vmatmul.mubr.bf16.gmra.mrb[0].mxu0 %v1924
        %v2003 = vpop.f32.mrb[0].mxu0
        %v2004 = vadd.f32 0.0, %v2003
        %v2005 = vpop.f32.mrb[0].mxu0
        %v2006 = vpop.f32.mrb[0].mxu0
        %v2007 = vadd.f32 0.0, %v2006
        %v2008 = vpop.f32.mrb[0].mxu0
        %2009 = vmatprep.mubr.bf16.mxu0 0
        %2010 = vmatmul.mubr.bf16.gmra.mrb[0].mxu0 %v1927
        %v2011 = vpop.f32.mrb[0].mxu0
        %v2012 = vadd.f32 0.0, %v2011
        %v2013 = vpop.f32.mrb[0].mxu0
        %v2014 = vpop.f32.mrb[0].mxu0
        %v2015 = vadd.f32 0.0, %v2014
        %v2016 = vpop.f32.mrb[0].mxu0
        %2017 = vdwg.mxu0
        %2018 = vmax.xlane.f32.xlu0 %v1988
        %v2019 = vpop.xlane.xlu0 %2018
        %2020 = vmax.xlane.f32.xlu0 %v1991
        %v2021 = vpop.xlane.xlu0 %2020
        %2022 = vmax.xlane.f32.xlu0 %v1996
        %v2023 = vpop.xlane.xlu0 %2022
        %2024 = vmax.xlane.f32.xlu0 %v1999
        %v2025 = vpop.xlane.xlu0 %2024
        %2026 = vmax.xlane.f32.xlu0 %v2004
        %v2027 = vpop.xlane.xlu0 %2026
        %2028 = vmax.xlane.f32.xlu0 %v2007
        %v2029 = vpop.xlane.xlu0 %2028
        %2030 = vmax.xlane.f32.xlu0 %v2012
        %v2031 = vpop.xlane.xlu0 %2030
        %2032 = vmax.xlane.f32.xlu0 %v2015
        %v2033 = vpop.xlane.xlu0 %2032
        %v2034 = vsub.f32 %v1988, %v2019
        %v2035 = vsub.f32 %v1991, %v2021
        %v2036 = vsub.f32 %v1996, %v2023
        %v2037 = vsub.f32 %v1999, %v2025
        %v2038 = vsub.f32 %v2004, %v2027
        %v2039 = vsub.f32 %v2007, %v2029
        %v2040 = vsub.f32 %v2012, %v2031
        %v2041 = vsub.f32 %v2015, %v2033
        %v2042 = vmul.f32 %v2034, 1.442695
        %v2043 = vpow.pop %v2042
        %v2044 = vmul.f32 %v2035, 1.442695
        %v2045 = vpow.pop %v2044
        %v2046 = vmul.f32 %v2036, 1.442695
        %v2047 = vpow.pop %v2046
        %v2048 = vmul.f32 %v2037, 1.442695
        %v2049 = vpow.pop %v2048
        %v2050 = vmul.f32 %v2038, 1.442695
        %v2051 = vpow.pop %v2050
        %v2052 = vmul.f32 %v2039, 1.442695
        %v2053 = vpow.pop %v2052
        %v2054 = vmul.f32 %v2040, 1.442695
        %v2055 = vpow.pop %v2054
        %v2056 = vmul.f32 %v2041, 1.442695
        %v2057 = vpow.pop %v2056
        %2058 = vadd.xlane.f32.xlu0 %v2043
        %v2059 = vpop.xlane.xlu0 %2058
        %2060 = vadd.xlane.f32.xlu0 %v2045
        %v2061 = vpop.xlane.xlu0 %2060
        %2062 = vadd.xlane.f32.xlu0 %v2047
        %v2063 = vpop.xlane.xlu0 %2062
        %2064 = vadd.xlane.f32.xlu0 %v2049
        %v2065 = vpop.xlane.xlu0 %2064
        %2066 = vadd.xlane.f32.xlu0 %v2051
        %v2067 = vpop.xlane.xlu0 %2066
        %2068 = vadd.xlane.f32.xlu0 %v2053
        %v2069 = vpop.xlane.xlu0 %2068
        %2070 = vadd.xlane.f32.xlu0 %v2055
        %v2071 = vpop.xlane.xlu0 %2070
        %2072 = vadd.xlane.f32.xlu0 %v2057
        %v2073 = vpop.xlane.xlu0 %2072
        %v2074 = vrcp.pop %v2059
        %v2075 = vrcp.pop %v2061
        %v2076 = vrcp.pop %v2063
        %v2077 = vrcp.pop %v2065
        %v2078 = vrcp.pop %v2067
        %v2079 = vrcp.pop %v2069
        %v2080 = vrcp.pop %v2071
        %v2081 = vrcp.pop %v2073
        %v2082 = vmul.f32 %v2043, %v2074
        %v2083 = vmul.f32 %v2045, %v2075
        %v2084 = vmul.f32 %v2047, %v2076
        %v2085 = vmul.f32 %v2049, %v2077
        %v2086 = vmul.f32 %v2051, %v2078
        %v2087 = vmul.f32 %v2053, %v2079
        %v2088 = vmul.f32 %v2055, %v2080
        %v2089 = vmul.f32 %v2057, %v2081
        %v2090 = vpack.c.bf16 %v2083, %v2082
        %v2091 = vpack.c.bf16 %v2085, %v2084
        %v2092 = vpack.c.bf16 %v2087, %v2086
        %v2093 = vpack.c.bf16 %v2089, %v2088
        %2094 = vrot.lane.b32.xlu0 %v1299, 96
        %v2095 = vpop.permute.xlu0 %2094
        %2096 = vrot.lane.b32.xlu0 %v1300, 96
        %v2097 = vpop.permute.xlu0 %2096
        %2098 = vrot.lane.b32.xlu0 %v1301, 96
        %v2099 = vpop.permute.xlu0 %2098
        %2100 = vrot.lane.b32.xlu0 %v1302, 96
        %v2101 = vpop.permute.xlu0 %2100
        %2102 = vrot.lane.b32.xlu0 %v1303, 96
        %v2103 = vpop.permute.xlu0 %2102
        %2104 = vrot.lane.b32.xlu0 %v1304, 96
        %v2105 = vpop.permute.xlu0 %2104
        %2106 = vrot.lane.b32.xlu0 %v1305, 96
        %v2107 = vpop.permute.xlu0 %2106
        %2108 = vrot.lane.b32.xlu0 %v1306, 96
        %v2109 = vpop.permute.xlu0 %2108
        %2118 = vmatprep.subr.bf16.mxu0 0
        %2119 = vmatpush1.bf16.msra.mxu0 %v2095
        %2120 = vmatprep.subr.bf16.mxu0 0
        %2121 = vmatpush1.bf16.msra.mxu0 %v2097
        %2122 = vmatprep.subr.bf16.mxu0 0
        %2123 = vmatpush1.bf16.msra.mxu0 %v2099
        %2124 = vmatprep.subr.bf16.mxu0 0
        %2125 = vmatpush1.bf16.msra.mxu0 %v2101
        %2126 = vmatprep.subr.bf16.mxu0 0
        %2127 = vmatpush1.bf16.msra.mxu0 %v2103
        %2128 = vmatprep.subr.bf16.mxu0 0
        %2129 = vmatpush1.bf16.msra.mxu0 %v2105
        %2130 = vmatprep.subr.bf16.mxu0 0
        %2131 = vmatpush1.bf16.msra.mxu0 %v2107
        %2132 = vmatprep.subr.bf16.mxu0 0
        %2133 = vmatpush1.bf16.msra.mxu0 %v2109
        %2134 = vmatprep.subr.bf16.mxu0 0
        %2135 = vmatpush1.bf16.msra.mxu0 0
        %2136 = vmatprep.subr.bf16.mxu0 0
        %2137 = vmatpush1.bf16.msra.mxu0 0
        %2138 = vmatprep.subr.bf16.mxu0 0
        %2139 = vmatpush1.bf16.msra.mxu0 0
        %2140 = vmatprep.subr.bf16.mxu0 0
        %2141 = vmatpush1.bf16.msra.mxu0 0
        %2142 = vmatprep.subr.bf16.mxu0 0
        %2143 = vmatpush1.bf16.msra.mxu0 0
        %2144 = vmatprep.subr.bf16.mxu0 0
        %2145 = vmatpush1.bf16.msra.mxu0 0
        %2146 = vmatprep.subr.bf16.mxu0 0
        %2147 = vmatpush1.bf16.msra.mxu0 0
        %2148 = vmatprep.subr.bf16.mxu0 0
        %2149 = vmatpush1.bf16.msra.mxu0 0
        %2150 = vmatprep.mubr.bf16.mxu0 0
        %2151 = vmatmul.mubr.bf16.gmra.mrb[0].mxu0 %v2090
        %v2152 = vpop.f32.mrb[0].mxu0
        %v2153 = vadd.f32 0.0, %v2152
        %v2154 = vpop.f32.mrb[0].mxu0
        %v2155 = vpop.f32.mrb[0].mxu0
        %v2156 = vadd.f32 0.0, %v2155
        %v2157 = vpop.f32.mrb[0].mxu0
        %2158 = vmatprep.mubr.bf16.mxu0 0
        %2159 = vmatmul.mubr.bf16.gmra.mrb[0].mxu0 %v2091
        %v2160 = vpop.f32.mrb[0].mxu0
        %v2161 = vadd.f32 0.0, %v2160
        %v2162 = vpop.f32.mrb[0].mxu0
        %v2163 = vpop.f32.mrb[0].mxu0
        %v2164 = vadd.f32 0.0, %v2163
        %v2165 = vpop.f32.mrb[0].mxu0
        %2166 = vmatprep.mubr.bf16.mxu0 0
        %2167 = vmatmul.mubr.bf16.gmra.mrb[0].mxu0 %v2092
        %v2168 = vpop.f32.mrb[0].mxu0
        %v2169 = vadd.f32 0.0, %v2168
        %v2170 = vpop.f32.mrb[0].mxu0
        %v2171 = vpop.f32.mrb[0].mxu0
        %v2172 = vadd.f32 0.0, %v2171
        %v2173 = vpop.f32.mrb[0].mxu0
        %2174 = vmatprep.mubr.bf16.mxu0 0
        %2175 = vmatmul.mubr.bf16.gmra.mrb[0].mxu0 %v2093
        %v2176 = vpop.f32.mrb[0].mxu0
        %v2177 = vadd.f32 0.0, %v2176
        %v2178 = vpop.f32.mrb[0].mxu0
        %v2179 = vpop.f32.mrb[0].mxu0
        %v2180 = vadd.f32 0.0, %v2179
        %v2181 = vpop.f32.mrb[0].mxu0
        %2182 = vdwg.mxu0
        %v2183 = vpack.c.bf16 %v2156, %v2153
        %v2184 = vpack.c.bf16 %v2164, %v2161
        %v2185 = vpack.c.bf16 %v2172, %v2169
        %v2186 = vpack.c.bf16 %v2180, %v2177
        %2191 = vrot.lane.b32.xlu0 %v2183, 32
        %v2192 = vpop.permute.xlu0 %2191
        %2193 = vrot.lane.b32.xlu0 %v2184, 32
        %v2194 = vpop.permute.xlu0 %2193
        %2195 = vrot.lane.b32.xlu0 %v2185, 32
        %v2196 = vpop.permute.xlu0 %2195
        %2197 = vrot.lane.b32.xlu0 %v2186, 32
        %v2198 = vpop.permute.xlu0 %2197
        %vm2203 = vcmask 392448
        %2204 = vst.msk [vmem:[#allocation4] sm:$0xff] %vm2203, %v2192
        %2205 = vst.msk [vmem:[#allocation4 + $0x8] sm:$0xff] %vm2203, %v2194
        %2206 = vst.msk [vmem:[#allocation4 + $0x10] sm:$0xff] %vm2203, %v2196
        %2207 = vst.msk [vmem:[#allocation4 + $0x18] sm:$0xff] %vm2203, %v2198
        %2208 = vrot.lane.b32.xlu0 %v1287, 80
        %v2209 = vpop.permute.xlu0 %2208
        %2210 = vrot.lane.b32.xlu0 %v1288, 80
        %v2211 = vpop.permute.xlu0 %2210
        %2212 = vrot.lane.b32.xlu0 %v1289, 80
        %v2213 = vpop.permute.xlu0 %2212
        %2214 = vrot.lane.b32.xlu0 %v1290, 80
        %v2215 = vpop.permute.xlu0 %2214
        %2216 = vrot.lane.b32.xlu0 %v1291, 80
        %v2217 = vpop.permute.xlu0 %2216
        %2218 = vrot.lane.b32.xlu0 %v1292, 80
        %v2219 = vpop.permute.xlu0 %2218
        %2220 = vrot.lane.b32.xlu0 %v1293, 80
        %v2221 = vpop.permute.xlu0 %2220
        %2222 = vrot.lane.b32.xlu0 %v1294, 80
        %v2223 = vpop.permute.xlu0 %2222
        %2224 = vrot.lane.b32.xlu0 %v1295, 80
        %v2225 = vpop.permute.xlu0 %2224
        %2226 = vrot.lane.b32.xlu0 %v1296, 80
        %v2227 = vpop.permute.xlu0 %2226
        %2228 = vrot.lane.b32.xlu0 %v1297, 80
        %v2229 = vpop.permute.xlu0 %2228
        %2230 = vrot.lane.b32.xlu0 %v1298, 80
        %v2231 = vpop.permute.xlu0 %2230
        %v2233 = vsel %vm1307, %v2209, 0
        %v2236 = vsel %vm1307, %v2211, 0
        %v2239 = vsel %vm1307, %v2213, 0
        %v2242 = vsel %vm1307, %v2215, 0
        %v2245 = vsel %vm1307, %v2217, 0
        %v2248 = vsel %vm1307, %v2219, 0
        %v2251 = vsel %vm1307, %v2221, 0
        %v2254 = vsel %vm1307, %v2223, 0
        %v2257 = vsel %vm1307, %v2225, 0
        %v2260 = vsel %vm1307, %v2227, 0
        %v2263 = vsel %vm1307, %v2229, 0
        %v2266 = vsel %vm1307, %v2231, 0
        %2268 = vmatprep.subr.bf16.mxu0 0
        %2269 = vmatpush1.bf16.xpose.msra.mxu0 %v2245
        %2270 = vmatprep.subr.bf16.mxu0 0
        %2271 = vmatpush1.bf16.xpose.msra.mxu0 %v2248
        %2272 = vmatprep.subr.bf16.mxu0 0
        %2273 = vmatpush1.bf16.xpose.msra.mxu0 %v2251
        %2274 = vmatprep.subr.bf16.mxu0 0
        %2275 = vmatpush1.bf16.xpose.msra.mxu0 %v2254
        %2276 = vmatprep.subr.bf16.mxu0 0
        %2277 = vmatpush1.bf16.xpose.msra.mxu0 %v2257
        %2278 = vmatprep.subr.bf16.mxu0 0
        %2279 = vmatpush1.bf16.xpose.msra.mxu0 %v2260
        %2280 = vmatprep.subr.bf16.mxu0 0
        %2281 = vmatpush1.bf16.xpose.msra.mxu0 %v2263
        %2282 = vmatprep.subr.bf16.mxu0 0
        %2283 = vmatpush1.bf16.xpose.msra.mxu0 %v2266
        %2284 = vmatprep.subr.bf16.mxu0 0
        %2285 = vmatpush1.bf16.xpose.msra.mxu0 0
        %2286 = vmatprep.subr.bf16.mxu0 0
        %2287 = vmatpush1.bf16.xpose.msra.mxu0 0
        %2288 = vmatprep.subr.bf16.mxu0 0
        %2289 = vmatpush1.bf16.xpose.msra.mxu0 0
        %2290 = vmatprep.subr.bf16.mxu0 0
        %2291 = vmatpush1.bf16.xpose.msra.mxu0 0
        %2292 = vmatprep.subr.bf16.mxu0 0
        %2293 = vmatpush1.bf16.xpose.msra.mxu0 0
        %2294 = vmatprep.subr.bf16.mxu0 0
        %2295 = vmatpush1.bf16.xpose.msra.mxu0 0
        %2296 = vmatprep.subr.bf16.mxu0 0
        %2297 = vmatpush1.bf16.xpose.msra.mxu0 0
        %2298 = vmatprep.subr.bf16.mxu0 0
        %2299 = vmatpush1.bf16.xpose.msra.mxu0 0
        %2300 = vmatprep.mubr.bf16.mxu0 0
        %2301 = vmatmul.mubr.bf16.gmra.mrb[0].mxu0 %v2233
        %v2302 = vpop.f32.mrb[0].mxu0
        %v2303 = vadd.f32 0.0, %v2302
        %v2304 = vpop.f32.mrb[0].mxu0
        %v2305 = vpop.f32.mrb[0].mxu0
        %v2306 = vadd.f32 0.0, %v2305
        %v2307 = vpop.f32.mrb[0].mxu0
        %2308 = vmatprep.mubr.bf16.mxu0 0
        %2309 = vmatmul.mubr.bf16.gmra.mrb[0].mxu0 %v2236
        %v2310 = vpop.f32.mrb[0].mxu0
        %v2311 = vadd.f32 0.0, %v2310
        %v2312 = vpop.f32.mrb[0].mxu0
        %v2313 = vpop.f32.mrb[0].mxu0
        %v2314 = vadd.f32 0.0, %v2313
        %v2315 = vpop.f32.mrb[0].mxu0
        %2316 = vmatprep.mubr.bf16.mxu0 0
        %2317 = vmatmul.mubr.bf16.gmra.mrb[0].mxu0 %v2239
        %v2318 = vpop.f32.mrb[0].mxu0
        %v2319 = vadd.f32 0.0, %v2318
        %v2320 = vpop.f32.mrb[0].mxu0
        %v2321 = vpop.f32.mrb[0].mxu0
        %v2322 = vadd.f32 0.0, %v2321
        %v2323 = vpop.f32.mrb[0].mxu0
        %2324 = vmatprep.mubr.bf16.mxu0 0
        %2325 = vmatmul.mubr.bf16.gmra.mrb[0].mxu0 %v2242
        %v2326 = vpop.f32.mrb[0].mxu0
        %v2327 = vadd.f32 0.0, %v2326
        %v2328 = vpop.f32.mrb[0].mxu0
        %v2329 = vpop.f32.mrb[0].mxu0
        %v2330 = vadd.f32 0.0, %v2329
        %v2331 = vpop.f32.mrb[0].mxu0
        %2332 = vdwg.mxu0
        %2333 = vmax.xlane.f32.xlu0 %v2303
        %v2334 = vpop.xlane.xlu0 %2333
        %2335 = vmax.xlane.f32.xlu0 %v2306
        %v2336 = vpop.xlane.xlu0 %2335
        %2337 = vmax.xlane.f32.xlu0 %v2311
        %v2338 = vpop.xlane.xlu0 %2337
        %2339 = vmax.xlane.f32.xlu0 %v2314
        %v2340 = vpop.xlane.xlu0 %2339
        %2341 = vmax.xlane.f32.xlu0 %v2319
        %v2342 = vpop.xlane.xlu0 %2341
        %2343 = vmax.xlane.f32.xlu0 %v2322
        %v2344 = vpop.xlane.xlu0 %2343
        %2345 = vmax.xlane.f32.xlu0 %v2327
        %v2346 = vpop.xlane.xlu0 %2345
        %2347 = vmax.xlane.f32.xlu0 %v2330
        %v2348 = vpop.xlane.xlu0 %2347
        %v2349 = vsub.f32 %v2303, %v2334
        %v2350 = vsub.f32 %v2306, %v2336
        %v2351 = vsub.f32 %v2311, %v2338
        %v2352 = vsub.f32 %v2314, %v2340
        %v2353 = vsub.f32 %v2319, %v2342
        %v2354 = vsub.f32 %v2322, %v2344
        %v2355 = vsub.f32 %v2327, %v2346
        %v2356 = vsub.f32 %v2330, %v2348
        %v2357 = vmul.f32 %v2349, 1.442695
        %v2358 = vpow.pop %v2357
        %v2359 = vmul.f32 %v2350, 1.442695
        %v2360 = vpow.pop %v2359
        %v2361 = vmul.f32 %v2351, 1.442695
        %v2362 = vpow.pop %v2361
        %v2363 = vmul.f32 %v2352, 1.442695
        %v2364 = vpow.pop %v2363
        %v2365 = vmul.f32 %v2353, 1.442695
        %v2366 = vpow.pop %v2365
        %v2367 = vmul.f32 %v2354, 1.442695
        %v2368 = vpow.pop %v2367
        %v2369 = vmul.f32 %v2355, 1.442695
        %v2370 = vpow.pop %v2369
        %v2371 = vmul.f32 %v2356, 1.442695
        %v2372 = vpow.pop %v2371
        %2373 = vadd.xlane.f32.xlu0 %v2358
        %v2374 = vpop.xlane.xlu0 %2373
        %2375 = vadd.xlane.f32.xlu0 %v2360
        %v2376 = vpop.xlane.xlu0 %2375
        %2377 = vadd.xlane.f32.xlu0 %v2362
        %v2378 = vpop.xlane.xlu0 %2377
        %2379 = vadd.xlane.f32.xlu0 %v2364
        %v2380 = vpop.xlane.xlu0 %2379
        %2381 = vadd.xlane.f32.xlu0 %v2366
        %v2382 = vpop.xlane.xlu0 %2381
        %2383 = vadd.xlane.f32.xlu0 %v2368
        %v2384 = vpop.xlane.xlu0 %2383
        %2385 = vadd.xlane.f32.xlu0 %v2370
        %v2386 = vpop.xlane.xlu0 %2385
        %2387 = vadd.xlane.f32.xlu0 %v2372
        %v2388 = vpop.xlane.xlu0 %2387
        %v2389 = vrcp.pop %v2374
        %v2390 = vrcp.pop %v2376
        %v2391 = vrcp.pop %v2378
        %v2392 = vrcp.pop %v2380
        %v2393 = vrcp.pop %v2382
        %v2394 = vrcp.pop %v2384
        %v2395 = vrcp.pop %v2386
        %v2396 = vrcp.pop %v2388
        %v2397 = vmul.f32 %v2358, %v2389
        %v2398 = vmul.f32 %v2360, %v2390
        %v2399 = vmul.f32 %v2362, %v2391
        %v2400 = vmul.f32 %v2364, %v2392
        %v2401 = vmul.f32 %v2366, %v2393
        %v2402 = vmul.f32 %v2368, %v2394
        %v2403 = vmul.f32 %v2370, %v2395
        %v2404 = vmul.f32 %v2372, %v2396
        %v2405 = vpack.c.bf16 %v2398, %v2397
        %v2406 = vpack.c.bf16 %v2400, %v2399
        %v2407 = vpack.c.bf16 %v2402, %v2401
        %v2408 = vpack.c.bf16 %v2404, %v2403
        %2409 = vrot.lane.b32.xlu0 %v1299, 80
        %v2410 = vpop.permute.xlu0 %2409
        %2411 = vrot.lane.b32.xlu0 %v1300, 80
        %v2412 = vpop.permute.xlu0 %2411
        %2413 = vrot.lane.b32.xlu0 %v1301, 80
        %v2414 = vpop.permute.xlu0 %2413
        %2415 = vrot.lane.b32.xlu0 %v1302, 80
        %v2416 = vpop.permute.xlu0 %2415
        %2417 = vrot.lane.b32.xlu0 %v1303, 80
        %v2418 = vpop.permute.xlu0 %2417
        %2419 = vrot.lane.b32.xlu0 %v1304, 80
        %v2420 = vpop.permute.xlu0 %2419
        %2421 = vrot.lane.b32.xlu0 %v1305, 80
        %v2422 = vpop.permute.xlu0 %2421
        %2423 = vrot.lane.b32.xlu0 %v1306, 80
        %v2424 = vpop.permute.xlu0 %2423
        %2433 = vmatprep.subr.bf16.mxu0 0
        %2434 = vmatpush1.bf16.msra.mxu0 %v2410
        %2435 = vmatprep.subr.bf16.mxu0 0
        %2436 = vmatpush1.bf16.msra.mxu0 %v2412
        %2437 = vmatprep.subr.bf16.mxu0 0
        %2438 = vmatpush1.bf16.msra.mxu0 %v2414
        %2439 = vmatprep.subr.bf16.mxu0 0
        %2440 = vmatpush1.bf16.msra.mxu0 %v2416
        %2441 = vmatprep.subr.bf16.mxu0 0
        %2442 = vmatpush1.bf16.msra.mxu0 %v2418
        %2443 = vmatprep.subr.bf16.mxu0 0
        %2444 = vmatpush1.bf16.msra.mxu0 %v2420
        %2445 = vmatprep.subr.bf16.mxu0 0
        %2446 = vmatpush1.bf16.msra.mxu0 %v2422
        %2447 = vmatprep.subr.bf16.mxu0 0
        %2448 = vmatpush1.bf16.msra.mxu0 %v2424
        %2449 = vmatprep.subr.bf16.mxu0 0
        %2450 = vmatpush1.bf16.msra.mxu0 0
        %2451 = vmatprep.subr.bf16.mxu0 0
        %2452 = vmatpush1.bf16.msra.mxu0 0
        %2453 = vmatprep.subr.bf16.mxu0 0
        %2454 = vmatpush1.bf16.msra.mxu0 0
        %2455 = vmatprep.subr.bf16.mxu0 0
        %2456 = vmatpush1.bf16.msra.mxu0 0
        %2457 = vmatprep.subr.bf16.mxu0 0
        %2458 = vmatpush1.bf16.msra.mxu0 0
        %2459 = vmatprep.subr.bf16.mxu0 0
        %2460 = vmatpush1.bf16.msra.mxu0 0
        %2461 = vmatprep.subr.bf16.mxu0 0
        %2462 = vmatpush1.bf16.msra.mxu0 0
        %2463 = vmatprep.subr.bf16.mxu0 0
        %2464 = vmatpush1.bf16.msra.mxu0 0
        %2465 = vmatprep.mubr.bf16.mxu0 0
        %2466 = vmatmul.mubr.bf16.gmra.mrb[0].mxu0 %v2405
        %v2467 = vpop.f32.mrb[0].mxu0
        %v2468 = vadd.f32 0.0, %v2467
        %v2469 = vpop.f32.mrb[0].mxu0
        %v2470 = vpop.f32.mrb[0].mxu0
        %v2471 = vadd.f32 0.0, %v2470
        %v2472 = vpop.f32.mrb[0].mxu0
        %2473 = vmatprep.mubr.bf16.mxu0 0
        %2474 = vmatmul.mubr.bf16.gmra.mrb[0].mxu0 %v2406
        %v2475 = vpop.f32.mrb[0].mxu0
        %v2476 = vadd.f32 0.0, %v2475
        %v2477 = vpop.f32.mrb[0].mxu0
        %v2478 = vpop.f32.mrb[0].mxu0
        %v2479 = vadd.f32 0.0, %v2478
        %v2480 = vpop.f32.mrb[0].mxu0
        %2481 = vmatprep.mubr.bf16.mxu0 0
        %2482 = vmatmul.mubr.bf16.gmra.mrb[0].mxu0 %v2407
        %v2483 = vpop.f32.mrb[0].mxu0
        %v2484 = vadd.f32 0.0, %v2483
        %v2485 = vpop.f32.mrb[0].mxu0
        %v2486 = vpop.f32.mrb[0].mxu0
        %v2487 = vadd.f32 0.0, %v2486
        %v2488 = vpop.f32.mrb[0].mxu0
        %2489 = vmatprep.mubr.bf16.mxu0 0
        %2490 = vmatmul.mubr.bf16.gmra.mrb[0].mxu0 %v2408
        %v2491 = vpop.f32.mrb[0].mxu0
        %v2492 = vadd.f32 0.0, %v2491
        %v2493 = vpop.f32.mrb[0].mxu0
        %v2494 = vpop.f32.mrb[0].mxu0
        %v2495 = vadd.f32 0.0, %v2494
        %v2496 = vpop.f32.mrb[0].mxu0
        %2497 = vdwg.mxu0
        %v2498 = vpack.c.bf16 %v2471, %v2468
        %v2499 = vpack.c.bf16 %v2479, %v2476
        %v2500 = vpack.c.bf16 %v2487, %v2484
        %v2501 = vpack.c.bf16 %v2495, %v2492
        %2506 = vrot.lane.b32.xlu0 %v2498, 48
        %v2507 = vpop.permute.xlu0 %2506
        %2508 = vrot.lane.b32.xlu0 %v2499, 48
        %v2509 = vpop.permute.xlu0 %2508
        %2510 = vrot.lane.b32.xlu0 %v2500, 48
        %v2511 = vpop.permute.xlu0 %2510
        %2512 = vrot.lane.b32.xlu0 %v2501, 48
        %v2513 = vpop.permute.xlu0 %2512
        %vm2518 = vcmask 523648
        %2519 = vst.msk [vmem:[#allocation4] sm:$0xff] %vm2518, %v2507
        %2520 = vst.msk [vmem:[#allocation4 + $0x8] sm:$0xff] %vm2518, %v2509
        %2521 = vst.msk [vmem:[#allocation4 + $0x10] sm:$0xff] %vm2518, %v2511
        %2522 = vst.msk [vmem:[#allocation4 + $0x18] sm:$0xff] %vm2518, %v2513
        %2523 = vrot.lane.b32.xlu0 %v1287, 64
        %v2524 = vpop.permute.xlu0 %2523
        %2525 = vrot.lane.b32.xlu0 %v1288, 64
        %v2526 = vpop.permute.xlu0 %2525
        %2527 = vrot.lane.b32.xlu0 %v1289, 64
        %v2528 = vpop.permute.xlu0 %2527
        %2529 = vrot.lane.b32.xlu0 %v1290, 64
        %v2530 = vpop.permute.xlu0 %2529
        %2531 = vrot.lane.b32.xlu0 %v1291, 64
        %v2532 = vpop.permute.xlu0 %2531
        %2533 = vrot.lane.b32.xlu0 %v1292, 64
        %v2534 = vpop.permute.xlu0 %2533
        %2535 = vrot.lane.b32.xlu0 %v1293, 64
        %v2536 = vpop.permute.xlu0 %2535
        %2537 = vrot.lane.b32.xlu0 %v1294, 64
        %v2538 = vpop.permute.xlu0 %2537
        %2539 = vrot.lane.b32.xlu0 %v1295, 64
        %v2540 = vpop.permute.xlu0 %2539
        %2541 = vrot.lane.b32.xlu0 %v1296, 64
        %v2542 = vpop.permute.xlu0 %2541
        %2543 = vrot.lane.b32.xlu0 %v1297, 64
        %v2544 = vpop.permute.xlu0 %2543
        %2545 = vrot.lane.b32.xlu0 %v1298, 64
        %v2546 = vpop.permute.xlu0 %2545
        %v2548 = vsel %vm1307, %v2524, 0
        %v2551 = vsel %vm1307, %v2526, 0
        %v2554 = vsel %vm1307, %v2528, 0
        %v2557 = vsel %vm1307, %v2530, 0
        %v2560 = vsel %vm1307, %v2532, 0
        %v2563 = vsel %vm1307, %v2534, 0
        %v2566 = vsel %vm1307, %v2536, 0
        %v2569 = vsel %vm1307, %v2538, 0
        %v2572 = vsel %vm1307, %v2540, 0
        %v2575 = vsel %vm1307, %v2542, 0
        %v2578 = vsel %vm1307, %v2544, 0
        %v2581 = vsel %vm1307, %v2546, 0
        %2583 = vmatprep.subr.bf16.mxu0 0
        %2584 = vmatpush1.bf16.xpose.msra.mxu0 %v2560
        %2585 = vmatprep.subr.bf16.mxu0 0
        %2586 = vmatpush1.bf16.xpose.msra.mxu0 %v2563
        %2587 = vmatprep.subr.bf16.mxu0 0
        %2588 = vmatpush1.bf16.xpose.msra.mxu0 %v2566
        %2589 = vmatprep.subr.bf16.mxu0 0
        %2590 = vmatpush1.bf16.xpose.msra.mxu0 %v2569
        %2591 = vmatprep.subr.bf16.mxu0 0
        %2592 = vmatpush1.bf16.xpose.msra.mxu0 %v2572
        %2593 = vmatprep.subr.bf16.mxu0 0
        %2594 = vmatpush1.bf16.xpose.msra.mxu0 %v2575
        %2595 = vmatprep.subr.bf16.mxu0 0
        %2596 = vmatpush1.bf16.xpose.msra.mxu0 %v2578
        %2597 = vmatprep.subr.bf16.mxu0 0
        %2598 = vmatpush1.bf16.xpose.msra.mxu0 %v2581
        %2599 = vmatprep.subr.bf16.mxu0 0
        %2600 = vmatpush1.bf16.xpose.msra.mxu0 0
        %2601 = vmatprep.subr.bf16.mxu0 0
        %2602 = vmatpush1.bf16.xpose.msra.mxu0 0
        %2603 = vmatprep.subr.bf16.mxu0 0
        %2604 = vmatpush1.bf16.xpose.msra.mxu0 0
        %2605 = vmatprep.subr.bf16.mxu0 0
        %2606 = vmatpush1.bf16.xpose.msra.mxu0 0
        %2607 = vmatprep.subr.bf16.mxu0 0
        %2608 = vmatpush1.bf16.xpose.msra.mxu0 0
        %2609 = vmatprep.subr.bf16.mxu0 0
        %2610 = vmatpush1.bf16.xpose.msra.mxu0 0
        %2611 = vmatprep.subr.bf16.mxu0 0
        %2612 = vmatpush1.bf16.xpose.msra.mxu0 0
        %2613 = vmatprep.subr.bf16.mxu0 0
        %2614 = vmatpush1.bf16.xpose.msra.mxu0 0
        %2615 = vmatprep.mubr.bf16.mxu0 0
        %2616 = vmatmul.mubr.bf16.gmra.mrb[0].mxu0 %v2548
        %v2617 = vpop.f32.mrb[0].mxu0
        %v2618 = vadd.f32 0.0, %v2617
        %v2619 = vpop.f32.mrb[0].mxu0
        %v2620 = vpop.f32.mrb[0].mxu0
        %v2621 = vadd.f32 0.0, %v2620
        %v2622 = vpop.f32.mrb[0].mxu0
        %2623 = vmatprep.mubr.bf16.mxu0 0
        %2624 = vmatmul.mubr.bf16.gmra.mrb[0].mxu0 %v2551
        %v2625 = vpop.f32.mrb[0].mxu0
        %v2626 = vadd.f32 0.0, %v2625
        %v2627 = vpop.f32.mrb[0].mxu0
        %v2628 = vpop.f32.mrb[0].mxu0
        %v2629 = vadd.f32 0.0, %v2628
        %v2630 = vpop.f32.mrb[0].mxu0
        %2631 = vmatprep.mubr.bf16.mxu0 0
        %2632 = vmatmul.mubr.bf16.gmra.mrb[0].mxu0 %v2554
        %v2633 = vpop.f32.mrb[0].mxu0
        %v2634 = vadd.f32 0.0, %v2633
        %v2635 = vpop.f32.mrb[0].mxu0
        %v2636 = vpop.f32.mrb[0].mxu0
        %v2637 = vadd.f32 0.0, %v2636
        %v2638 = vpop.f32.mrb[0].mxu0
        %2639 = vmatprep.mubr.bf16.mxu0 0
        %2640 = vmatmul.mubr.bf16.gmra.mrb[0].mxu0 %v2557
        %v2641 = vpop.f32.mrb[0].mxu0
        %v2642 = vadd.f32 0.0, %v2641
        %v2643 = vpop.f32.mrb[0].mxu0
        %v2644 = vpop.f32.mrb[0].mxu0
        %v2645 = vadd.f32 0.0, %v2644
        %v2646 = vpop.f32.mrb[0].mxu0
        %2647 = vdwg.mxu0
        %2648 = vmax.xlane.f32.xlu0 %v2618
        %v2649 = vpop.xlane.xlu0 %2648
        %2650 = vmax.xlane.f32.xlu0 %v2621
        %v2651 = vpop.xlane.xlu0 %2650
        %2652 = vmax.xlane.f32.xlu0 %v2626
        %v2653 = vpop.xlane.xlu0 %2652
        %2654 = vmax.xlane.f32.xlu0 %v2629
        %v2655 = vpop.xlane.xlu0 %2654
        %2656 = vmax.xlane.f32.xlu0 %v2634
        %v2657 = vpop.xlane.xlu0 %2656
        %2658 = vmax.xlane.f32.xlu0 %v2637
        %v2659 = vpop.xlane.xlu0 %2658
        %2660 = vmax.xlane.f32.xlu0 %v2642
        %v2661 = vpop.xlane.xlu0 %2660
        %2662 = vmax.xlane.f32.xlu0 %v2645
        %v2663 = vpop.xlane.xlu0 %2662
        %v2664 = vsub.f32 %v2618, %v2649
        %v2665 = vsub.f32 %v2621, %v2651
        %v2666 = vsub.f32 %v2626, %v2653
        %v2667 = vsub.f32 %v2629, %v2655
        %v2668 = vsub.f32 %v2634, %v2657
        %v2669 = vsub.f32 %v2637, %v2659
        %v2670 = vsub.f32 %v2642, %v2661
        %v2671 = vsub.f32 %v2645, %v2663
        %v2672 = vmul.f32 %v2664, 1.442695
        %v2673 = vpow.pop %v2672
        %v2674 = vmul.f32 %v2665, 1.442695
        %v2675 = vpow.pop %v2674
        %v2676 = vmul.f32 %v2666, 1.442695
        %v2677 = vpow.pop %v2676
        %v2678 = vmul.f32 %v2667, 1.442695
        %v2679 = vpow.pop %v2678
        %v2680 = vmul.f32 %v2668, 1.442695
        %v2681 = vpow.pop %v2680
        %v2682 = vmul.f32 %v2669, 1.442695
        %v2683 = vpow.pop %v2682
        %v2684 = vmul.f32 %v2670, 1.442695
        %v2685 = vpow.pop %v2684
        %v2686 = vmul.f32 %v2671, 1.442695
        %v2687 = vpow.pop %v2686
        %2688 = vadd.xlane.f32.xlu0 %v2673
        %v2689 = vpop.xlane.xlu0 %2688
        %2690 = vadd.xlane.f32.xlu0 %v2675
        %v2691 = vpop.xlane.xlu0 %2690
        %2692 = vadd.xlane.f32.xlu0 %v2677
        %v2693 = vpop.xlane.xlu0 %2692
        %2694 = vadd.xlane.f32.xlu0 %v2679
        %v2695 = vpop.xlane.xlu0 %2694
        %2696 = vadd.xlane.f32.xlu0 %v2681
        %v2697 = vpop.xlane.xlu0 %2696
        %2698 = vadd.xlane.f32.xlu0 %v2683
        %v2699 = vpop.xlane.xlu0 %2698
        %2700 = vadd.xlane.f32.xlu0 %v2685
        %v2701 = vpop.xlane.xlu0 %2700
        %2702 = vadd.xlane.f32.xlu0 %v2687
        %v2703 = vpop.xlane.xlu0 %2702
        %v2704 = vrcp.pop %v2689
        %v2705 = vrcp.pop %v2691
        %v2706 = vrcp.pop %v2693
        %v2707 = vrcp.pop %v2695
        %v2708 = vrcp.pop %v2697
        %v2709 = vrcp.pop %v2699
        %v2710 = vrcp.pop %v2701
        %v2711 = vrcp.pop %v2703
        %v2712 = vmul.f32 %v2673, %v2704
        %v2713 = vmul.f32 %v2675, %v2705
        %v2714 = vmul.f32 %v2677, %v2706
        %v2715 = vmul.f32 %v2679, %v2707
        %v2716 = vmul.f32 %v2681, %v2708
        %v2717 = vmul.f32 %v2683, %v2709
        %v2718 = vmul.f32 %v2685, %v2710
        %v2719 = vmul.f32 %v2687, %v2711
        %v2720 = vpack.c.bf16 %v2713, %v2712
        %v2721 = vpack.c.bf16 %v2715, %v2714
        %v2722 = vpack.c.bf16 %v2717, %v2716
        %v2723 = vpack.c.bf16 %v2719, %v2718
        %2724 = vrot.lane.b32.xlu0 %v1299, 64
        %v2725 = vpop.permute.xlu0 %2724
        %2726 = vrot.lane.b32.xlu0 %v1300, 64
        %v2727 = vpop.permute.xlu0 %2726
        %2728 = vrot.lane.b32.xlu0 %v1301, 64
        %v2729 = vpop.permute.xlu0 %2728
        %2730 = vrot.lane.b32.xlu0 %v1302, 64
        %v2731 = vpop.permute.xlu0 %2730
        %2732 = vrot.lane.b32.xlu0 %v1303, 64
        %v2733 = vpop.permute.xlu0 %2732
        %2734 = vrot.lane.b32.xlu0 %v1304, 64
        %v2735 = vpop.permute.xlu0 %2734
        %2736 = vrot.lane.b32.xlu0 %v1305, 64
        %v2737 = vpop.permute.xlu0 %2736
        %2738 = vrot.lane.b32.xlu0 %v1306, 64
        %v2739 = vpop.permute.xlu0 %2738
        %2748 = vmatprep.subr.bf16.mxu0 0
        %2749 = vmatpush1.bf16.msra.mxu0 %v2725
        %2750 = vmatprep.subr.bf16.mxu0 0
        %2751 = vmatpush1.bf16.msra.mxu0 %v2727
        %2752 = vmatprep.subr.bf16.mxu0 0
        %2753 = vmatpush1.bf16.msra.mxu0 %v2729
        %2754 = vmatprep.subr.bf16.mxu0 0
        %2755 = vmatpush1.bf16.msra.mxu0 %v2731
        %2756 = vmatprep.subr.bf16.mxu0 0
        %2757 = vmatpush1.bf16.msra.mxu0 %v2733
        %2758 = vmatprep.subr.bf16.mxu0 0
        %2759 = vmatpush1.bf16.msra.mxu0 %v2735
        %2760 = vmatprep.subr.bf16.mxu0 0
        %2761 = vmatpush1.bf16.msra.mxu0 %v2737
        %2762 = vmatprep.subr.bf16.mxu0 0
        %2763 = vmatpush1.bf16.msra.mxu0 %v2739
        %2764 = vmatprep.subr.bf16.mxu0 0
        %2765 = vmatpush1.bf16.msra.mxu0 0
        %2766 = vmatprep.subr.bf16.mxu0 0
        %2767 = vmatpush1.bf16.msra.mxu0 0
        %2768 = vmatprep.subr.bf16.mxu0 0
        %2769 = vmatpush1.bf16.msra.mxu0 0
        %2770 = vmatprep.subr.bf16.mxu0 0
        %2771 = vmatpush1.bf16.msra.mxu0 0
        %2772 = vmatprep.subr.bf16.mxu0 0
        %2773 = vmatpush1.bf16.msra.mxu0 0
        %2774 = vmatprep.subr.bf16.mxu0 0
        %2775 = vmatpush1.bf16.msra.mxu0 0
        %2776 = vmatprep.subr.bf16.mxu0 0
        %2777 = vmatpush1.bf16.msra.mxu0 0
        %2778 = vmatprep.subr.bf16.mxu0 0
        %2779 = vmatpush1.bf16.msra.mxu0 0
        %2780 = vmatprep.mubr.bf16.mxu0 0
        %2781 = vmatmul.mubr.bf16.gmra.mrb[0].mxu0 %v2720
        %v2782 = vpop.f32.mrb[0].mxu0
        %v2783 = vadd.f32 0.0, %v2782
        %v2784 = vpop.f32.mrb[0].mxu0
        %v2785 = vpop.f32.mrb[0].mxu0
        %v2786 = vadd.f32 0.0, %v2785
        %v2787 = vpop.f32.mrb[0].mxu0
        %2788 = vmatprep.mubr.bf16.mxu0 0
        %2789 = vmatmul.mubr.bf16.gmra.mrb[0].mxu0 %v2721
        %v2790 = vpop.f32.mrb[0].mxu0
        %v2791 = vadd.f32 0.0, %v2790
        %v2792 = vpop.f32.mrb[0].mxu0
        %v2793 = vpop.f32.mrb[0].mxu0
        %v2794 = vadd.f32 0.0, %v2793
        %v2795 = vpop.f32.mrb[0].mxu0
        %2796 = vmatprep.mubr.bf16.mxu0 0
        %2797 = vmatmul.mubr.bf16.gmra.mrb[0].mxu0 %v2722
        %v2798 = vpop.f32.mrb[0].mxu0
        %v2799 = vadd.f32 0.0, %v2798
        %v2800 = vpop.f32.mrb[0].mxu0
        %v2801 = vpop.f32.mrb[0].mxu0
        %v2802 = vadd.f32 0.0, %v2801
        %v2803 = vpop.f32.mrb[0].mxu0
        %2804 = vmatprep.mubr.bf16.mxu0 0
        %2805 = vmatmul.mubr.bf16.gmra.mrb[0].mxu0 %v2723
        %v2806 = vpop.f32.mrb[0].mxu0
        %v2807 = vadd.f32 0.0, %v2806
        %v2808 = vpop.f32.mrb[0].mxu0
        %v2809 = vpop.f32.mrb[0].mxu0
        %v2810 = vadd.f32 0.0, %v2809
        %v2811 = vpop.f32.mrb[0].mxu0
        %2812 = vdwg.mxu0
        %v2813 = vpack.c.bf16 %v2786, %v2783
        %v2814 = vpack.c.bf16 %v2794, %v2791
        %v2815 = vpack.c.bf16 %v2802, %v2799
        %v2816 = vpack.c.bf16 %v2810, %v2807
        %2821 = vrot.lane.b32.xlu0 %v2813, 64
        %v2822 = vpop.permute.xlu0 %2821
        %2823 = vrot.lane.b32.xlu0 %v2814, 64
        %v2824 = vpop.permute.xlu0 %2823
        %2825 = vrot.lane.b32.xlu0 %v2815, 64
        %v2826 = vpop.permute.xlu0 %2825
        %2827 = vrot.lane.b32.xlu0 %v2816, 64
        %v2828 = vpop.permute.xlu0 %2827
        %vm2833 = vcmask 654848
        %2834 = vst.msk [vmem:[#allocation4] sm:$0xff] %vm2833, %v2822
        %2835 = vst.msk [vmem:[#allocation4 + $0x8] sm:$0xff] %vm2833, %v2824
        %2836 = vst.msk [vmem:[#allocation4 + $0x10] sm:$0xff] %vm2833, %v2826
        %2837 = vst.msk [vmem:[#allocation4 + $0x18] sm:$0xff] %vm2833, %v2828
        %2838 = vrot.lane.b32.xlu0 %v1287, 48
        %v2839 = vpop.permute.xlu0 %2838
        %2840 = vrot.lane.b32.xlu0 %v1288, 48
        %v2841 = vpop.permute.xlu0 %2840
        %2842 = vrot.lane.b32.xlu0 %v1289, 48
        %v2843 = vpop.permute.xlu0 %2842
        %2844 = vrot.lane.b32.xlu0 %v1290, 48
        %v2845 = vpop.permute.xlu0 %2844
        %2846 = vrot.lane.b32.xlu0 %v1291, 48
        %v2847 = vpop.permute.xlu0 %2846
        %2848 = vrot.lane.b32.xlu0 %v1292, 48
        %v2849 = vpop.permute.xlu0 %2848
        %2850 = vrot.lane.b32.xlu0 %v1293, 48
        %v2851 = vpop.permute.xlu0 %2850
        %2852 = vrot.lane.b32.xlu0 %v1294, 48
        %v2853 = vpop.permute.xlu0 %2852
        %2854 = vrot.lane.b32.xlu0 %v1295, 48
        %v2855 = vpop.permute.xlu0 %2854
        %2856 = vrot.lane.b32.xlu0 %v1296, 48
        %v2857 = vpop.permute.xlu0 %2856
        %2858 = vrot.lane.b32.xlu0 %v1297, 48
        %v2859 = vpop.permute.xlu0 %2858
        %2860 = vrot.lane.b32.xlu0 %v1298, 48
        %v2861 = vpop.permute.xlu0 %2860
        %v2863 = vsel %vm1307, %v2839, 0
        %v2866 = vsel %vm1307, %v2841, 0
        %v2869 = vsel %vm1307, %v2843, 0
        %v2872 = vsel %vm1307, %v2845, 0
        %v2875 = vsel %vm1307, %v2847, 0
        %v2878 = vsel %vm1307, %v2849, 0
        %v2881 = vsel %vm1307, %v2851, 0
        %v2884 = vsel %vm1307, %v2853, 0
        %v2887 = vsel %vm1307, %v2855, 0
        %v2890 = vsel %vm1307, %v2857, 0
        %v2893 = vsel %vm1307, %v2859, 0
        %v2896 = vsel %vm1307, %v2861, 0
        %2898 = vmatprep.subr.bf16.mxu0 0
        %2899 = vmatpush1.bf16.xpose.msra.mxu0 %v2875
        %2900 = vmatprep.subr.bf16.mxu0 0
        %2901 = vmatpush1.bf16.xpose.msra.mxu0 %v2878
        %2902 = vmatprep.subr.bf16.mxu0 0
        %2903 = vmatpush1.bf16.xpose.msra.mxu0 %v2881
        %2904 = vmatprep.subr.bf16.mxu0 0
        %2905 = vmatpush1.bf16.xpose.msra.mxu0 %v2884
        %2906 = vmatprep.subr.bf16.mxu0 0
        %2907 = vmatpush1.bf16.xpose.msra.mxu0 %v2887
        %2908 = vmatprep.subr.bf16.mxu0 0
        %2909 = vmatpush1.bf16.xpose.msra.mxu0 %v2890
        %2910 = vmatprep.subr.bf16.mxu0 0
        %2911 = vmatpush1.bf16.xpose.msra.mxu0 %v2893
        %2912 = vmatprep.subr.bf16.mxu0 0
        %2913 = vmatpush1.bf16.xpose.msra.mxu0 %v2896
        %2914 = vmatprep.subr.bf16.mxu0 0
        %2915 = vmatpush1.bf16.xpose.msra.mxu0 0
        %2916 = vmatprep.subr.bf16.mxu0 0
        %2917 = vmatpush1.bf16.xpose.msra.mxu0 0
        %2918 = vmatprep.subr.bf16.mxu0 0
        %2919 = vmatpush1.bf16.xpose.msra.mxu0 0
        %2920 = vmatprep.subr.bf16.mxu0 0
        %2921 = vmatpush1.bf16.xpose.msra.mxu0 0
        %2922 = vmatprep.subr.bf16.mxu0 0
        %2923 = vmatpush1.bf16.xpose.msra.mxu0 0
        %2924 = vmatprep.subr.bf16.mxu0 0
        %2925 = vmatpush1.bf16.xpose.msra.mxu0 0
        %2926 = vmatprep.subr.bf16.mxu0 0
        %2927 = vmatpush1.bf16.xpose.msra.mxu0 0
        %2928 = vmatprep.subr.bf16.mxu0 0
        %2929 = vmatpush1.bf16.xpose.msra.mxu0 0
        %2930 = vmatprep.mubr.bf16.mxu0 0
        %2931 = vmatmul.mubr.bf16.gmra.mrb[0].mxu0 %v2863
        %v2932 = vpop.f32.mrb[0].mxu0
        %v2933 = vadd.f32 0.0, %v2932
        %v2934 = vpop.f32.mrb[0].mxu0
        %v2935 = vpop.f32.mrb[0].mxu0
        %v2936 = vadd.f32 0.0, %v2935
        %v2937 = vpop.f32.mrb[0].mxu0
        %2938 = vmatprep.mubr.bf16.mxu0 0
        %2939 = vmatmul.mubr.bf16.gmra.mrb[0].mxu0 %v2866
        %v2940 = vpop.f32.mrb[0].mxu0
        %v2941 = vadd.f32 0.0, %v2940
        %v2942 = vpop.f32.mrb[0].mxu0
        %v2943 = vpop.f32.mrb[0].mxu0
        %v2944 = vadd.f32 0.0, %v2943
        %v2945 = vpop.f32.mrb[0].mxu0
        %2946 = vmatprep.mubr.bf16.mxu0 0
        %2947 = vmatmul.mubr.bf16.gmra.mrb[0].mxu0 %v2869
        %v2948 = vpop.f32.mrb[0].mxu0
        %v2949 = vadd.f32 0.0, %v2948
        %v2950 = vpop.f32.mrb[0].mxu0
        %v2951 = vpop.f32.mrb[0].mxu0
        %v2952 = vadd.f32 0.0, %v2951
        %v2953 = vpop.f32.mrb[0].mxu0
        %2954 = vmatprep.mubr.bf16.mxu0 0
        %2955 = vmatmul.mubr.bf16.gmra.mrb[0].mxu0 %v2872
        %v2956 = vpop.f32.mrb[0].mxu0
        %v2957 = vadd.f32 0.0, %v2956
        %v2958 = vpop.f32.mrb[0].mxu0
        %v2959 = vpop.f32.mrb[0].mxu0
        %v2960 = vadd.f32 0.0, %v2959
        %v2961 = vpop.f32.mrb[0].mxu0
        %2962 = vdwg.mxu0
        %2963 = vmax.xlane.f32.xlu0 %v2933
        %v2964 = vpop.xlane.xlu0 %2963
        %2965 = vmax.xlane.f32.xlu0 %v2936
        %v2966 = vpop.xlane.xlu0 %2965
        %2967 = vmax.xlane.f32.xlu0 %v2941
        %v2968 = vpop.xlane.xlu0 %2967
        %2969 = vmax.xlane.f32.xlu0 %v2944
        %v2970 = vpop.xlane.xlu0 %2969
        %2971 = vmax.xlane.f32.xlu0 %v2949
        %v2972 = vpop.xlane.xlu0 %2971
        %2973 = vmax.xlane.f32.xlu0 %v2952
        %v2974 = vpop.xlane.xlu0 %2973
        %2975 = vmax.xlane.f32.xlu0 %v2957
        %v2976 = vpop.xlane.xlu0 %2975
        %2977 = vmax.xlane.f32.xlu0 %v2960
        %v2978 = vpop.xlane.xlu0 %2977
        %v2979 = vsub.f32 %v2933, %v2964
        %v2980 = vsub.f32 %v2936, %v2966
        %v2981 = vsub.f32 %v2941, %v2968
        %v2982 = vsub.f32 %v2944, %v2970
        %v2983 = vsub.f32 %v2949, %v2972
        %v2984 = vsub.f32 %v2952, %v2974
        %v2985 = vsub.f32 %v2957, %v2976
        %v2986 = vsub.f32 %v2960, %v2978
        %v2987 = vmul.f32 %v2979, 1.442695
        %v2988 = vpow.pop %v2987
        %v2989 = vmul.f32 %v2980, 1.442695
        %v2990 = vpow.pop %v2989
        %v2991 = vmul.f32 %v2981, 1.442695
        %v2992 = vpow.pop %v2991
        %v2993 = vmul.f32 %v2982, 1.442695
        %v2994 = vpow.pop %v2993
        %v2995 = vmul.f32 %v2983, 1.442695
        %v2996 = vpow.pop %v2995
        %v2997 = vmul.f32 %v2984, 1.442695
        %v2998 = vpow.pop %v2997
        %v2999 = vmul.f32 %v2985, 1.442695
        %v3000 = vpow.pop %v2999
        %v3001 = vmul.f32 %v2986, 1.442695
        %v3002 = vpow.pop %v3001
        %3003 = vadd.xlane.f32.xlu0 %v2988
        %v3004 = vpop.xlane.xlu0 %3003
        %3005 = vadd.xlane.f32.xlu0 %v2990
        %v3006 = vpop.xlane.xlu0 %3005
        %3007 = vadd.xlane.f32.xlu0 %v2992
        %v3008 = vpop.xlane.xlu0 %3007
        %3009 = vadd.xlane.f32.xlu0 %v2994
        %v3010 = vpop.xlane.xlu0 %3009
        %3011 = vadd.xlane.f32.xlu0 %v2996
        %v3012 = vpop.xlane.xlu0 %3011
        %3013 = vadd.xlane.f32.xlu0 %v2998
        %v3014 = vpop.xlane.xlu0 %3013
        %3015 = vadd.xlane.f32.xlu0 %v3000
        %v3016 = vpop.xlane.xlu0 %3015
        %3017 = vadd.xlane.f32.xlu0 %v3002
        %v3018 = vpop.xlane.xlu0 %3017
        %v3019 = vrcp.pop %v3004
        %v3020 = vrcp.pop %v3006
        %v3021 = vrcp.pop %v3008
        %v3022 = vrcp.pop %v3010
        %v3023 = vrcp.pop %v3012
        %v3024 = vrcp.pop %v3014
        %v3025 = vrcp.pop %v3016
        %v3026 = vrcp.pop %v3018
        %v3027 = vmul.f32 %v2988, %v3019
        %v3028 = vmul.f32 %v2990, %v3020
        %v3029 = vmul.f32 %v2992, %v3021
        %v3030 = vmul.f32 %v2994, %v3022
        %v3031 = vmul.f32 %v2996, %v3023
        %v3032 = vmul.f32 %v2998, %v3024
        %v3033 = vmul.f32 %v3000, %v3025
        %v3034 = vmul.f32 %v3002, %v3026
        %v3035 = vpack.c.bf16 %v3028, %v3027
        %v3036 = vpack.c.bf16 %v3030, %v3029
        %v3037 = vpack.c.bf16 %v3032, %v3031
        %v3038 = vpack.c.bf16 %v3034, %v3033
        %3039 = vrot.lane.b32.xlu0 %v1299, 48
        %v3040 = vpop.permute.xlu0 %3039
        %3041 = vrot.lane.b32.xlu0 %v1300, 48
        %v3042 = vpop.permute.xlu0 %3041
        %3043 = vrot.lane.b32.xlu0 %v1301, 48
        %v3044 = vpop.permute.xlu0 %3043
        %3045 = vrot.lane.b32.xlu0 %v1302, 48
        %v3046 = vpop.permute.xlu0 %3045
        %3047 = vrot.lane.b32.xlu0 %v1303, 48
        %v3048 = vpop.permute.xlu0 %3047
        %3049 = vrot.lane.b32.xlu0 %v1304, 48
        %v3050 = vpop.permute.xlu0 %3049
        %3051 = vrot.lane.b32.xlu0 %v1305, 48
        %v3052 = vpop.permute.xlu0 %3051
        %3053 = vrot.lane.b32.xlu0 %v1306, 48
        %v3054 = vpop.permute.xlu0 %3053
        %3063 = vmatprep.subr.bf16.mxu0 0
        %3064 = vmatpush1.bf16.msra.mxu0 %v3040
        %3065 = vmatprep.subr.bf16.mxu0 0
        %3066 = vmatpush1.bf16.msra.mxu0 %v3042
        %3067 = vmatprep.subr.bf16.mxu0 0
        %3068 = vmatpush1.bf16.msra.mxu0 %v3044
        %3069 = vmatprep.subr.bf16.mxu0 0
        %3070 = vmatpush1.bf16.msra.mxu0 %v3046
        %3071 = vmatprep.subr.bf16.mxu0 0
        %3072 = vmatpush1.bf16.msra.mxu0 %v3048
        %3073 = vmatprep.subr.bf16.mxu0 0
        %3074 = vmatpush1.bf16.msra.mxu0 %v3050
        %3075 = vmatprep.subr.bf16.mxu0 0
        %3076 = vmatpush1.bf16.msra.mxu0 %v3052
        %3077 = vmatprep.subr.bf16.mxu0 0
        %3078 = vmatpush1.bf16.msra.mxu0 %v3054
        %3079 = vmatprep.subr.bf16.mxu0 0
        %3080 = vmatpush1.bf16.msra.mxu0 0
        %3081 = vmatprep.subr.bf16.mxu0 0
        %3082 = vmatpush1.bf16.msra.mxu0 0
        %3083 = vmatprep.subr.bf16.mxu0 0
        %3084 = vmatpush1.bf16.msra.mxu0 0
        %3085 = vmatprep.subr.bf16.mxu0 0
        %3086 = vmatpush1.bf16.msra.mxu0 0
        %3087 = vmatprep.subr.bf16.mxu0 0
        %3088 = vmatpush1.bf16.msra.mxu0 0
        %3089 = vmatprep.subr.bf16.mxu0 0
        %3090 = vmatpush1.bf16.msra.mxu0 0
        %3091 = vmatprep.subr.bf16.mxu0 0
        %3092 = vmatpush1.bf16.msra.mxu0 0
        %3093 = vmatprep.subr.bf16.mxu0 0
        %3094 = vmatpush1.bf16.msra.mxu0 0
        %3095 = vmatprep.mubr.bf16.mxu0 0
        %3096 = vmatmul.mubr.bf16.gmra.mrb[0].mxu0 %v3035
        %v3097 = vpop.f32.mrb[0].mxu0
        %v3098 = vadd.f32 0.0, %v3097
        %v3099 = vpop.f32.mrb[0].mxu0
        %v3100 = vpop.f32.mrb[0].mxu0
        %v3101 = vadd.f32 0.0, %v3100
        %v3102 = vpop.f32.mrb[0].mxu0
        %3103 = vmatprep.mubr.bf16.mxu0 0
        %3104 = vmatmul.mubr.bf16.gmra.mrb[0].mxu0 %v3036
        %v3105 = vpop.f32.mrb[0].mxu0
        %v3106 = vadd.f32 0.0, %v3105
        %v3107 = vpop.f32.mrb[0].mxu0
        %v3108 = vpop.f32.mrb[0].mxu0
        %v3109 = vadd.f32 0.0, %v3108
        %v3110 = vpop.f32.mrb[0].mxu0
        %3111 = vmatprep.mubr.bf16.mxu0 0
        %3112 = vmatmul.mubr.bf16.gmra.mrb[0].mxu0 %v3037
        %v3113 = vpop.f32.mrb[0].mxu0
        %v3114 = vadd.f32 0.0, %v3113
        %v3115 = vpop.f32.mrb[0].mxu0
        %v3116 = vpop.f32.mrb[0].mxu0
        %v3117 = vadd.f32 0.0, %v3116
        %v3118 = vpop.f32.mrb[0].mxu0
        %3119 = vmatprep.mubr.bf16.mxu0 0
        %3120 = vmatmul.mubr.bf16.gmra.mrb[0].mxu0 %v3038
        %v3121 = vpop.f32.mrb[0].mxu0
        %v3122 = vadd.f32 0.0, %v3121
        %v3123 = vpop.f32.mrb[0].mxu0
        %v3124 = vpop.f32.mrb[0].mxu0
        %v3125 = vadd.f32 0.0, %v3124
        %v3126 = vpop.f32.mrb[0].mxu0
        %3127 = vdwg.mxu0
        %v3128 = vpack.c.bf16 %v3101, %v3098
        %v3129 = vpack.c.bf16 %v3109, %v3106
        %v3130 = vpack.c.bf16 %v3117, %v3114
        %v3131 = vpack.c.bf16 %v3125, %v3122
        %3136 = vrot.lane.b32.xlu0 %v3128, 80
        %v3137 = vpop.permute.xlu0 %3136
        %3138 = vrot.lane.b32.xlu0 %v3129, 80
        %v3139 = vpop.permute.xlu0 %3138
        %3140 = vrot.lane.b32.xlu0 %v3130, 80
        %v3141 = vpop.permute.xlu0 %3140
        %3142 = vrot.lane.b32.xlu0 %v3131, 80
        %v3143 = vpop.permute.xlu0 %3142
        %vm3148 = vcmask 786048
        %3149 = vst.msk [vmem:[#allocation4] sm:$0xff] %vm3148, %v3137
        %3150 = vst.msk [vmem:[#allocation4 + $0x8] sm:$0xff] %vm3148, %v3139
        %3151 = vst.msk [vmem:[#allocation4 + $0x10] sm:$0xff] %vm3148, %v3141
        %3152 = vst.msk [vmem:[#allocation4 + $0x18] sm:$0xff] %vm3148, %v3143
        %3153 = vrot.lane.b32.xlu0 %v1287, 32
        %v3154 = vpop.permute.xlu0 %3153
        %3155 = vrot.lane.b32.xlu0 %v1288, 32
        %v3156 = vpop.permute.xlu0 %3155
        %3157 = vrot.lane.b32.xlu0 %v1289, 32
        %v3158 = vpop.permute.xlu0 %3157
        %3159 = vrot.lane.b32.xlu0 %v1290, 32
        %v3160 = vpop.permute.xlu0 %3159
        %3161 = vrot.lane.b32.xlu0 %v1291, 32
        %v3162 = vpop.permute.xlu0 %3161
        %3163 = vrot.lane.b32.xlu0 %v1292, 32
        %v3164 = vpop.permute.xlu0 %3163
        %3165 = vrot.lane.b32.xlu0 %v1293, 32
        %v3166 = vpop.permute.xlu0 %3165
        %3167 = vrot.lane.b32.xlu0 %v1294, 32
        %v3168 = vpop.permute.xlu0 %3167
        %3169 = vrot.lane.b32.xlu0 %v1295, 32
        %v3170 = vpop.permute.xlu0 %3169
        %3171 = vrot.lane.b32.xlu0 %v1296, 32
        %v3172 = vpop.permute.xlu0 %3171
        %3173 = vrot.lane.b32.xlu0 %v1297, 32
        %v3174 = vpop.permute.xlu0 %3173
        %3175 = vrot.lane.b32.xlu0 %v1298, 32
        %v3176 = vpop.permute.xlu0 %3175
        %v3178 = vsel %vm1307, %v3154, 0
        %v3181 = vsel %vm1307, %v3156, 0
        %v3184 = vsel %vm1307, %v3158, 0
        %v3187 = vsel %vm1307, %v3160, 0
        %v3190 = vsel %vm1307, %v3162, 0
        %v3193 = vsel %vm1307, %v3164, 0
        %v3196 = vsel %vm1307, %v3166, 0
        %v3199 = vsel %vm1307, %v3168, 0
        %v3202 = vsel %vm1307, %v3170, 0
        %v3205 = vsel %vm1307, %v3172, 0
        %v3208 = vsel %vm1307, %v3174, 0
        %v3211 = vsel %vm1307, %v3176, 0
        %3213 = vmatprep.subr.bf16.mxu0 0
        %3214 = vmatpush1.bf16.xpose.msra.mxu0 %v3190
        %3215 = vmatprep.subr.bf16.mxu0 0
        %3216 = vmatpush1.bf16.xpose.msra.mxu0 %v3193
        %3217 = vmatprep.subr.bf16.mxu0 0
        %3218 = vmatpush1.bf16.xpose.msra.mxu0 %v3196
        %3219 = vmatprep.subr.bf16.mxu0 0
        %3220 = vmatpush1.bf16.xpose.msra.mxu0 %v3199
        %3221 = vmatprep.subr.bf16.mxu0 0
        %3222 = vmatpush1.bf16.xpose.msra.mxu0 %v3202
        %3223 = vmatprep.subr.bf16.mxu0 0
        %3224 = vmatpush1.bf16.xpose.msra.mxu0 %v3205
        %3225 = vmatprep.subr.bf16.mxu0 0
        %3226 = vmatpush1.bf16.xpose.msra.mxu0 %v3208
        %3227 = vmatprep.subr.bf16.mxu0 0
        %3228 = vmatpush1.bf16.xpose.msra.mxu0 %v3211
        %3229 = vmatprep.subr.bf16.mxu0 0
        %3230 = vmatpush1.bf16.xpose.msra.mxu0 0
        %3231 = vmatprep.subr.bf16.mxu0 0
        %3232 = vmatpush1.bf16.xpose.msra.mxu0 0
        %3233 = vmatprep.subr.bf16.mxu0 0
        %3234 = vmatpush1.bf16.xpose.msra.mxu0 0
        %3235 = vmatprep.subr.bf16.mxu0 0
        %3236 = vmatpush1.bf16.xpose.msra.mxu0 0
        %3237 = vmatprep.subr.bf16.mxu0 0
        %3238 = vmatpush1.bf16.xpose.msra.mxu0 0
        %3239 = vmatprep.subr.bf16.mxu0 0
        %3240 = vmatpush1.bf16.xpose.msra.mxu0 0
        %3241 = vmatprep.subr.bf16.mxu0 0
        %3242 = vmatpush1.bf16.xpose.msra.mxu0 0
        %3243 = vmatprep.subr.bf16.mxu0 0
        %3244 = vmatpush1.bf16.xpose.msra.mxu0 0
        %3245 = vmatprep.mubr.bf16.mxu0 0
        %3246 = vmatmul.mubr.bf16.gmra.mrb[0].mxu0 %v3178
        %v3247 = vpop.f32.mrb[0].mxu0
        %v3248 = vadd.f32 0.0, %v3247
        %v3249 = vpop.f32.mrb[0].mxu0
        %v3250 = vpop.f32.mrb[0].mxu0
        %v3251 = vadd.f32 0.0, %v3250
        %v3252 = vpop.f32.mrb[0].mxu0
        %3253 = vmatprep.mubr.bf16.mxu0 0
        %3254 = vmatmul.mubr.bf16.gmra.mrb[0].mxu0 %v3181
        %v3255 = vpop.f32.mrb[0].mxu0
        %v3256 = vadd.f32 0.0, %v3255
        %v3257 = vpop.f32.mrb[0].mxu0
        %v3258 = vpop.f32.mrb[0].mxu0
        %v3259 = vadd.f32 0.0, %v3258
        %v3260 = vpop.f32.mrb[0].mxu0
        %3261 = vmatprep.mubr.bf16.mxu0 0
        %3262 = vmatmul.mubr.bf16.gmra.mrb[0].mxu0 %v3184
        %v3263 = vpop.f32.mrb[0].mxu0
        %v3264 = vadd.f32 0.0, %v3263
        %v3265 = vpop.f32.mrb[0].mxu0
        %v3266 = vpop.f32.mrb[0].mxu0
        %v3267 = vadd.f32 0.0, %v3266
        %v3268 = vpop.f32.mrb[0].mxu0
        %3269 = vmatprep.mubr.bf16.mxu0 0
        %3270 = vmatmul.mubr.bf16.gmra.mrb[0].mxu0 %v3187
        %v3271 = vpop.f32.mrb[0].mxu0
        %v3272 = vadd.f32 0.0, %v3271
        %v3273 = vpop.f32.mrb[0].mxu0
        %v3274 = vpop.f32.mrb[0].mxu0
        %v3275 = vadd.f32 0.0, %v3274
        %v3276 = vpop.f32.mrb[0].mxu0
        %3277 = vdwg.mxu0
        %3278 = vmax.xlane.f32.xlu0 %v3248
        %v3279 = vpop.xlane.xlu0 %3278
        %3280 = vmax.xlane.f32.xlu0 %v3251
        %v3281 = vpop.xlane.xlu0 %3280
        %3282 = vmax.xlane.f32.xlu0 %v3256
        %v3283 = vpop.xlane.xlu0 %3282
        %3284 = vmax.xlane.f32.xlu0 %v3259
        %v3285 = vpop.xlane.xlu0 %3284
        %3286 = vmax.xlane.f32.xlu0 %v3264
        %v3287 = vpop.xlane.xlu0 %3286
        %3288 = vmax.xlane.f32.xlu0 %v3267
        %v3289 = vpop.xlane.xlu0 %3288
        %3290 = vmax.xlane.f32.xlu0 %v3272
        %v3291 = vpop.xlane.xlu0 %3290
        %3292 = vmax.xlane.f32.xlu0 %v3275
        %v3293 = vpop.xlane.xlu0 %3292
        %v3294 = vsub.f32 %v3248, %v3279
        %v3295 = vsub.f32 %v3251, %v3281
        %v3296 = vsub.f32 %v3256, %v3283
        %v3297 = vsub.f32 %v3259, %v3285
        %v3298 = vsub.f32 %v3264, %v3287
        %v3299 = vsub.f32 %v3267, %v3289
        %v3300 = vsub.f32 %v3272, %v3291
        %v3301 = vsub.f32 %v3275, %v3293
        %v3302 = vmul.f32 %v3294, 1.442695
        %v3303 = vpow.pop %v3302
        %v3304 = vmul.f32 %v3295, 1.442695
        %v3305 = vpow.pop %v3304
        %v3306 = vmul.f32 %v3296, 1.442695
        %v3307 = vpow.pop %v3306
        %v3308 = vmul.f32 %v3297, 1.442695
        %v3309 = vpow.pop %v3308
        %v3310 = vmul.f32 %v3298, 1.442695
        %v3311 = vpow.pop %v3310
        %v3312 = vmul.f32 %v3299, 1.442695
        %v3313 = vpow.pop %v3312
        %v3314 = vmul.f32 %v3300, 1.442695
        %v3315 = vpow.pop %v3314
        %v3316 = vmul.f32 %v3301, 1.442695
        %v3317 = vpow.pop %v3316
        %3318 = vadd.xlane.f32.xlu0 %v3303
        %v3319 = vpop.xlane.xlu0 %3318
        %3320 = vadd.xlane.f32.xlu0 %v3305
        %v3321 = vpop.xlane.xlu0 %3320
        %3322 = vadd.xlane.f32.xlu0 %v3307
        %v3323 = vpop.xlane.xlu0 %3322
        %3324 = vadd.xlane.f32.xlu0 %v3309
        %v3325 = vpop.xlane.xlu0 %3324
        %3326 = vadd.xlane.f32.xlu0 %v3311
        %v3327 = vpop.xlane.xlu0 %3326
        %3328 = vadd.xlane.f32.xlu0 %v3313
        %v3329 = vpop.xlane.xlu0 %3328
        %3330 = vadd.xlane.f32.xlu0 %v3315
        %v3331 = vpop.xlane.xlu0 %3330
        %3332 = vadd.xlane.f32.xlu0 %v3317
        %v3333 = vpop.xlane.xlu0 %3332
        %v3334 = vrcp.pop %v3319
        %v3335 = vrcp.pop %v3321
        %v3336 = vrcp.pop %v3323
        %v3337 = vrcp.pop %v3325
        %v3338 = vrcp.pop %v3327
        %v3339 = vrcp.pop %v3329
        %v3340 = vrcp.pop %v3331
        %v3341 = vrcp.pop %v3333
        %v3342 = vmul.f32 %v3303, %v3334
        %v3343 = vmul.f32 %v3305, %v3335
        %v3344 = vmul.f32 %v3307, %v3336
        %v3345 = vmul.f32 %v3309, %v3337
        %v3346 = vmul.f32 %v3311, %v3338
        %v3347 = vmul.f32 %v3313, %v3339
        %v3348 = vmul.f32 %v3315, %v3340
        %v3349 = vmul.f32 %v3317, %v3341
        %v3350 = vpack.c.bf16 %v3343, %v3342
        %v3351 = vpack.c.bf16 %v3345, %v3344
        %v3352 = vpack.c.bf16 %v3347, %v3346
        %v3353 = vpack.c.bf16 %v3349, %v3348
        %3354 = vrot.lane.b32.xlu0 %v1299, 32
        %v3355 = vpop.permute.xlu0 %3354
        %3356 = vrot.lane.b32.xlu0 %v1300, 32
        %v3357 = vpop.permute.xlu0 %3356
        %3358 = vrot.lane.b32.xlu0 %v1301, 32
        %v3359 = vpop.permute.xlu0 %3358
        %3360 = vrot.lane.b32.xlu0 %v1302, 32
        %v3361 = vpop.permute.xlu0 %3360
        %3362 = vrot.lane.b32.xlu0 %v1303, 32
        %v3363 = vpop.permute.xlu0 %3362
        %3364 = vrot.lane.b32.xlu0 %v1304, 32
        %v3365 = vpop.permute.xlu0 %3364
        %3366 = vrot.lane.b32.xlu0 %v1305, 32
        %v3367 = vpop.permute.xlu0 %3366
        %3368 = vrot.lane.b32.xlu0 %v1306, 32
        %v3369 = vpop.permute.xlu0 %3368
        %3378 = vmatprep.subr.bf16.mxu0 0
        %3379 = vmatpush1.bf16.msra.mxu0 %v3355
        %3380 = vmatprep.subr.bf16.mxu0 0
        %3381 = vmatpush1.bf16.msra.mxu0 %v3357
        %3382 = vmatprep.subr.bf16.mxu0 0
        %3383 = vmatpush1.bf16.msra.mxu0 %v3359
        %3384 = vmatprep.subr.bf16.mxu0 0
        %3385 = vmatpush1.bf16.msra.mxu0 %v3361
        %3386 = vmatprep.subr.bf16.mxu0 0
        %3387 = vmatpush1.bf16.msra.mxu0 %v3363
        %3388 = vmatprep.subr.bf16.mxu0 0
        %3389 = vmatpush1.bf16.msra.mxu0 %v3365
        %3390 = vmatprep.subr.bf16.mxu0 0
        %3391 = vmatpush1.bf16.msra.mxu0 %v3367
        %3392 = vmatprep.subr.bf16.mxu0 0
        %3393 = vmatpush1.bf16.msra.mxu0 %v3369
        %3394 = vmatprep.subr.bf16.mxu0 0
        %3395 = vmatpush1.bf16.msra.mxu0 0
        %3396 = vmatprep.subr.bf16.mxu0 0
        %3397 = vmatpush1.bf16.msra.mxu0 0
        %3398 = vmatprep.subr.bf16.mxu0 0
        %3399 = vmatpush1.bf16.msra.mxu0 0
        %3400 = vmatprep.subr.bf16.mxu0 0
        %3401 = vmatpush1.bf16.msra.mxu0 0
        %3402 = vmatprep.subr.bf16.mxu0 0
        %3403 = vmatpush1.bf16.msra.mxu0 0
        %3404 = vmatprep.subr.bf16.mxu0 0
        %3405 = vmatpush1.bf16.msra.mxu0 0
        %3406 = vmatprep.subr.bf16.mxu0 0
        %3407 = vmatpush1.bf16.msra.mxu0 0
        %3408 = vmatprep.subr.bf16.mxu0 0
        %3409 = vmatpush1.bf16.msra.mxu0 0
        %3410 = vmatprep.mubr.bf16.mxu0 0
        %3411 = vmatmul.mubr.bf16.gmra.mrb[0].mxu0 %v3350
        %v3412 = vpop.f32.mrb[0].mxu0
        %v3413 = vadd.f32 0.0, %v3412
        %v3414 = vpop.f32.mrb[0].mxu0
        %v3415 = vpop.f32.mrb[0].mxu0
        %v3416 = vadd.f32 0.0, %v3415
        %v3417 = vpop.f32.mrb[0].mxu0
        %3418 = vmatprep.mubr.bf16.mxu0 0
        %3419 = vmatmul.mubr.bf16.gmra.mrb[0].mxu0 %v3351
        %v3420 = vpop.f32.mrb[0].mxu0
        %v3421 = vadd.f32 0.0, %v3420
        %v3422 = vpop.f32.mrb[0].mxu0
        %v3423 = vpop.f32.mrb[0].mxu0
        %v3424 = vadd.f32 0.0, %v3423
        %v3425 = vpop.f32.mrb[0].mxu0
        %3426 = vmatprep.mubr.bf16.mxu0 0
        %3427 = vmatmul.mubr.bf16.gmra.mrb[0].mxu0 %v3352
        %v3428 = vpop.f32.mrb[0].mxu0
        %v3429 = vadd.f32 0.0, %v3428
        %v3430 = vpop.f32.mrb[0].mxu0
        %v3431 = vpop.f32.mrb[0].mxu0
        %v3432 = vadd.f32 0.0, %v3431
        %v3433 = vpop.f32.mrb[0].mxu0
        %3434 = vmatprep.mubr.bf16.mxu0 0
        %3435 = vmatmul.mubr.bf16.gmra.mrb[0].mxu0 %v3353
        %v3436 = vpop.f32.mrb[0].mxu0
        %v3437 = vadd.f32 0.0, %v3436
        %v3438 = vpop.f32.mrb[0].mxu0
        %v3439 = vpop.f32.mrb[0].mxu0
        %v3440 = vadd.f32 0.0, %v3439
        %v3441 = vpop.f32.mrb[0].mxu0
        %3442 = vdwg.mxu0
        %v3443 = vpack.c.bf16 %v3416, %v3413
        %v3444 = vpack.c.bf16 %v3424, %v3421
        %v3445 = vpack.c.bf16 %v3432, %v3429
        %v3446 = vpack.c.bf16 %v3440, %v3437
        %3451 = vrot.lane.b32.xlu0 %v3443, 96
        %v3452 = vpop.permute.xlu0 %3451
        %3453 = vrot.lane.b32.xlu0 %v3444, 96
        %v3454 = vpop.permute.xlu0 %3453
        %3455 = vrot.lane.b32.xlu0 %v3445, 96
        %v3456 = vpop.permute.xlu0 %3455
        %3457 = vrot.lane.b32.xlu0 %v3446, 96
        %v3458 = vpop.permute.xlu0 %3457
        %vm3463 = vcmask 917248
        %3464 = vst.msk [vmem:[#allocation4] sm:$0xff] %vm3463, %v3452
        %3465 = vst.msk [vmem:[#allocation4 + $0x8] sm:$0xff] %vm3463, %v3454
        %3466 = vst.msk [vmem:[#allocation4 + $0x10] sm:$0xff] %vm3463, %v3456
        %3467 = vst.msk [vmem:[#allocation4 + $0x18] sm:$0xff] %vm3463, %v3458
        %3468 = vrot.lane.b32.xlu0 %v1287, 16
        %v3469 = vpop.permute.xlu0 %3468
        %3470 = vrot.lane.b32.xlu0 %v1288, 16
        %v3471 = vpop.permute.xlu0 %3470
        %3472 = vrot.lane.b32.xlu0 %v1289, 16
        %v3473 = vpop.permute.xlu0 %3472
        %3474 = vrot.lane.b32.xlu0 %v1290, 16
        %v3475 = vpop.permute.xlu0 %3474
        %3476 = vrot.lane.b32.xlu0 %v1291, 16
        %v3477 = vpop.permute.xlu0 %3476
        %3478 = vrot.lane.b32.xlu0 %v1292, 16
        %v3479 = vpop.permute.xlu0 %3478
        %3480 = vrot.lane.b32.xlu0 %v1293, 16
        %v3481 = vpop.permute.xlu0 %3480
        %3482 = vrot.lane.b32.xlu0 %v1294, 16
        %v3483 = vpop.permute.xlu0 %3482
        %3484 = vrot.lane.b32.xlu0 %v1295, 16
        %v3485 = vpop.permute.xlu0 %3484
        %3486 = vrot.lane.b32.xlu0 %v1296, 16
        %v3487 = vpop.permute.xlu0 %3486
        %3488 = vrot.lane.b32.xlu0 %v1297, 16
        %v3489 = vpop.permute.xlu0 %3488
        %3490 = vrot.lane.b32.xlu0 %v1298, 16
        %v3491 = vpop.permute.xlu0 %3490
        %v3493 = vsel %vm1307, %v3469, 0
        %v3496 = vsel %vm1307, %v3471, 0
        %v3499 = vsel %vm1307, %v3473, 0
        %v3502 = vsel %vm1307, %v3475, 0
        %v3505 = vsel %vm1307, %v3477, 0
        %v3508 = vsel %vm1307, %v3479, 0
        %v3511 = vsel %vm1307, %v3481, 0
        %v3514 = vsel %vm1307, %v3483, 0
        %v3517 = vsel %vm1307, %v3485, 0
        %v3520 = vsel %vm1307, %v3487, 0
        %v3523 = vsel %vm1307, %v3489, 0
        %v3526 = vsel %vm1307, %v3491, 0
        %3528 = vmatprep.subr.bf16.mxu0 0
        %3529 = vmatpush1.bf16.xpose.msra.mxu0 %v3505
        %3530 = vmatprep.subr.bf16.mxu0 0
        %3531 = vmatpush1.bf16.xpose.msra.mxu0 %v3508
        %3532 = vmatprep.subr.bf16.mxu0 0
        %3533 = vmatpush1.bf16.xpose.msra.mxu0 %v3511
        %3534 = vmatprep.subr.bf16.mxu0 0
        %3535 = vmatpush1.bf16.xpose.msra.mxu0 %v3514
        %3536 = vmatprep.subr.bf16.mxu0 0
        %3537 = vmatpush1.bf16.xpose.msra.mxu0 %v3517
        %3538 = vmatprep.subr.bf16.mxu0 0
        %3539 = vmatpush1.bf16.xpose.msra.mxu0 %v3520
        %3540 = vmatprep.subr.bf16.mxu0 0
        %3541 = vmatpush1.bf16.xpose.msra.mxu0 %v3523
        %3542 = vmatprep.subr.bf16.mxu0 0
        %3543 = vmatpush1.bf16.xpose.msra.mxu0 %v3526
        %3544 = vmatprep.subr.bf16.mxu0 0
        %3545 = vmatpush1.bf16.xpose.msra.mxu0 0
        %3546 = vmatprep.subr.bf16.mxu0 0
        %3547 = vmatpush1.bf16.xpose.msra.mxu0 0
        %3548 = vmatprep.subr.bf16.mxu0 0
        %3549 = vmatpush1.bf16.xpose.msra.mxu0 0
        %3550 = vmatprep.subr.bf16.mxu0 0
        %3551 = vmatpush1.bf16.xpose.msra.mxu0 0
        %3552 = vmatprep.subr.bf16.mxu0 0
        %3553 = vmatpush1.bf16.xpose.msra.mxu0 0
        %3554 = vmatprep.subr.bf16.mxu0 0
        %3555 = vmatpush1.bf16.xpose.msra.mxu0 0
        %3556 = vmatprep.subr.bf16.mxu0 0
        %3557 = vmatpush1.bf16.xpose.msra.mxu0 0
        %3558 = vmatprep.subr.bf16.mxu0 0
        %3559 = vmatpush1.bf16.xpose.msra.mxu0 0
        %3560 = vmatprep.mubr.bf16.mxu0 0
        %3561 = vmatmul.mubr.bf16.gmra.mrb[0].mxu0 %v3493
        %v3562 = vpop.f32.mrb[0].mxu0
        %v3563 = vadd.f32 0.0, %v3562
        %v3564 = vpop.f32.mrb[0].mxu0
        %v3565 = vpop.f32.mrb[0].mxu0
        %v3566 = vadd.f32 0.0, %v3565
        %v3567 = vpop.f32.mrb[0].mxu0
        %3568 = vmatprep.mubr.bf16.mxu0 0
        %3569 = vmatmul.mubr.bf16.gmra.mrb[0].mxu0 %v3496
        %v3570 = vpop.f32.mrb[0].mxu0
        %v3571 = vadd.f32 0.0, %v3570
        %v3572 = vpop.f32.mrb[0].mxu0
        %v3573 = vpop.f32.mrb[0].mxu0
        %v3574 = vadd.f32 0.0, %v3573
        %v3575 = vpop.f32.mrb[0].mxu0
        %3576 = vmatprep.mubr.bf16.mxu0 0
        %3577 = vmatmul.mubr.bf16.gmra.mrb[0].mxu0 %v3499
        %v3578 = vpop.f32.mrb[0].mxu0
        %v3579 = vadd.f32 0.0, %v3578
        %v3580 = vpop.f32.mrb[0].mxu0
        %v3581 = vpop.f32.mrb[0].mxu0
        %v3582 = vadd.f32 0.0, %v3581
        %v3583 = vpop.f32.mrb[0].mxu0
        %3584 = vmatprep.mubr.bf16.mxu0 0
        %3585 = vmatmul.mubr.bf16.gmra.mrb[0].mxu0 %v3502
        %v3586 = vpop.f32.mrb[0].mxu0
        %v3587 = vadd.f32 0.0, %v3586
        %v3588 = vpop.f32.mrb[0].mxu0
        %v3589 = vpop.f32.mrb[0].mxu0
        %v3590 = vadd.f32 0.0, %v3589
        %v3591 = vpop.f32.mrb[0].mxu0
        %3592 = vdwg.mxu0
        %3593 = vmax.xlane.f32.xlu0 %v3563
        %v3594 = vpop.xlane.xlu0 %3593
        %3595 = vmax.xlane.f32.xlu0 %v3566
        %v3596 = vpop.xlane.xlu0 %3595
        %3597 = vmax.xlane.f32.xlu0 %v3571
        %v3598 = vpop.xlane.xlu0 %3597
        %3599 = vmax.xlane.f32.xlu0 %v3574
        %v3600 = vpop.xlane.xlu0 %3599
        %3601 = vmax.xlane.f32.xlu0 %v3579
        %v3602 = vpop.xlane.xlu0 %3601
        %3603 = vmax.xlane.f32.xlu0 %v3582
        %v3604 = vpop.xlane.xlu0 %3603
        %3605 = vmax.xlane.f32.xlu0 %v3587
        %v3606 = vpop.xlane.xlu0 %3605
        %3607 = vmax.xlane.f32.xlu0 %v3590
        %v3608 = vpop.xlane.xlu0 %3607
        %v3609 = vsub.f32 %v3563, %v3594
        %v3610 = vsub.f32 %v3566, %v3596
        %v3611 = vsub.f32 %v3571, %v3598
        %v3612 = vsub.f32 %v3574, %v3600
        %v3613 = vsub.f32 %v3579, %v3602
        %v3614 = vsub.f32 %v3582, %v3604
        %v3615 = vsub.f32 %v3587, %v3606
        %v3616 = vsub.f32 %v3590, %v3608
        %v3617 = vmul.f32 %v3609, 1.442695
        %v3618 = vpow.pop %v3617
        %v3619 = vmul.f32 %v3610, 1.442695
        %v3620 = vpow.pop %v3619
        %v3621 = vmul.f32 %v3611, 1.442695
        %v3622 = vpow.pop %v3621
        %v3623 = vmul.f32 %v3612, 1.442695
        %v3624 = vpow.pop %v3623
        %v3625 = vmul.f32 %v3613, 1.442695
        %v3626 = vpow.pop %v3625
        %v3627 = vmul.f32 %v3614, 1.442695
        %v3628 = vpow.pop %v3627
        %v3629 = vmul.f32 %v3615, 1.442695
        %v3630 = vpow.pop %v3629
        %v3631 = vmul.f32 %v3616, 1.442695
        %v3632 = vpow.pop %v3631
        %3633 = vadd.xlane.f32.xlu0 %v3618
        %v3634 = vpop.xlane.xlu0 %3633
        %3635 = vadd.xlane.f32.xlu0 %v3620
        %v3636 = vpop.xlane.xlu0 %3635
        %3637 = vadd.xlane.f32.xlu0 %v3622
        %v3638 = vpop.xlane.xlu0 %3637
        %3639 = vadd.xlane.f32.xlu0 %v3624
        %v3640 = vpop.xlane.xlu0 %3639
        %3641 = vadd.xlane.f32.xlu0 %v3626
        %v3642 = vpop.xlane.xlu0 %3641
        %3643 = vadd.xlane.f32.xlu0 %v3628
        %v3644 = vpop.xlane.xlu0 %3643
        %3645 = vadd.xlane.f32.xlu0 %v3630
        %v3646 = vpop.xlane.xlu0 %3645
        %3647 = vadd.xlane.f32.xlu0 %v3632
        %v3648 = vpop.xlane.xlu0 %3647
        %v3649 = vrcp.pop %v3634
        %v3650 = vrcp.pop %v3636
        %v3651 = vrcp.pop %v3638
        %v3652 = vrcp.pop %v3640
        %v3653 = vrcp.pop %v3642
        %v3654 = vrcp.pop %v3644
        %v3655 = vrcp.pop %v3646
        %v3656 = vrcp.pop %v3648
        %v3657 = vmul.f32 %v3618, %v3649
        %v3658 = vmul.f32 %v3620, %v3650
        %v3659 = vmul.f32 %v3622, %v3651
        %v3660 = vmul.f32 %v3624, %v3652
        %v3661 = vmul.f32 %v3626, %v3653
        %v3662 = vmul.f32 %v3628, %v3654
        %v3663 = vmul.f32 %v3630, %v3655
        %v3664 = vmul.f32 %v3632, %v3656
        %v3665 = vpack.c.bf16 %v3658, %v3657
        %v3666 = vpack.c.bf16 %v3660, %v3659
        %v3667 = vpack.c.bf16 %v3662, %v3661
        %v3668 = vpack.c.bf16 %v3664, %v3663
        %3669 = vrot.lane.b32.xlu0 %v1299, 16
        %v3670 = vpop.permute.xlu0 %3669
        %3671 = vrot.lane.b32.xlu0 %v1300, 16
        %v3672 = vpop.permute.xlu0 %3671
        %3673 = vrot.lane.b32.xlu0 %v1301, 16
        %v3674 = vpop.permute.xlu0 %3673
        %3675 = vrot.lane.b32.xlu0 %v1302, 16
        %v3676 = vpop.permute.xlu0 %3675
        %3677 = vrot.lane.b32.xlu0 %v1303, 16
        %v3678 = vpop.permute.xlu0 %3677
        %3679 = vrot.lane.b32.xlu0 %v1304, 16
        %v3680 = vpop.permute.xlu0 %3679
        %3681 = vrot.lane.b32.xlu0 %v1305, 16
        %v3682 = vpop.permute.xlu0 %3681
        %3683 = vrot.lane.b32.xlu0 %v1306, 16
        %v3684 = vpop.permute.xlu0 %3683
        %3693 = vmatprep.subr.bf16.mxu0 0
        %3694 = vmatpush1.bf16.msra.mxu0 %v3670
        %3695 = vmatprep.subr.bf16.mxu0 0
        %3696 = vmatpush1.bf16.msra.mxu0 %v3672
        %3697 = vmatprep.subr.bf16.mxu0 0
        %3698 = vmatpush1.bf16.msra.mxu0 %v3674
        %3699 = vmatprep.subr.bf16.mxu0 0
        %3700 = vmatpush1.bf16.msra.mxu0 %v3676
        %3701 = vmatprep.subr.bf16.mxu0 0
        %3702 = vmatpush1.bf16.msra.mxu0 %v3678
        %3703 = vmatprep.subr.bf16.mxu0 0
        %3704 = vmatpush1.bf16.msra.mxu0 %v3680
        %3705 = vmatprep.subr.bf16.mxu0 0
        %3706 = vmatpush1.bf16.msra.mxu0 %v3682
        %3707 = vmatprep.subr.bf16.mxu0 0
        %3708 = vmatpush1.bf16.msra.mxu0 %v3684
        %3709 = vmatprep.subr.bf16.mxu0 0
        %3710 = vmatpush1.bf16.msra.mxu0 0
        %3711 = vmatprep.subr.bf16.mxu0 0
        %3712 = vmatpush1.bf16.msra.mxu0 0
        %3713 = vmatprep.subr.bf16.mxu0 0
        %3714 = vmatpush1.bf16.msra.mxu0 0
        %3715 = vmatprep.subr.bf16.mxu0 0
        %3716 = vmatpush1.bf16.msra.mxu0 0
        %3717 = vmatprep.subr.bf16.mxu0 0
        %3718 = vmatpush1.bf16.msra.mxu0 0
        %3719 = vmatprep.subr.bf16.mxu0 0
        %3720 = vmatpush1.bf16.msra.mxu0 0
        %3721 = vmatprep.subr.bf16.mxu0 0
        %3722 = vmatpush1.bf16.msra.mxu0 0
        %3723 = vmatprep.subr.bf16.mxu0 0
        %3724 = vmatpush1.bf16.msra.mxu0 0
        %3725 = vmatprep.mubr.bf16.mxu0 0
        %3726 = vmatmul.mubr.bf16.gmra.mrb[0].mxu0 %v3665
        %v3727 = vpop.f32.mrb[0].mxu0
        %v3728 = vadd.f32 0.0, %v3727
        %v3729 = vpop.f32.mrb[0].mxu0
        %v3730 = vpop.f32.mrb[0].mxu0
        %v3731 = vadd.f32 0.0, %v3730
        %v3732 = vpop.f32.mrb[0].mxu0
        %3733 = vmatprep.mubr.bf16.mxu0 0
        %3734 = vmatmul.mubr.bf16.gmra.mrb[0].mxu0 %v3666
        %v3735 = vpop.f32.mrb[0].mxu0
        %v3736 = vadd.f32 0.0, %v3735
        %v3737 = vpop.f32.mrb[0].mxu0
        %v3738 = vpop.f32.mrb[0].mxu0
        %v3739 = vadd.f32 0.0, %v3738
        %v3740 = vpop.f32.mrb[0].mxu0
        %3741 = vmatprep.mubr.bf16.mxu0 0
        %3742 = vmatmul.mubr.bf16.gmra.mrb[0].mxu0 %v3667
        %v3743 = vpop.f32.mrb[0].mxu0
        %v3744 = vadd.f32 0.0, %v3743
        %v3745 = vpop.f32.mrb[0].mxu0
        %v3746 = vpop.f32.mrb[0].mxu0
        %v3747 = vadd.f32 0.0, %v3746
        %v3748 = vpop.f32.mrb[0].mxu0
        %3749 = vmatprep.mubr.bf16.mxu0 0
        %3750 = vmatmul.mubr.bf16.gmra.mrb[0].mxu0 %v3668
        %v3751 = vpop.f32.mrb[0].mxu0
        %v3752 = vadd.f32 0.0, %v3751
        %v3753 = vpop.f32.mrb[0].mxu0
        %v3754 = vpop.f32.mrb[0].mxu0
        %v3755 = vadd.f32 0.0, %v3754
        %v3756 = vpop.f32.mrb[0].mxu0
        %3757 = vdwg.mxu0
        %v3758 = vpack.c.bf16 %v3731, %v3728
        %v3759 = vpack.c.bf16 %v3739, %v3736
        %v3760 = vpack.c.bf16 %v3747, %v3744
        %v3761 = vpack.c.bf16 %v3755, %v3752
        %3766 = vrot.lane.b32.xlu0 %v3758, 112
        %v3767 = vpop.permute.xlu0 %3766
        %3768 = vrot.lane.b32.xlu0 %v3759, 112
        %v3769 = vpop.permute.xlu0 %3768
        %3770 = vrot.lane.b32.xlu0 %v3760, 112
        %v3771 = vpop.permute.xlu0 %3770
        %3772 = vrot.lane.b32.xlu0 %v3761, 112
        %v3773 = vpop.permute.xlu0 %3772
        %vm3778 = vcmask 1048448
        %3779 = vst.msk [vmem:[#allocation4] sm:$0xff] %vm3778, %v3767
        %3780 = vst.msk [vmem:[#allocation4 + $0x8] sm:$0xff] %vm3778, %v3769
        %3781 = vst.msk [vmem:[#allocation4 + $0x10] sm:$0xff] %vm3778, %v3771
        %3782 = vst.msk [vmem:[#allocation4 + $0x18] sm:$0xff] %vm3778, %v3773
        %v3783 = vld [vmem:[#allocation4] sm:$0xff]
        %v3784 = vld [vmem:[#allocation4 + $0x8] sm:$0xff]
        %v3785 = vld [vmem:[#allocation4 + $0x10] sm:$0xff]
        %v3786 = vld [vmem:[#allocation4 + $0x18] sm:$0xff]
        %v3787 = vld [vmem:[#allocation16] sm:$0xf]
        %v3788 = vld [vmem:[#allocation16 + $0x4] sm:$0xf]
        %v3789 = vld [vmem:[#allocation16 + $0x8] sm:$0xf]
        %v3790 = vld [vmem:[#allocation16 + $0xc] sm:$0xf]
        %v3791 = vld [vmem:[#allocation16 + $0x10] sm:$0xf]
        %v3792 = vld [vmem:[#allocation16 + $0x14] sm:$0xf]
        %v3793 = vld [vmem:[#allocation16 + $0x18] sm:$0xf]
        %v3794 = vld [vmem:[#allocation16 + $0x1c] sm:$0xf]
        %v3795 = vld [vmem:[#allocation16 + $0x20] sm:$0xf]
        %v3796 = vld [vmem:[#allocation16 + $0x24] sm:$0xf]
        %v3797 = vld [vmem:[#allocation16 + $0x28] sm:$0xf]
        %v3798 = vld [vmem:[#allocation16 + $0x2c] sm:$0xf]
        %v3799 = vld [vmem:[#allocation16 + $0x30] sm:$0xf]
        %v3800 = vld [vmem:[#allocation16 + $0x34] sm:$0xf]
        %v3801 = vld [vmem:[#allocation16 + $0x38] sm:$0xf]
        %v3802 = vld [vmem:[#allocation16 + $0x3c] sm:$0xf]
        %v3803 = vld [vmem:[#allocation22] sm:$0x1]
        %v3805 = vlaneseq
        %v3806 = vshrl.u32 %v3805, 7
        %v3807 = vsub.s32 0, %v3806
        %v3808 = vrot.slane %v3803, %v3807
        %v3826 = vunpack.c.l.b16 %v3787
        %v3827 = vunpack.c.l.b16 %v3788
        %v3828 = vunpack.c.l.b16 %v3789
        %v3829 = vunpack.c.l.b16 %v3790
        %v3830 = vunpack.c.l.b16 %v3791
        %v3831 = vunpack.c.l.b16 %v3792
        %v3832 = vunpack.c.l.b16 %v3793
        %v3833 = vunpack.c.l.b16 %v3794
        %v3834 = vunpack.c.l.b16 %v3795
        %v3835 = vunpack.c.l.b16 %v3796
        %v3836 = vunpack.c.l.b16 %v3797
        %v3837 = vunpack.c.l.b16 %v3798
        %v3838 = vunpack.c.l.b16 %v3799
        %v3839 = vunpack.c.l.b16 %v3800
        %v3840 = vunpack.c.l.b16 %v3801
        %v3841 = vunpack.c.l.b16 %v3802
        %v3842 = vpack.c.b16 %v3827, %v3826
        %v3843 = vpack.c.b16 %v3829, %v3828
        %v3844 = vpack.c.b16 %v3831, %v3830
        %v3845 = vpack.c.b16 %v3833, %v3832
        %v3846 = vpack.c.b16 %v3835, %v3834
        %v3847 = vpack.c.b16 %v3837, %v3836
        %v3848 = vpack.c.b16 %v3839, %v3838
        %v3849 = vpack.c.b16 %v3841, %v3840
        %3858 = vmatprep.subr.bf16.mxu0 0
        %3859 = vmatpush1.bf16.msra.mxu0 %v3842
        %3860 = vmatprep.subr.bf16.mxu0 0
        %3861 = vmatpush1.bf16.msra.mxu0 %v3843
        %3862 = vmatprep.subr.bf16.mxu0 0
        %3863 = vmatpush1.bf16.msra.mxu0 %v3844
        %3864 = vmatprep.subr.bf16.mxu0 0
        %3865 = vmatpush1.bf16.msra.mxu0 %v3845
        %3866 = vmatprep.subr.bf16.mxu0 0
        %3867 = vmatpush1.bf16.msra.mxu0 %v3846
        %3868 = vmatprep.subr.bf16.mxu0 0
        %3869 = vmatpush1.bf16.msra.mxu0 %v3847
        %3870 = vmatprep.subr.bf16.mxu0 0
        %3871 = vmatpush1.bf16.msra.mxu0 %v3848
        %3872 = vmatprep.subr.bf16.mxu0 0
        %3873 = vmatpush1.bf16.msra.mxu0 %v3849
        %3874 = vmatprep.subr.bf16.mxu0 0
        %3875 = vmatpush1.bf16.msra.mxu0 0
        %3876 = vmatprep.subr.bf16.mxu0 0
        %3877 = vmatpush1.bf16.msra.mxu0 0
        %3878 = vmatprep.subr.bf16.mxu0 0
        %3879 = vmatpush1.bf16.msra.mxu0 0
        %3880 = vmatprep.subr.bf16.mxu0 0
        %3881 = vmatpush1.bf16.msra.mxu0 0
        %3882 = vmatprep.subr.bf16.mxu0 0
        %3883 = vmatpush1.bf16.msra.mxu0 0
        %3884 = vmatprep.subr.bf16.mxu0 0
        %3885 = vmatpush1.bf16.msra.mxu0 0
        %3886 = vmatprep.subr.bf16.mxu0 0
        %3887 = vmatpush1.bf16.msra.mxu0 0
        %3888 = vmatprep.subr.bf16.mxu0 0
        %3889 = vmatpush1.bf16.msra.mxu0 0
        %3890 = vmatprep.mubr.bf16.mxu0 0
        %3891 = vmatmul.mubr.bf16.gmra.mrb[0].mxu0 %v3783
        %v3892 = vpop.f32.mrb[0].mxu0
        %v3893 = vadd.f32 %v3808, %v3892
        %v3894 = vpop.f32.mrb[0].mxu0
        %v3895 = vpop.f32.mrb[0].mxu0
        %v3896 = vadd.f32 %v3808, %v3895
        %v3897 = vpop.f32.mrb[0].mxu0
        %3898 = vmatprep.mubr.bf16.mxu0 0
        %3899 = vmatmul.mubr.bf16.gmra.mrb[0].mxu0 %v3784
        %v3900 = vpop.f32.mrb[0].mxu0
        %v3901 = vadd.f32 %v3808, %v3900
        %v3902 = vpop.f32.mrb[0].mxu0
        %v3903 = vpop.f32.mrb[0].mxu0
        %v3904 = vadd.f32 %v3808, %v3903
        %v3905 = vpop.f32.mrb[0].mxu0
        %3906 = vmatprep.mubr.bf16.mxu0 0
        %3907 = vmatmul.mubr.bf16.gmra.mrb[0].mxu0 %v3785
        %v3908 = vpop.f32.mrb[0].mxu0
        %v3909 = vadd.f32 %v3808, %v3908
        %v3910 = vpop.f32.mrb[0].mxu0
        %v3911 = vpop.f32.mrb[0].mxu0
        %v3912 = vadd.f32 %v3808, %v3911
        %v3913 = vpop.f32.mrb[0].mxu0
        %3914 = vmatprep.mubr.bf16.mxu0 0
        %3915 = vmatmul.mubr.bf16.gmra.mrb[0].mxu0 %v3786
        %v3916 = vpop.f32.mrb[0].mxu0
        %v3917 = vadd.f32 %v3808, %v3916
        %v3918 = vpop.f32.mrb[0].mxu0
        %v3919 = vpop.f32.mrb[0].mxu0
        %v3920 = vadd.f32 %v3808, %v3919
        %v3921 = vpop.f32.mrb[0].mxu0
        %3922 = vdwg.mxu0
        %3923 = vst [vmem:[%s607] sm:$0xff] %v3893
        %3924 = vst [vmem:[%s607 + $0x8] sm:$0xff] %v3896
        %3925 = vst [vmem:[%s607 + $0x10] sm:$0xff] %v3901
        %3926 = vst [vmem:[%s607 + $0x18] sm:$0xff] %v3904
        %3927 = vst [vmem:[%s607 + $0x20] sm:$0xff] %v3909
        %3928 = vst [vmem:[%s607 + $0x28] sm:$0xff] %v3912
        %3929 = vst [vmem:[%s607 + $0x30] sm:$0xff] %v3917
        %3930 = vst [vmem:[%s607 + $0x38] sm:$0xff] %v3920
        %s3931 = sand.u32 %s305, 1
        %s3932 = scalar_lea.sflag [#allocation7], %s3931
        %s3933 = sand.u32 %s305, 1
        %s3934 = smul.addr %s3933, 64
        %s3935 = scalar_lea.vmem [#allocation23], %s3934
        // Predicated region
        $region113: #{tpu_custom_call.1} parent=63 // pred_check
          %p3936 = pneg %p315
        $region114: #{tpu_custom_call.1} parent=63 // pred_check_branch
          %3938 = sbr.rel (%p3936) target = $region116
        $region115: #{tpu_custom_call.1} parent=63 // pred_region
          %s3939 = smul.u32 8, %s40
          %s3941 = ssub.s32 1024, 1024
          %3942 = vsyncadd %s3932, %s3941
          %s3943 = smul.addr %s39, 16
          %s3944 = sadd.s32 %s3939, %s3943
          %s3945 = smul.addr %s3944, 128
          %s3946 = scalar_lea.hbm %s11, %s3945
          %s3947 = sshll.u32 %s3935, 4
          %s3948 = int_to_ptr.vmem [resolvable:$true] %s3947
          %3953 = dma.vmem_to_hbm [thread:$0]  %s3948, 1024, %s3946, %s3932, 128, 128, 8
        $region116: #{tpu_custom_call.1} parent=63 // pred_fallthru
          _
      $region64: #{tpu_custom_call.1} parent=5 // pred_fallthru
        _
      %p3954 = scmp.le.s32.totalorder 2, %s30
      // Predicated region
      $region117: #{tpu_custom_call.1} parent=5 // pred_check
        %p3955 = pneg %p3954
      $region118: #{tpu_custom_call.1} parent=5 // pred_check_branch
        %3957 = sbr.rel (%p3955) target = $region120
      $region119: #{tpu_custom_call.1} parent=5 // pred_region
        %s3958 = ssub.s32 %s30, 2
        // Predicated region
        $region121: #{tpu_custom_call.1} parent=119 // pred_check
          %p3959 = pneg %p321
        $region122: #{tpu_custom_call.1} parent=119 // pred_check_branch
          %3961 = sbr.rel (%p3959) target = $region124
        $region123: #{tpu_custom_call.1} parent=119 // pred_region
          %s3962 = sand.u32 %s306, 1
          %s3963 = scalar_lea.sflag [#allocation7], %s3962
          %s3964 = sand.u32 %s306, 1
          %s3965 = smul.addr %s3964, 64
          %s3966 = scalar_lea.vmem [#allocation23], %s3965
          %3967 = dma.done %s3963, 1024
        $region124: #{tpu_custom_call.1} parent=119 // pred_fallthru
          _
      $region120: #{tpu_custom_call.1} parent=5 // pred_fallthru
        _
    $region6: #{tpu_custom_call.1} parent=1 // loop_footer
      %s34 = sadd.s32 1, %s30
    $region7: #{tpu_custom_call.1} parent=1 // loop_footer_branch
      %29 = sbr.rel target = $region3
    $region8: #{tpu_custom_call.1} parent=1 // loop_exit
      _
    %3968 = vsyncpa [#allocation6], 1
    %s3969 = scalar_lea.sflag [#allocation6], 1
    %3970 = vsyncpa %s3969, 1
    %3971 = vsyncpa [#allocation9], 1
    %s3972 = scalar_lea.sflag [#allocation9], 1
    %3973 = vsyncpa %s3972, 1
    %3974 = vsyncpa [#allocation12], 1
    %3975 = vsyncpa [#allocation15], 1
    %3976 = vsyncpa [#allocation18], 1
    %3977 = vsyncpa [#allocation21], 1
    %3978 = vsyncpa [#allocation7], 1
    %s3979 = scalar_lea.sflag [#allocation7], 1
    %3980 = vsyncpa %s3979, 1

</llo_original>
